<compile_context>
chip_gen: v7x
topology: tpu7x:2x2x1
jax: 0.10.0
libtpu: 0.0.40
codegen_flags: <defaults>
</compile_context>

<pallas_src>
import functools

import jax
import jax.numpy as jnp
from jax.experimental import pallas as pl
from jax.experimental.pallas import tpu as pltpu

LN_EPS = 1e-12  # Blip2QFormerConfig.layer_norm_eps


# ----------------------------- kernel helpers ---------------------------------

def _ln(x, g, b):
    """LayerNorm over the last axis (biased variance, eps inside sqrt), f32 math."""
    x = x.astype(jnp.float32)
    mu = jnp.mean(x, axis=-1, keepdims=True)
    var = jnp.mean((x - mu) ** 2, axis=-1, keepdims=True)
    return (x - mu) * jax.lax.rsqrt(var + LN_EPS) * g + b


def _attn_block(x2d, kv2d, batch, lq, lkv, num_heads,
                wq, bq, wk, bk, wv, bv, wo, bo, g, be, ctx_ref):
    """MHA + out-proj + residual + LN for all batch elements at once.

    x2d:  (B*Lq, H)  f32 current hidden states (query side)
    kv2d: (B*Lkv, Hk) f32 key/value source (hidden or encoder output)
    ctx_ref: VMEM scratch (B, Lq, H) f32 used to assemble the per-head context.
    """
    hidden = wq.shape[1]
    dh = hidden // num_heads
    scale = 1.0 / float(dh) ** 0.5

    xb = x2d.astype(jnp.bfloat16)
    kvb = kv2d.astype(jnp.bfloat16)
    # Batched-M projections (B*L rows feed the MXU together), bf16 in / f32 acc.
    q = jnp.dot(xb, wq, preferred_element_type=jnp.float32) + bq     # (B*Lq, H)
    k = jnp.dot(kvb, wk, preferred_element_type=jnp.float32) + bk    # (B*Lkv, H)
    v = jnp.dot(kvb, wv, preferred_element_type=jnp.float32) + bv    # (B*Lkv, H)

    q3 = q.reshape(batch, lq, hidden)
    k3 = k.reshape(batch, lkv, hidden)
    v3 = v.reshape(batch, lkv, hidden)

    for h in range(num_heads):                        # static unrolled head loop
        sl = slice(h * dh, (h + 1) * dh)
        qh = q3[:, :, sl].astype(jnp.bfloat16)        # (B, Lq, dh)
        kh = k3[:, :, sl].astype(jnp.bfloat16)        # (B, Lkv, dh)
        vh = v3[:, :, sl].astype(jnp.bfloat16)        # (B, Lkv, dh)
        s = jnp.einsum('bqd,bkd->bqk', qh, kh,
                       preferred_element_type=jnp.float32) * scale
        s = s - jnp.max(s, axis=-1, keepdims=True)    # stable softmax
        p = jnp.exp(s)
        p = p * pl.reciprocal(jnp.sum(p, axis=-1, keepdims=True), approx=True)
        # Write this head's context directly into its final slot (no concat).
        ctx_ref[:, :, sl] = jnp.einsum('bqk,bkd->bqd', p.astype(jnp.bfloat16), vh,
                                       preferred_element_type=jnp.float32)

    ctx2d = ctx_ref[...].reshape(batch * lq, hidden).astype(jnp.bfloat16)
    proj = jnp.dot(ctx2d, wo, preferred_element_type=jnp.float32) + bo
    return _ln(proj + x2d, g, be)


# ----------------------------- fused layer kernel ------------------------------

def fused_layer_kernel(num_heads, has_pre_ln, has_cross, *refs):
    """One full Q-Former layer (plus optional embeddings-LN) in a single kernel."""
    refs = list(refs)
    ctx_ref = refs.pop()        # VMEM scratch (B, Lq, H) f32
    o_ref = refs.pop()          # output      (B, Lq, H) f32

    it = iter(refs)
    h_ref = next(it)                                       # (B, Lq, H)
    enc_ref = next(it) if has_cross else None              # (B, Lkv, Hk)
    if has_pre_ln:
        g_emb = next(it)[...]
        b_emb = next(it)[...]
    sa = [next(it)[...] for _ in range(10)]                # self-attn params
    ca = [next(it)[...] for _ in range(10)] if has_cross else None
    w1, b1, w2, b2, g_f, b_f = (next(it)[...] for _ in range(6))

    B, Lq, H = h_ref.shape
    x2d = h_ref[...].reshape(B * Lq, H)                    # fold batch into M
    if has_pre_ln:
        x2d = _ln(x2d, g_emb, b_emb)                       # embeddings LN (dropout no-op)

    # Self-attention block.
    x2d = _attn_block(x2d, x2d, B, Lq, Lq, num_heads, *sa, ctx_ref)

    # Cross-attention block (K/V from encoder_hidden_states).
    if has_cross:
        _, Lkv, Hk = enc_ref.shape
        kv2d = enc_ref[...].reshape(B * Lkv, Hk)
        x2d = _attn_block(x2d, kv2d, B, Lq, Lkv, num_heads, *ca, ctx_ref)

    # FFN block (GELU MLP + residual + LN).
    hdn = jnp.dot(x2d.astype(jnp.bfloat16), w1, preferred_element_type=jnp.float32) + b1
    # TODO(synk): HF BLIP-2 uses exact erf-GELU; tanh-approximate GELU used for Mosaic-safe lowering.
    hdn = jax.nn.gelu(hdn, approximate=True)
    out = jnp.dot(hdn.astype(jnp.bfloat16), w2, preferred_element_type=jnp.float32) + b2
    x2d = _ln(out + x2d, g_f, b_f)

    o_ref[...] = x2d.reshape(B, Lq, H)


# ----------------------------- pallas_call wrapper -----------------------------

def _full_spec(arr):
    nd = arr.ndim
    return pl.BlockSpec(arr.shape, lambda i, nd=nd: (0,) * nd)


_ATTN_KEYS = ('wq', 'bq', 'wk', 'bk', 'wv', 'bv', 'wo', 'bo', 'g', 'b')


def run_fused_layer(hidden, encoder, layer, num_heads, pre_ln=None):
    """One fused pallas_call for a whole layer; grid collapsed to a single step.

    NOTE(v7x): on a 2-TensorCore chip one would keep a size>=2 'parallel' grid
    axis (e.g. split batch/heads) and raise vmem_limit_bytes for real BLIP-2
    sizes; weights here are already bf16 and grid-invariant.
    """
    B, Lq, H = hidden.shape
    has_pre_ln = pre_ln is not None
    has_cross = layer['cross_attn'] is not None

    inputs = [hidden]
    if has_cross:
        inputs.append(encoder)
    if has_pre_ln:
        inputs.extend(pre_ln)                                  # (gamma, beta)
    inputs.extend(layer['self_attn'][k] for k in _ATTN_KEYS)
    if has_cross:
        inputs.extend(layer['cross_attn'][k] for k in _ATTN_KEYS)
    inputs.extend(layer['ffn'][k] for k in ('w1', 'b1', 'w2', 'b2', 'g', 'b'))

    kernel = functools.partial(fused_layer_kernel, num_heads, has_pre_ln, has_cross)
    return pl.pallas_call(
        kernel,
        out_shape=jax.ShapeDtypeStruct((B, Lq, H), jnp.float32),
        grid=(1,),
        in_specs=[_full_spec(a) for a in inputs],
        out_specs=pl.BlockSpec((B, Lq, H), lambda i: (0, 0, 0)),
        scratch_shapes=[pltpu.VMEM((B, Lq, H), jnp.float32)],
        compiler_params=pltpu.CompilerParams(dimension_semantics=("arbitrary",)),
    )(*inputs)


# ----------------------------- parameters & forward ---------------------------

def init_params(key, cfg):
    H = cfg['hidden_size']
    Hk = cfg['encoder_hidden_size']
    I = cfg['intermediate_size']
    keys = iter(jax.random.split(key, 256))

    def dense(din, dout):
        # Weights stored in bf16 (native MXU input format); biases stay f32.
        w = (jax.random.normal(next(keys), (din, dout), jnp.float32) * 0.02).astype(jnp.bfloat16)
        b = jax.random.normal(next(keys), (1, dout), jnp.float32) * 0.02
        return w, b

    def ln_params():
        return jnp.ones((1, H), jnp.float32), jnp.zeros((1, H), jnp.float32)

    def attn_params(kv_dim):
        wq, bq = dense(H, H)
        wk, bk = dense(kv_dim, H)
        wv, bv = dense(kv_dim, H)
        wo, bo = dense(H, H)
        g, b = ln_params()
        return dict(wq=wq, bq=bq, wk=wk, bk=bk, wv=wv, bv=bv,
                    wo=wo, bo=bo, g=g, b=b)

    params = {'ln_emb': ln_params(), 'layers': []}
    for i in range(cfg['num_hidden_layers']):
        layer = {'self_attn': attn_params(H)}
        if i % cfg['cross_attention_frequency'] == 0:
            layer['cross_attn'] = attn_params(Hk)
        else:
            layer['cross_attn'] = None
        w1, b1 = dense(H, I)
        w2, b2 = dense(I, H)
        g, b = ln_params()
        layer['ffn'] = dict(w1=w1, b1=b1, w2=w2, b2=b2, g=g, b=b)
        params['layers'].append(layer)
    return params


def qformer_forward(encoder_output, query_tokens, params, cfg):
    """Equivalent of Qformer.forward(encoder_output, query_tokens) -> last_hidden_state."""
    nh = cfg['num_attention_heads']
    hidden = query_tokens.astype(jnp.float32)
    for i, layer in enumerate(params['layers']):
        # The embeddings LayerNorm is folded into the first fused layer call.
        pre_ln = params['ln_emb'] if i == 0 else None
        hidden = run_fused_layer(hidden, encoder_output, layer, nh, pre_ln=pre_ln)
    return hidden.astype(encoder_output.dtype)


# ----------------------------- main -------------------------------------------

if __name__ == "__main__":
    cfg = dict(
        hidden_size=32,
        num_attention_heads=4,
        num_hidden_layers=2,
        intermediate_size=64,
        encoder_hidden_size=48,
        cross_attention_frequency=2,   # layer 0 has cross-attention, layer 1 does not
    )

    key = jax.random.PRNGKey(0)
    kp, ke, kq = jax.random.split(key, 3)

    params = init_params(kp, cfg)

    B, Lq, Lenc = 2, 8, 16
    encoder_output = jax.random.normal(ke, (B, Lenc, cfg['encoder_hidden_size']), jnp.float32)
    query_tokens = jax.random.normal(kq, (B, Lq, cfg['hidden_size']), jnp.float32)

    out = qformer_forward(encoder_output, query_tokens, params, cfg)
    out = jax.block_until_ready(out)

    assert out.shape == (B, Lq, cfg['hidden_size'])
    assert out.dtype == encoder_output.dtype
    assert bool(jnp.all(jnp.isfinite(out)))
    print("KERNEL_OK")
</pallas_src>

<mosaic_0001>
module attributes {stable_mosaic.version = 11 : i64} {
  func.func @fused_layer_kernel(%arg0: i32, %arg1: memref<2x8x32xf32, #tpu.memory_space<vmem>>, %arg2: memref<2x16x48xf32, #tpu.memory_space<vmem>>, %arg3: memref<1x32xf32, #tpu.memory_space<vmem>>, %arg4: memref<1x32xf32, #tpu.memory_space<vmem>>, %arg5: memref<32x32xbf16, #tpu.memory_space<vmem>>, %arg6: memref<1x32xf32, #tpu.memory_space<vmem>>, %arg7: memref<32x32xbf16, #tpu.memory_space<vmem>>, %arg8: memref<1x32xf32, #tpu.memory_space<vmem>>, %arg9: memref<32x32xbf16, #tpu.memory_space<vmem>>, %arg10: memref<1x32xf32, #tpu.memory_space<vmem>>, %arg11: memref<32x32xbf16, #tpu.memory_space<vmem>>, %arg12: memref<1x32xf32, #tpu.memory_space<vmem>>, %arg13: memref<1x32xf32, #tpu.memory_space<vmem>>, %arg14: memref<1x32xf32, #tpu.memory_space<vmem>>, %arg15: memref<32x32xbf16, #tpu.memory_space<vmem>>, %arg16: memref<1x32xf32, #tpu.memory_space<vmem>>, %arg17: memref<48x32xbf16, #tpu.memory_space<vmem>>, %arg18: memref<1x32xf32, #tpu.memory_space<vmem>>, %arg19: memref<48x32xbf16, #tpu.memory_space<vmem>>, %arg20: memref<1x32xf32, #tpu.memory_space<vmem>>, %arg21: memref<32x32xbf16, #tpu.memory_space<vmem>>, %arg22: memref<1x32xf32, #tpu.memory_space<vmem>>, %arg23: memref<1x32xf32, #tpu.memory_space<vmem>>, %arg24: memref<1x32xf32, #tpu.memory_space<vmem>>, %arg25: memref<32x64xbf16, #tpu.memory_space<vmem>>, %arg26: memref<1x64xf32, #tpu.memory_space<vmem>>, %arg27: memref<64x32xbf16, #tpu.memory_space<vmem>>, %arg28: memref<1x32xf32, #tpu.memory_space<vmem>>, %arg29: memref<1x32xf32, #tpu.memory_space<vmem>>, %arg30: memref<1x32xf32, #tpu.memory_space<vmem>>, %arg31: memref<2x8x32xf32, #tpu.memory_space<vmem>>, %arg32: memref<2x8x32xf32, #tpu.memory_space<vmem>>) attributes {dimension_semantics = [#tpu.dimension_semantics<arbitrary>], iteration_bounds = array<i64: 1>, scalar_prefetch = 0 : i64, scratch_operands = 1 : i64, tpu.core_type = #tpu.core_type<tc>, window_params = [{pipeline_mode = #tpu.pipeline_mode<synchronous>, transform_indices = @transform_0, window_bounds = array<i64: 2, 8, 32>}, {pipeline_mode = #tpu.pipeline_mode<synchronous>, transform_indices = @transform_1, window_bounds = array<i64: 2, 16, 48>}, {pipeline_mode = #tpu.pipeline_mode<synchronous>, transform_indices = @transform_2, window_bounds = array<i64: 1, 32>}, {pipeline_mode = #tpu.pipeline_mode<synchronous>, transform_indices = @transform_3, window_bounds = array<i64: 1, 32>}, {pipeline_mode = #tpu.pipeline_mode<synchronous>, transform_indices = @transform_4, window_bounds = array<i64: 32, 32>}, {pipeline_mode = #tpu.pipeline_mode<synchronous>, transform_indices = @transform_5, window_bounds = array<i64: 1, 32>}, {pipeline_mode = #tpu.pipeline_mode<synchronous>, transform_indices = @transform_6, window_bounds = array<i64: 32, 32>}, {pipeline_mode = #tpu.pipeline_mode<synchronous>, transform_indices = @transform_7, window_bounds = array<i64: 1, 32>}, {pipeline_mode = #tpu.pipeline_mode<synchronous>, transform_indices = @transform_8, window_bounds = array<i64: 32, 32>}, {pipeline_mode = #tpu.pipeline_mode<synchronous>, transform_indices = @transform_9, window_bounds = array<i64: 1, 32>}, {pipeline_mode = #tpu.pipeline_mode<synchronous>, transform_indices = @transform_10, window_bounds = array<i64: 32, 32>}, {pipeline_mode = #tpu.pipeline_mode<synchronous>, transform_indices = @transform_11, window_bounds = array<i64: 1, 32>}, {pipeline_mode = #tpu.pipeline_mode<synchronous>, transform_indices = @transform_12, window_bounds = array<i64: 1, 32>}, {pipeline_mode = #tpu.pipeline_mode<synchronous>, transform_indices = @transform_13, window_bounds = array<i64: 1, 32>}, {pipeline_mode = #tpu.pipeline_mode<synchronous>, transform_indices = @transform_14, window_bounds = array<i64: 32, 32>}, {pipeline_mode = #tpu.pipeline_mode<synchronous>, transform_indices = @transform_15, window_bounds = array<i64: 1, 32>}, {pipeline_mode = #tpu.pipeline_mode<synchronous>, transform_indices = @transform_16, window_bounds = array<i64: 48, 32>}, {pipeline_mode = #tpu.pipeline_mode<synchronous>, transform_indices = @transform_17, window_bounds = array<i64: 1, 32>}, {pipeline_mode = #tpu.pipeline_mode<synchronous>, transform_indices = @transform_18, window_bounds = array<i64: 48, 32>}, {pipeline_mode = #tpu.pipeline_mode<synchronous>, transform_indices = @transform_19, window_bounds = array<i64: 1, 32>}, {pipeline_mode = #tpu.pipeline_mode<synchronous>, transform_indices = @transform_20, window_bounds = array<i64: 32, 32>}, {pipeline_mode = #tpu.pipeline_mode<synchronous>, transform_indices = @transform_21, window_bounds = array<i64: 1, 32>}, {pipeline_mode = #tpu.pipeline_mode<synchronous>, transform_indices = @transform_22, window_bounds = array<i64: 1, 32>}, {pipeline_mode = #tpu.pipeline_mode<synchronous>, transform_indices = @transform_23, window_bounds = array<i64: 1, 32>}, {pipeline_mode = #tpu.pipeline_mode<synchronous>, transform_indices = @transform_24, window_bounds = array<i64: 32, 64>}, {pipeline_mode = #tpu.pipeline_mode<synchronous>, transform_indices = @transform_25, window_bounds = array<i64: 1, 64>}, {pipeline_mode = #tpu.pipeline_mode<synchronous>, transform_indices = @transform_26, window_bounds = array<i64: 64, 32>}, {pipeline_mode = #tpu.pipeline_mode<synchronous>, transform_indices = @transform_27, window_bounds = array<i64: 1, 32>}, {pipeline_mode = #tpu.pipeline_mode<synchronous>, transform_indices = @transform_28, window_bounds = array<i64: 1, 32>}, {pipeline_mode = #tpu.pipeline_mode<synchronous>, transform_indices = @transform_29, window_bounds = array<i64: 1, 32>}, {pipeline_mode = #tpu.pipeline_mode<synchronous>, transform_indices = @transform_30, window_bounds = array<i64: 2, 8, 32>}]} {
    %c0 = arith.constant 0 : index
    %c0_0 = arith.constant 0 : index
    %0 = vector.load %arg3[%c0, %c0_0] : memref<1x32xf32, #tpu.memory_space<vmem>>, vector<1x32xf32>
    %c0_1 = arith.constant 0 : index
    %c0_2 = arith.constant 0 : index
    %1 = vector.load %arg4[%c0_1, %c0_2] : memref<1x32xf32, #tpu.memory_space<vmem>>, vector<1x32xf32>
    %c0_3 = arith.constant 0 : index
    %c0_4 = arith.constant 0 : index
    %2 = vector.load %arg5[%c0_3, %c0_4] : memref<32x32xbf16, #tpu.memory_space<vmem>>, vector<32x32xbf16>
    %c0_5 = arith.constant 0 : index
    %c0_6 = arith.constant 0 : index
    %3 = vector.load %arg6[%c0_5, %c0_6] : memref<1x32xf32, #tpu.memory_space<vmem>>, vector<1x32xf32>
    %c0_7 = arith.constant 0 : index
    %c0_8 = arith.constant 0 : index
    %4 = vector.load %arg7[%c0_7, %c0_8] : memref<32x32xbf16, #tpu.memory_space<vmem>>, vector<32x32xbf16>
    %c0_9 = arith.constant 0 : index
    %c0_10 = arith.constant 0 : index
    %5 = vector.load %arg8[%c0_9, %c0_10] : memref<1x32xf32, #tpu.memory_space<vmem>>, vector<1x32xf32>
    %c0_11 = arith.constant 0 : index
    %c0_12 = arith.constant 0 : index
    %6 = vector.load %arg9[%c0_11, %c0_12] : memref<32x32xbf16, #tpu.memory_space<vmem>>, vector<32x32xbf16>
    %c0_13 = arith.constant 0 : index
    %c0_14 = arith.constant 0 : index
    %7 = vector.load %arg10[%c0_13, %c0_14] : memref<1x32xf32, #tpu.memory_space<vmem>>, vector<1x32xf32>
    %c0_15 = arith.constant 0 : index
    %c0_16 = arith.constant 0 : index
    %8 = vector.load %arg11[%c0_15, %c0_16] : memref<32x32xbf16, #tpu.memory_space<vmem>>, vector<32x32xbf16>
    %c0_17 = arith.constant 0 : index
    %c0_18 = arith.constant 0 : index
    %9 = vector.load %arg12[%c0_17, %c0_18] : memref<1x32xf32, #tpu.memory_space<vmem>>, vector<1x32xf32>
    %c0_19 = arith.constant 0 : index
    %c0_20 = arith.constant 0 : index
    %10 = vector.load %arg13[%c0_19, %c0_20] : memref<1x32xf32, #tpu.memory_space<vmem>>, vector<1x32xf32>
    %c0_21 = arith.constant 0 : index
    %c0_22 = arith.constant 0 : index
    %11 = vector.load %arg14[%c0_21, %c0_22] : memref<1x32xf32, #tpu.memory_space<vmem>>, vector<1x32xf32>
    %c0_23 = arith.constant 0 : index
    %c0_24 = arith.constant 0 : index
    %12 = vector.load %arg15[%c0_23, %c0_24] : memref<32x32xbf16, #tpu.memory_space<vmem>>, vector<32x32xbf16>
    %c0_25 = arith.constant 0 : index
    %c0_26 = arith.constant 0 : index
    %13 = vector.load %arg16[%c0_25, %c0_26] : memref<1x32xf32, #tpu.memory_space<vmem>>, vector<1x32xf32>
    %c0_27 = arith.constant 0 : index
    %c0_28 = arith.constant 0 : index
    %14 = vector.load %arg17[%c0_27, %c0_28] : memref<48x32xbf16, #tpu.memory_space<vmem>>, vector<48x32xbf16>
    %c0_29 = arith.constant 0 : index
    %c0_30 = arith.constant 0 : index
    %15 = vector.load %arg18[%c0_29, %c0_30] : memref<1x32xf32, #tpu.memory_space<vmem>>, vector<1x32xf32>
    %c0_31 = arith.constant 0 : index
    %c0_32 = arith.constant 0 : index
    %16 = vector.load %arg19[%c0_31, %c0_32] : memref<48x32xbf16, #tpu.memory_space<vmem>>, vector<48x32xbf16>
    %c0_33 = arith.constant 0 : index
    %c0_34 = arith.constant 0 : index
    %17 = vector.load %arg20[%c0_33, %c0_34] : memref<1x32xf32, #tpu.memory_space<vmem>>, vector<1x32xf32>
    %c0_35 = arith.constant 0 : index
    %c0_36 = arith.constant 0 : index
    %18 = vector.load %arg21[%c0_35, %c0_36] : memref<32x32xbf16, #tpu.memory_space<vmem>>, vector<32x32xbf16>
    %c0_37 = arith.constant 0 : index
    %c0_38 = arith.constant 0 : index
    %19 = vector.load %arg22[%c0_37, %c0_38] : memref<1x32xf32, #tpu.memory_space<vmem>>, vector<1x32xf32>
    %c0_39 = arith.constant 0 : index
    %c0_40 = arith.constant 0 : index
    %20 = vector.load %arg23[%c0_39, %c0_40] : memref<1x32xf32, #tpu.memory_space<vmem>>, vector<1x32xf32>
    %c0_41 = arith.constant 0 : index
    %c0_42 = arith.constant 0 : index
    %21 = vector.load %arg24[%c0_41, %c0_42] : memref<1x32xf32, #tpu.memory_space<vmem>>, vector<1x32xf32>
    %c0_43 = arith.constant 0 : index
    %c0_44 = arith.constant 0 : index
    %22 = vector.load %arg25[%c0_43, %c0_44] : memref<32x64xbf16, #tpu.memory_space<vmem>>, vector<32x64xbf16>
    %c0_45 = arith.constant 0 : index
    %c0_46 = arith.constant 0 : index
    %23 = vector.load %arg26[%c0_45, %c0_46] : memref<1x64xf32, #tpu.memory_space<vmem>>, vector<1x64xf32>
    %c0_47 = arith.constant 0 : index
    %c0_48 = arith.constant 0 : index
    %24 = vector.load %arg27[%c0_47, %c0_48] : memref<64x32xbf16, #tpu.memory_space<vmem>>, vector<64x32xbf16>
    %c0_49 = arith.constant 0 : index
    %c0_50 = arith.constant 0 : index
    %25 = vector.load %arg28[%c0_49, %c0_50] : memref<1x32xf32, #tpu.memory_space<vmem>>, vector<1x32xf32>
    %c0_51 = arith.constant 0 : index
    %c0_52 = arith.constant 0 : index
    %26 = vector.load %arg29[%c0_51, %c0_52] : memref<1x32xf32, #tpu.memory_space<vmem>>, vector<1x32xf32>
    %c0_53 = arith.constant 0 : index
    %c0_54 = arith.constant 0 : index
    %27 = vector.load %arg30[%c0_53, %c0_54] : memref<1x32xf32, #tpu.memory_space<vmem>>, vector<1x32xf32>
    %c0_55 = arith.constant 0 : index
    %c0_56 = arith.constant 0 : index
    %c0_57 = arith.constant 0 : index
    %28 = vector.load %arg1[%c0_55, %c0_56, %c0_57] : memref<2x8x32xf32, #tpu.memory_space<vmem>>, vector<2x8x32xf32>
    %29 = vector.shape_cast %28 : vector<2x8x32xf32> to vector<16x32xf32>
    %cst = arith.constant dense<0.000000e+00> : vector<16xf32>
    %30 = vector.multi_reduction <add>, %29, %cst [1] : vector<16x32xf32> to vector<16xf32>
    %31 = vector.shape_cast %30 : vector<16xf32> to vector<16x1xf32>
    %cst_58 = arith.constant 3.200000e+01 : f32
    %32 = vector.broadcast %cst_58 : f32 to vector<16x1xf32>
    %33 = arith.divf %31, %32 : vector<16x1xf32>
    %34 = vector.broadcast %33 : vector<16x1xf32> to vector<16x32xf32>
    %35 = arith.subf %29, %34 : vector<16x32xf32>
    %36 = arith.mulf %35, %35 : vector<16x32xf32>
    %cst_59 = arith.constant dense<0.000000e+00> : vector<16xf32>
    %37 = vector.multi_reduction <add>, %36, %cst_59 [1] : vector<16x32xf32> to vector<16xf32>
    %38 = vector.shape_cast %37 : vector<16xf32> to vector<16x1xf32>
    %cst_60 = arith.constant 3.200000e+01 : f32
    %39 = vector.broadcast %cst_60 : f32 to vector<16x1xf32>
    %40 = arith.divf %38, %39 : vector<16x1xf32>
    %41 = vector.broadcast %33 : vector<16x1xf32> to vector<16x32xf32>
    %42 = arith.subf %29, %41 : vector<16x32xf32>
    %cst_61 = arith.constant 9.99999996E-13 : f32
    %43 = vector.broadcast %cst_61 : f32 to vector<16x1xf32>
    %44 = arith.addf %40, %43 : vector<16x1xf32>
    %45 = math.rsqrt %44 : vector<16x1xf32>
    %46 = vector.broadcast %45 : vector<16x1xf32> to vector<16x32xf32>
    %47 = arith.mulf %42, %46 : vector<16x32xf32>
    %48 = vector.broadcast %0 : vector<1x32xf32> to vector<16x32xf32>
    %49 = arith.mulf %47, %48 : vector<16x32xf32>
    %50 = vector.broadcast %1 : vector<1x32xf32> to vector<16x32xf32>
    %51 = arith.addf %49, %50 : vector<16x32xf32>
    %52 = arith.truncf %51 : vector<16x32xf32> to vector<16x32xbf16>
    %53 = arith.truncf %51 : vector<16x32xf32> to vector<16x32xbf16>
    %cst_62 = arith.constant dense<0.000000e+00> : vector<16x32xf32>
    %54 = tpu.matmul %52, %2, %cst_62 {dimension_numbers = #tpu.dot_dimension_numbers<[1], [0], [0], [1], [0, 0, 1, 1], [], []>} : vector<16x32xbf16>, vector<32x32xbf16>, vector<16x32xf32> -> vector<16x32xf32>
    %55 = vector.broadcast %3 : vector<1x32xf32> to vector<16x32xf32>
    %56 = arith.addf %54, %55 : vector<16x32xf32>
    %cst_63 = arith.constant dense<0.000000e+00> : vector<16x32xf32>
    %57 = tpu.matmul %53, %4, %cst_63 {dimension_numbers = #tpu.dot_dimension_numbers<[1], [0], [0], [1], [0, 0, 1, 1], [], []>} : vector<16x32xbf16>, vector<32x32xbf16>, vector<16x32xf32> -> vector<16x32xf32>
    %58 = vector.broadcast %5 : vector<1x32xf32> to vector<16x32xf32>
    %59 = arith.addf %57, %58 : vector<16x32xf32>
    %cst_64 = arith.constant dense<0.000000e+00> : vector<16x32xf32>
    %60 = tpu.matmul %53, %6, %cst_64 {dimension_numbers = #tpu.dot_dimension_numbers<[1], [0], [0], [1], [0, 0, 1, 1], [], []>} : vector<16x32xbf16>, vector<32x32xbf16>, vector<16x32xf32> -> vector<16x32xf32>
    %61 = vector.broadcast %7 : vector<1x32xf32> to vector<16x32xf32>
    %62 = arith.addf %60, %61 : vector<16x32xf32>
    %63 = vector.shape_cast %56 : vector<16x32xf32> to vector<2x8x32xf32>
    %64 = vector.shape_cast %59 : vector<16x32xf32> to vector<2x8x32xf32>
    %65 = vector.shape_cast %62 : vector<16x32xf32> to vector<2x8x32xf32>
    %66 = vector.extract_strided_slice %63 {offsets = [0, 0, 0], sizes = [2, 8, 8], strides = [1, 1, 1]} : vector<2x8x32xf32> to vector<2x8x8xf32>
    %67 = arith.truncf %66 : vector<2x8x8xf32> to vector<2x8x8xbf16>
    %68 = vector.extract_strided_slice %64 {offsets = [0, 0, 0], sizes = [2, 8, 8], strides = [1, 1, 1]} : vector<2x8x32xf32> to vector<2x8x8xf32>
    %69 = arith.truncf %68 : vector<2x8x8xf32> to vector<2x8x8xbf16>
    %70 = vector.extract_strided_slice %65 {offsets = [0, 0, 0], sizes = [2, 8, 8], strides = [1, 1, 1]} : vector<2x8x32xf32> to vector<2x8x8xf32>
    %71 = arith.truncf %70 : vector<2x8x8xf32> to vector<2x8x8xbf16>
    "tpu.trace_start"() <{level = 10 : i32, message = "bqd,bkd->bqk"}> : () -> ()
    %cst_65 = arith.constant dense<0.000000e+00> : vector<2x8x8xf32>
    %72 = tpu.matmul %67, %69, %cst_65 {dimension_numbers = #tpu.dot_dimension_numbers<[2], [2], [1], [1], [0, 0, 0, 1, 1, 1], [0], [0]>} : vector<2x8x8xbf16>, vector<2x8x8xbf16>, vector<2x8x8xf32> -> vector<2x8x8xf32>
    "tpu.trace_stop"() : () -> ()
    %cst_66 = arith.constant 0.353553385 : f32
    %73 = vector.broadcast %cst_66 : f32 to vector<2x8x8xf32>
    %74 = arith.mulf %72, %73 : vector<2x8x8xf32>
    %cst_67 = arith.constant dense<0xFF800000> : vector<2x8xf32>
    %75 = vector.multi_reduction <maximumf>, %74, %cst_67 [2] : vector<2x8x8xf32> to vector<2x8xf32>
    %76 = vector.shape_cast %75 : vector<2x8xf32> to vector<2x8x1xf32>
    %77 = vector.broadcast %76 : vector<2x8x1xf32> to vector<2x8x8xf32>
    %78 = arith.subf %74, %77 : vector<2x8x8xf32>
    %79 = math.exp %78 : vector<2x8x8xf32>
    %cst_68 = arith.constant dense<0.000000e+00> : vector<2x8xf32>
    %80 = vector.multi_reduction <add>, %79, %cst_68 [2] : vector<2x8x8xf32> to vector<2x8xf32>
    %81 = vector.shape_cast %80 : vector<2x8xf32> to vector<2x8x1xf32>
    %82 = tpu.reciprocal %81 {approx = true} : vector<2x8x1xf32> -> vector<2x8x1xf32>
    %83 = vector.broadcast %82 : vector<2x8x1xf32> to vector<2x8x8xf32>
    %84 = arith.mulf %79, %83 : vector<2x8x8xf32>
    %85 = arith.truncf %84 : vector<2x8x8xf32> to vector<2x8x8xbf16>
    "tpu.trace_start"() <{level = 10 : i32, message = "bqk,bkd->bqd"}> : () -> ()
    %cst_69 = arith.constant dense<0.000000e+00> : vector<2x8x8xf32>
    %86 = tpu.matmul %85, %71, %cst_69 {dimension_numbers = #tpu.dot_dimension_numbers<[2], [1], [1], [2], [0, 0, 0, 1, 1, 2], [0], [0]>} : vector<2x8x8xbf16>, vector<2x8x8xbf16>, vector<2x8x8xf32> -> vector<2x8x8xf32>
    "tpu.trace_stop"() : () -> ()
    %c0_70 = arith.constant 0 : index
    %c0_71 = arith.constant 0 : index
    %c0_72 = arith.constant 0 : index
    %87 = vector.load %arg32[%c0_70, %c0_71, %c0_72] : memref<2x8x32xf32, #tpu.memory_space<vmem>>, vector<2x8x8xf32>
    tpu.vector_store %arg32[%c0_70, %c0_71, %c0_72], %86 {strides = array<i32>} : memref<2x8x32xf32, #tpu.memory_space<vmem>>, vector<2x8x8xf32>,
    %88 = vector.extract_strided_slice %63 {offsets = [0, 0, 8], sizes = [2, 8, 8], strides = [1, 1, 1]} : vector<2x8x32xf32> to vector<2x8x8xf32>
    %89 = arith.truncf %88 : vector<2x8x8xf32> to vector<2x8x8xbf16>
    %90 = vector.extract_strided_slice %64 {offsets = [0, 0, 8], sizes = [2, 8, 8], strides = [1, 1, 1]} : vector<2x8x32xf32> to vector<2x8x8xf32>
    %91 = arith.truncf %90 : vector<2x8x8xf32> to vector<2x8x8xbf16>
    %92 = vector.extract_strided_slice %65 {offsets = [0, 0, 8], sizes = [2, 8, 8], strides = [1, 1, 1]} : vector<2x8x32xf32> to vector<2x8x8xf32>
    %93 = arith.truncf %92 : vector<2x8x8xf32> to vector<2x8x8xbf16>
    "tpu.trace_start"() <{level = 10 : i32, message = "bqd,bkd->bqk"}> : () -> ()
    %cst_73 = arith.constant dense<0.000000e+00> : vector<2x8x8xf32>
    %94 = tpu.matmul %89, %91, %cst_73 {dimension_numbers = #tpu.dot_dimension_numbers<[2], [2], [1], [1], [0, 0, 0, 1, 1, 1], [0], [0]>} : vector<2x8x8xbf16>, vector<2x8x8xbf16>, vector<2x8x8xf32> -> vector<2x8x8xf32>
    "tpu.trace_stop"() : () -> ()
    %cst_74 = arith.constant 0.353553385 : f32
    %95 = vector.broadcast %cst_74 : f32 to vector<2x8x8xf32>
    %96 = arith.mulf %94, %95 : vector<2x8x8xf32>
    %cst_75 = arith.constant dense<0xFF800000> : vector<2x8xf32>
    %97 = vector.multi_reduction <maximumf>, %96, %cst_75 [2] : vector<2x8x8xf32> to vector<2x8xf32>
    %98 = vector.shape_cast %97 : vector<2x8xf32> to vector<2x8x1xf32>
    %99 = vector.broadcast %98 : vector<2x8x1xf32> to vector<2x8x8xf32>
    %100 = arith.subf %96, %99 : vector<2x8x8xf32>
    %101 = math.exp %100 : vector<2x8x8xf32>
    %cst_76 = arith.constant dense<0.000000e+00> : vector<2x8xf32>
    %102 = vector.multi_reduction <add>, %101, %cst_76 [2] : vector<2x8x8xf32> to vector<2x8xf32>
    %103 = vector.shape_cast %102 : vector<2x8xf32> to vector<2x8x1xf32>
    %104 = tpu.reciprocal %103 {approx = true} : vector<2x8x1xf32> -> vector<2x8x1xf32>
    %105 = vector.broadcast %104 : vector<2x8x1xf32> to vector<2x8x8xf32>
    %106 = arith.mulf %101, %105 : vector<2x8x8xf32>
    %107 = arith.truncf %106 : vector<2x8x8xf32> to vector<2x8x8xbf16>
    "tpu.trace_start"() <{level = 10 : i32, message = "bqk,bkd->bqd"}> : () -> ()
    %cst_77 = arith.constant dense<0.000000e+00> : vector<2x8x8xf32>
    %108 = tpu.matmul %107, %93, %cst_77 {dimension_numbers = #tpu.dot_dimension_numbers<[2], [1], [1], [2], [0, 0, 0, 1, 1, 2], [0], [0]>} : vector<2x8x8xbf16>, vector<2x8x8xbf16>, vector<2x8x8xf32> -> vector<2x8x8xf32>
    "tpu.trace_stop"() : () -> ()
    %c0_78 = arith.constant 0 : index
    %c0_79 = arith.constant 0 : index
    %c8 = arith.constant 8 : index
    %109 = vector.load %arg32[%c0_78, %c0_79, %c8] : memref<2x8x32xf32, #tpu.memory_space<vmem>>, vector<2x8x8xf32>
    tpu.vector_store %arg32[%c0_78, %c0_79, %c8], %108 {strides = array<i32>} : memref<2x8x32xf32, #tpu.memory_space<vmem>>, vector<2x8x8xf32>,
    %110 = vector.extract_strided_slice %63 {offsets = [0, 0, 16], sizes = [2, 8, 8], strides = [1, 1, 1]} : vector<2x8x32xf32> to vector<2x8x8xf32>
    %111 = arith.truncf %110 : vector<2x8x8xf32> to vector<2x8x8xbf16>
    %112 = vector.extract_strided_slice %64 {offsets = [0, 0, 16], sizes = [2, 8, 8], strides = [1, 1, 1]} : vector<2x8x32xf32> to vector<2x8x8xf32>
    %113 = arith.truncf %112 : vector<2x8x8xf32> to vector<2x8x8xbf16>
    %114 = vector.extract_strided_slice %65 {offsets = [0, 0, 16], sizes = [2, 8, 8], strides = [1, 1, 1]} : vector<2x8x32xf32> to vector<2x8x8xf32>
    %115 = arith.truncf %114 : vector<2x8x8xf32> to vector<2x8x8xbf16>
    "tpu.trace_start"() <{level = 10 : i32, message = "bqd,bkd->bqk"}> : () -> ()
    %cst_80 = arith.constant dense<0.000000e+00> : vector<2x8x8xf32>
    %116 = tpu.matmul %111, %113, %cst_80 {dimension_numbers = #tpu.dot_dimension_numbers<[2], [2], [1], [1], [0, 0, 0, 1, 1, 1], [0], [0]>} : vector<2x8x8xbf16>, vector<2x8x8xbf16>, vector<2x8x8xf32> -> vector<2x8x8xf32>
    "tpu.trace_stop"() : () -> ()
    %cst_81 = arith.constant 0.353553385 : f32
    %117 = vector.broadcast %cst_81 : f32 to vector<2x8x8xf32>
    %118 = arith.mulf %116, %117 : vector<2x8x8xf32>
    %cst_82 = arith.constant dense<0xFF800000> : vector<2x8xf32>
    %119 = vector.multi_reduction <maximumf>, %118, %cst_82 [2] : vector<2x8x8xf32> to vector<2x8xf32>
    %120 = vector.shape_cast %119 : vector<2x8xf32> to vector<2x8x1xf32>
    %121 = vector.broadcast %120 : vector<2x8x1xf32> to vector<2x8x8xf32>
    %122 = arith.subf %118, %121 : vector<2x8x8xf32>
    %123 = math.exp %122 : vector<2x8x8xf32>
    %cst_83 = arith.constant dense<0.000000e+00> : vector<2x8xf32>
    %124 = vector.multi_reduction <add>, %123, %cst_83 [2] : vector<2x8x8xf32> to vector<2x8xf32>
    %125 = vector.shape_cast %124 : vector<2x8xf32> to vector<2x8x1xf32>
    %126 = tpu.reciprocal %125 {approx = true} : vector<2x8x1xf32> -> vector<2x8x1xf32>
    %127 = vector.broadcast %126 : vector<2x8x1xf32> to vector<2x8x8xf32>
    %128 = arith.mulf %123, %127 : vector<2x8x8xf32>
    %129 = arith.truncf %128 : vector<2x8x8xf32> to vector<2x8x8xbf16>
    "tpu.trace_start"() <{level = 10 : i32, message = "bqk,bkd->bqd"}> : () -> ()
    %cst_84 = arith.constant dense<0.000000e+00> : vector<2x8x8xf32>
    %130 = tpu.matmul %129, %115, %cst_84 {dimension_numbers = #tpu.dot_dimension_numbers<[2], [1], [1], [2], [0, 0, 0, 1, 1, 2], [0], [0]>} : vector<2x8x8xbf16>, vector<2x8x8xbf16>, vector<2x8x8xf32> -> vector<2x8x8xf32>
    "tpu.trace_stop"() : () -> ()
    %c0_85 = arith.constant 0 : index
    %c0_86 = arith.constant 0 : index
    %c16 = arith.constant 16 : index
    %131 = vector.load %arg32[%c0_85, %c0_86, %c16] : memref<2x8x32xf32, #tpu.memory_space<vmem>>, vector<2x8x8xf32>
    tpu.vector_store %arg32[%c0_85, %c0_86, %c16], %130 {strides = array<i32>} : memref<2x8x32xf32, #tpu.memory_space<vmem>>, vector<2x8x8xf32>,
    %132 = vector.extract_strided_slice %63 {offsets = [0, 0, 24], sizes = [2, 8, 8], strides = [1, 1, 1]} : vector<2x8x32xf32> to vector<2x8x8xf32>
    %133 = arith.truncf %132 : vector<2x8x8xf32> to vector<2x8x8xbf16>
    %134 = vector.extract_strided_slice %64 {offsets = [0, 0, 24], sizes = [2, 8, 8], strides = [1, 1, 1]} : vector<2x8x32xf32> to vector<2x8x8xf32>
    %135 = arith.truncf %134 : vector<2x8x8xf32> to vector<2x8x8xbf16>
    %136 = vector.extract_strided_slice %65 {offsets = [0, 0, 24], sizes = [2, 8, 8], strides = [1, 1, 1]} : vector<2x8x32xf32> to vector<2x8x8xf32>
    %137 = arith.truncf %136 : vector<2x8x8xf32> to vector<2x8x8xbf16>
    "tpu.trace_start"() <{level = 10 : i32, message = "bqd,bkd->bqk"}> : () -> ()
    %cst_87 = arith.constant dense<0.000000e+00> : vector<2x8x8xf32>
    %138 = tpu.matmul %133, %135, %cst_87 {dimension_numbers = #tpu.dot_dimension_numbers<[2], [2], [1], [1], [0, 0, 0, 1, 1, 1], [0], [0]>} : vector<2x8x8xbf16>, vector<2x8x8xbf16>, vector<2x8x8xf32> -> vector<2x8x8xf32>
    "tpu.trace_stop"() : () -> ()
    %cst_88 = arith.constant 0.353553385 : f32
    %139 = vector.broadcast %cst_88 : f32 to vector<2x8x8xf32>
    %140 = arith.mulf %138, %139 : vector<2x8x8xf32>
    %cst_89 = arith.constant dense<0xFF800000> : vector<2x8xf32>
    %141 = vector.multi_reduction <maximumf>, %140, %cst_89 [2] : vector<2x8x8xf32> to vector<2x8xf32>
    %142 = vector.shape_cast %141 : vector<2x8xf32> to vector<2x8x1xf32>
    %143 = vector.broadcast %142 : vector<2x8x1xf32> to vector<2x8x8xf32>
    %144 = arith.subf %140, %143 : vector<2x8x8xf32>
    %145 = math.exp %144 : vector<2x8x8xf32>
    %cst_90 = arith.constant dense<0.000000e+00> : vector<2x8xf32>
    %146 = vector.multi_reduction <add>, %145, %cst_90 [2] : vector<2x8x8xf32> to vector<2x8xf32>
    %147 = vector.shape_cast %146 : vector<2x8xf32> to vector<2x8x1xf32>
    %148 = tpu.reciprocal %147 {approx = true} : vector<2x8x1xf32> -> vector<2x8x1xf32>
    %149 = vector.broadcast %148 : vector<2x8x1xf32> to vector<2x8x8xf32>
    %150 = arith.mulf %145, %149 : vector<2x8x8xf32>
    %151 = arith.truncf %150 : vector<2x8x8xf32> to vector<2x8x8xbf16>
    "tpu.trace_start"() <{level = 10 : i32, message = "bqk,bkd->bqd"}> : () -> ()
    %cst_91 = arith.constant dense<0.000000e+00> : vector<2x8x8xf32>
    %152 = tpu.matmul %151, %137, %cst_91 {dimension_numbers = #tpu.dot_dimension_numbers<[2], [1], [1], [2], [0, 0, 0, 1, 1, 2], [0], [0]>} : vector<2x8x8xbf16>, vector<2x8x8xbf16>, vector<2x8x8xf32> -> vector<2x8x8xf32>
    "tpu.trace_stop"() : () -> ()
    %c0_92 = arith.constant 0 : index
    %c0_93 = arith.constant 0 : index
    %c24 = arith.constant 24 : index
    %153 = vector.load %arg32[%c0_92, %c0_93, %c24] : memref<2x8x32xf32, #tpu.memory_space<vmem>>, vector<2x8x8xf32>
    tpu.vector_store %arg32[%c0_92, %c0_93, %c24], %152 {strides = array<i32>} : memref<2x8x32xf32, #tpu.memory_space<vmem>>, vector<2x8x8xf32>,
    %c0_94 = arith.constant 0 : index
    %c0_95 = arith.constant 0 : index
    %c0_96 = arith.constant 0 : index
    %154 = vector.load %arg32[%c0_94, %c0_95, %c0_96] : memref<2x8x32xf32, #tpu.memory_space<vmem>>, vector<2x8x32xf32>
    %155 = vector.shape_cast %154 : vector<2x8x32xf32> to vector<16x32xf32>
    %156 = arith.truncf %155 : vector<16x32xf32> to vector<16x32xbf16>
    %cst_97 = arith.constant dense<0.000000e+00> : vector<16x32xf32>
    %157 = tpu.matmul %156, %8, %cst_97 {dimension_numbers = #tpu.dot_dimension_numbers<[1], [0], [0], [1], [0, 0, 1, 1], [], []>} : vector<16x32xbf16>, vector<32x32xbf16>, vector<16x32xf32> -> vector<16x32xf32>
    %158 = vector.broadcast %9 : vector<1x32xf32> to vector<16x32xf32>
    %159 = arith.addf %157, %158 : vector<16x32xf32>
    %160 = arith.addf %159, %51 : vector<16x32xf32>
    %cst_98 = arith.constant dense<0.000000e+00> : vector<16xf32>
    %161 = vector.multi_reduction <add>, %160, %cst_98 [1] : vector<16x32xf32> to vector<16xf32>
    %162 = vector.shape_cast %161 : vector<16xf32> to vector<16x1xf32>
    %cst_99 = arith.constant 3.200000e+01 : f32
    %163 = vector.broadcast %cst_99 : f32 to vector<16x1xf32>
    %164 = arith.divf %162, %163 : vector<16x1xf32>
    %165 = vector.broadcast %164 : vector<16x1xf32> to vector<16x32xf32>
    %166 = arith.subf %160, %165 : vector<16x32xf32>
    %167 = arith.mulf %166, %166 : vector<16x32xf32>
    %cst_100 = arith.constant dense<0.000000e+00> : vector<16xf32>
    %168 = vector.multi_reduction <add>, %167, %cst_100 [1] : vector<16x32xf32> to vector<16xf32>
    %169 = vector.shape_cast %168 : vector<16xf32> to vector<16x1xf32>
    %cst_101 = arith.constant 3.200000e+01 : f32
    %170 = vector.broadcast %cst_101 : f32 to vector<16x1xf32>
    %171 = arith.divf %169, %170 : vector<16x1xf32>
    %172 = vector.broadcast %164 : vector<16x1xf32> to vector<16x32xf32>
    %173 = arith.subf %160, %172 : vector<16x32xf32>
    %cst_102 = arith.constant 9.99999996E-13 : f32
    %174 = vector.broadcast %cst_102 : f32 to vector<16x1xf32>
    %175 = arith.addf %171, %174 : vector<16x1xf32>
    %176 = math.rsqrt %175 : vector<16x1xf32>
    %177 = vector.broadcast %176 : vector<16x1xf32> to vector<16x32xf32>
    %178 = arith.mulf %173, %177 : vector<16x32xf32>
    %179 = vector.broadcast %10 : vector<1x32xf32> to vector<16x32xf32>
    %180 = arith.mulf %178, %179 : vector<16x32xf32>
    %181 = vector.broadcast %11 : vector<1x32xf32> to vector<16x32xf32>
    %182 = arith.addf %180, %181 : vector<16x32xf32>
    %c0_103 = arith.constant 0 : index
    %c0_104 = arith.constant 0 : index
    %c0_105 = arith.constant 0 : index
    %183 = vector.load %arg2[%c0_103, %c0_104, %c0_105] : memref<2x16x48xf32, #tpu.memory_space<vmem>>, vector<2x16x48xf32>
    %184 = vector.shape_cast %183 : vector<2x16x48xf32> to vector<32x48xf32>
    %185 = arith.truncf %182 : vector<16x32xf32> to vector<16x32xbf16>
    %186 = arith.truncf %184 : vector<32x48xf32> to vector<32x48xbf16>
    %cst_106 = arith.constant dense<0.000000e+00> : vector<16x32xf32>
    %187 = tpu.matmul %185, %12, %cst_106 {dimension_numbers = #tpu.dot_dimension_numbers<[1], [0], [0], [1], [0, 0, 1, 1], [], []>} : vector<16x32xbf16>, vector<32x32xbf16>, vector<16x32xf32> -> vector<16x32xf32>
    %188 = vector.broadcast %13 : vector<1x32xf32> to vector<16x32xf32>
    %189 = arith.addf %187, %188 : vector<16x32xf32>
    %cst_107 = arith.constant dense<0.000000e+00> : vector<32x32xf32>
    %190 = tpu.matmul %186, %14, %cst_107 {dimension_numbers = #tpu.dot_dimension_numbers<[1], [0], [0], [1], [0, 0, 1, 1], [], []>} : vector<32x48xbf16>, vector<48x32xbf16>, vector<32x32xf32> -> vector<32x32xf32>
    %191 = vector.broadcast %15 : vector<1x32xf32> to vector<32x32xf32>
    %192 = arith.addf %190, %191 : vector<32x32xf32>
    %cst_108 = arith.constant dense<0.000000e+00> : vector<32x32xf32>
    %193 = tpu.matmul %186, %16, %cst_108 {dimension_numbers = #tpu.dot_dimension_numbers<[1], [0], [0], [1], [0, 0, 1, 1], [], []>} : vector<32x48xbf16>, vector<48x32xbf16>, vector<32x32xf32> -> vector<32x32xf32>
    %194 = vector.broadcast %17 : vector<1x32xf32> to vector<32x32xf32>
    %195 = arith.addf %193, %194 : vector<32x32xf32>
    %196 = vector.shape_cast %189 : vector<16x32xf32> to vector<2x8x32xf32>
    %197 = vector.shape_cast %192 : vector<32x32xf32> to vector<2x16x32xf32>
    %198 = vector.shape_cast %195 : vector<32x32xf32> to vector<2x16x32xf32>
    %199 = vector.extract_strided_slice %196 {offsets = [0, 0, 0], sizes = [2, 8, 8], strides = [1, 1, 1]} : vector<2x8x32xf32> to vector<2x8x8xf32>
    %200 = arith.truncf %199 : vector<2x8x8xf32> to vector<2x8x8xbf16>
    %201 = vector.extract_strided_slice %197 {offsets = [0, 0, 0], sizes = [2, 16, 8], strides = [1, 1, 1]} : vector<2x16x32xf32> to vector<2x16x8xf32>
    %202 = arith.truncf %201 : vector<2x16x8xf32> to vector<2x16x8xbf16>
    %203 = vector.extract_strided_slice %198 {offsets = [0, 0, 0], sizes = [2, 16, 8], strides = [1, 1, 1]} : vector<2x16x32xf32> to vector<2x16x8xf32>
    %204 = arith.truncf %203 : vector<2x16x8xf32> to vector<2x16x8xbf16>
    "tpu.trace_start"() <{level = 10 : i32, message = "bqd,bkd->bqk"}> : () -> ()
    %cst_109 = arith.constant dense<0.000000e+00> : vector<2x8x16xf32>
    %205 = tpu.matmul %200, %202, %cst_109 {dimension_numbers = #tpu.dot_dimension_numbers<[2], [2], [1], [1], [0, 0, 0, 1, 1, 1], [0], [0]>} : vector<2x8x8xbf16>, vector<2x16x8xbf16>, vector<2x8x16xf32> -> vector<2x8x16xf32>
    "tpu.trace_stop"() : () -> ()
    %cst_110 = arith.constant 0.353553385 : f32
    %206 = vector.broadcast %cst_110 : f32 to vector<2x8x16xf32>
    %207 = arith.mulf %205, %206 : vector<2x8x16xf32>
    %cst_111 = arith.constant dense<0xFF800000> : vector<2x8xf32>
    %208 = vector.multi_reduction <maximumf>, %207, %cst_111 [2] : vector<2x8x16xf32> to vector<2x8xf32>
    %209 = vector.shape_cast %208 : vector<2x8xf32> to vector<2x8x1xf32>
    %210 = vector.broadcast %209 : vector<2x8x1xf32> to vector<2x8x16xf32>
    %211 = arith.subf %207, %210 : vector<2x8x16xf32>
    %212 = math.exp %211 : vector<2x8x16xf32>
    %cst_112 = arith.constant dense<0.000000e+00> : vector<2x8xf32>
    %213 = vector.multi_reduction <add>, %212, %cst_112 [2] : vector<2x8x16xf32> to vector<2x8xf32>
    %214 = vector.shape_cast %213 : vector<2x8xf32> to vector<2x8x1xf32>
    %215 = tpu.reciprocal %214 {approx = true} : vector<2x8x1xf32> -> vector<2x8x1xf32>
    %216 = vector.broadcast %215 : vector<2x8x1xf32> to vector<2x8x16xf32>
    %217 = arith.mulf %212, %216 : vector<2x8x16xf32>
    %218 = arith.truncf %217 : vector<2x8x16xf32> to vector<2x8x16xbf16>
    "tpu.trace_start"() <{level = 10 : i32, message = "bqk,bkd->bqd"}> : () -> ()
    %cst_113 = arith.constant dense<0.000000e+00> : vector<2x8x8xf32>
    %219 = tpu.matmul %218, %204, %cst_113 {dimension_numbers = #tpu.dot_dimension_numbers<[2], [1], [1], [2], [0, 0, 0, 1, 1, 2], [0], [0]>} : vector<2x8x16xbf16>, vector<2x16x8xbf16>, vector<2x8x8xf32> -> vector<2x8x8xf32>
    "tpu.trace_stop"() : () -> ()
    %c0_114 = arith.constant 0 : index
    %c0_115 = arith.constant 0 : index
    %c0_116 = arith.constant 0 : index
    %220 = vector.load %arg32[%c0_114, %c0_115, %c0_116] : memref<2x8x32xf32, #tpu.memory_space<vmem>>, vector<2x8x8xf32>
    tpu.vector_store %arg32[%c0_114, %c0_115, %c0_116], %219 {strides = array<i32>} : memref<2x8x32xf32, #tpu.memory_space<vmem>>, vector<2x8x8xf32>,
    %221 = vector.extract_strided_slice %196 {offsets = [0, 0, 8], sizes = [2, 8, 8], strides = [1, 1, 1]} : vector<2x8x32xf32> to vector<2x8x8xf32>
    %222 = arith.truncf %221 : vector<2x8x8xf32> to vector<2x8x8xbf16>
    %223 = vector.extract_strided_slice %197 {offsets = [0, 0, 8], sizes = [2, 16, 8], strides = [1, 1, 1]} : vector<2x16x32xf32> to vector<2x16x8xf32>
    %224 = arith.truncf %223 : vector<2x16x8xf32> to vector<2x16x8xbf16>
    %225 = vector.extract_strided_slice %198 {offsets = [0, 0, 8], sizes = [2, 16, 8], strides = [1, 1, 1]} : vector<2x16x32xf32> to vector<2x16x8xf32>
    %226 = arith.truncf %225 : vector<2x16x8xf32> to vector<2x16x8xbf16>
    "tpu.trace_start"() <{level = 10 : i32, message = "bqd,bkd->bqk"}> : () -> ()
    %cst_117 = arith.constant dense<0.000000e+00> : vector<2x8x16xf32>
    %227 = tpu.matmul %222, %224, %cst_117 {dimension_numbers = #tpu.dot_dimension_numbers<[2], [2], [1], [1], [0, 0, 0, 1, 1, 1], [0], [0]>} : vector<2x8x8xbf16>, vector<2x16x8xbf16>, vector<2x8x16xf32> -> vector<2x8x16xf32>
    "tpu.trace_stop"() : () -> ()
    %cst_118 = arith.constant 0.353553385 : f32
    %228 = vector.broadcast %cst_118 : f32 to vector<2x8x16xf32>
    %229 = arith.mulf %227, %228 : vector<2x8x16xf32>
    %cst_119 = arith.constant dense<0xFF800000> : vector<2x8xf32>
    %230 = vector.multi_reduction <maximumf>, %229, %cst_119 [2] : vector<2x8x16xf32> to vector<2x8xf32>
    %231 = vector.shape_cast %230 : vector<2x8xf32> to vector<2x8x1xf32>
    %232 = vector.broadcast %231 : vector<2x8x1xf32> to vector<2x8x16xf32>
    %233 = arith.subf %229, %232 : vector<2x8x16xf32>
    %234 = math.exp %233 : vector<2x8x16xf32>
    %cst_120 = arith.constant dense<0.000000e+00> : vector<2x8xf32>
    %235 = vector.multi_reduction <add>, %234, %cst_120 [2] : vector<2x8x16xf32> to vector<2x8xf32>
    %236 = vector.shape_cast %235 : vector<2x8xf32> to vector<2x8x1xf32>
    %237 = tpu.reciprocal %236 {approx = true} : vector<2x8x1xf32> -> vector<2x8x1xf32>
    %238 = vector.broadcast %237 : vector<2x8x1xf32> to vector<2x8x16xf32>
    %239 = arith.mulf %234, %238 : vector<2x8x16xf32>
    %240 = arith.truncf %239 : vector<2x8x16xf32> to vector<2x8x16xbf16>
    "tpu.trace_start"() <{level = 10 : i32, message = "bqk,bkd->bqd"}> : () -> ()
    %cst_121 = arith.constant dense<0.000000e+00> : vector<2x8x8xf32>
    %241 = tpu.matmul %240, %226, %cst_121 {dimension_numbers = #tpu.dot_dimension_numbers<[2], [1], [1], [2], [0, 0, 0, 1, 1, 2], [0], [0]>} : vector<2x8x16xbf16>, vector<2x16x8xbf16>, vector<2x8x8xf32> -> vector<2x8x8xf32>
    "tpu.trace_stop"() : () -> ()
    %c0_122 = arith.constant 0 : index
    %c0_123 = arith.constant 0 : index
    %c8_124 = arith.constant 8 : index
    %242 = vector.load %arg32[%c0_122, %c0_123, %c8_124] : memref<2x8x32xf32, #tpu.memory_space<vmem>>, vector<2x8x8xf32>
    tpu.vector_store %arg32[%c0_122, %c0_123, %c8_124], %241 {strides = array<i32>} : memref<2x8x32xf32, #tpu.memory_space<vmem>>, vector<2x8x8xf32>,
    %243 = vector.extract_strided_slice %196 {offsets = [0, 0, 16], sizes = [2, 8, 8], strides = [1, 1, 1]} : vector<2x8x32xf32> to vector<2x8x8xf32>
    %244 = arith.truncf %243 : vector<2x8x8xf32> to vector<2x8x8xbf16>
    %245 = vector.extract_strided_slice %197 {offsets = [0, 0, 16], sizes = [2, 16, 8], strides = [1, 1, 1]} : vector<2x16x32xf32> to vector<2x16x8xf32>
    %246 = arith.truncf %245 : vector<2x16x8xf32> to vector<2x16x8xbf16>
    %247 = vector.extract_strided_slice %198 {offsets = [0, 0, 16], sizes = [2, 16, 8], strides = [1, 1, 1]} : vector<2x16x32xf32> to vector<2x16x8xf32>
    %248 = arith.truncf %247 : vector<2x16x8xf32> to vector<2x16x8xbf16>
    "tpu.trace_start"() <{level = 10 : i32, message = "bqd,bkd->bqk"}> : () -> ()
    %cst_125 = arith.constant dense<0.000000e+00> : vector<2x8x16xf32>
    %249 = tpu.matmul %244, %246, %cst_125 {dimension_numbers = #tpu.dot_dimension_numbers<[2], [2], [1], [1], [0, 0, 0, 1, 1, 1], [0], [0]>} : vector<2x8x8xbf16>, vector<2x16x8xbf16>, vector<2x8x16xf32> -> vector<2x8x16xf32>
    "tpu.trace_stop"() : () -> ()
    %cst_126 = arith.constant 0.353553385 : f32
    %250 = vector.broadcast %cst_126 : f32 to vector<2x8x16xf32>
    %251 = arith.mulf %249, %250 : vector<2x8x16xf32>
    %cst_127 = arith.constant dense<0xFF800000> : vector<2x8xf32>
    %252 = vector.multi_reduction <maximumf>, %251, %cst_127 [2] : vector<2x8x16xf32> to vector<2x8xf32>
    %253 = vector.shape_cast %252 : vector<2x8xf32> to vector<2x8x1xf32>
    %254 = vector.broadcast %253 : vector<2x8x1xf32> to vector<2x8x16xf32>
    %255 = arith.subf %251, %254 : vector<2x8x16xf32>
    %256 = math.exp %255 : vector<2x8x16xf32>
    %cst_128 = arith.constant dense<0.000000e+00> : vector<2x8xf32>
    %257 = vector.multi_reduction <add>, %256, %cst_128 [2] : vector<2x8x16xf32> to vector<2x8xf32>
    %258 = vector.shape_cast %257 : vector<2x8xf32> to vector<2x8x1xf32>
    %259 = tpu.reciprocal %258 {approx = true} : vector<2x8x1xf32> -> vector<2x8x1xf32>
    %260 = vector.broadcast %259 : vector<2x8x1xf32> to vector<2x8x16xf32>
    %261 = arith.mulf %256, %260 : vector<2x8x16xf32>
    %262 = arith.truncf %261 : vector<2x8x16xf32> to vector<2x8x16xbf16>
    "tpu.trace_start"() <{level = 10 : i32, message = "bqk,bkd->bqd"}> : () -> ()
    %cst_129 = arith.constant dense<0.000000e+00> : vector<2x8x8xf32>
    %263 = tpu.matmul %262, %248, %cst_129 {dimension_numbers = #tpu.dot_dimension_numbers<[2], [1], [1], [2], [0, 0, 0, 1, 1, 2], [0], [0]>} : vector<2x8x16xbf16>, vector<2x16x8xbf16>, vector<2x8x8xf32> -> vector<2x8x8xf32>
    "tpu.trace_stop"() : () -> ()
    %c0_130 = arith.constant 0 : index
    %c0_131 = arith.constant 0 : index
    %c16_132 = arith.constant 16 : index
    %264 = vector.load %arg32[%c0_130, %c0_131, %c16_132] : memref<2x8x32xf32, #tpu.memory_space<vmem>>, vector<2x8x8xf32>
    tpu.vector_store %arg32[%c0_130, %c0_131, %c16_132], %263 {strides = array<i32>} : memref<2x8x32xf32, #tpu.memory_space<vmem>>, vector<2x8x8xf32>,
    %265 = vector.extract_strided_slice %196 {offsets = [0, 0, 24], sizes = [2, 8, 8], strides = [1, 1, 1]} : vector<2x8x32xf32> to vector<2x8x8xf32>
    %266 = arith.truncf %265 : vector<2x8x8xf32> to vector<2x8x8xbf16>
    %267 = vector.extract_strided_slice %197 {offsets = [0, 0, 24], sizes = [2, 16, 8], strides = [1, 1, 1]} : vector<2x16x32xf32> to vector<2x16x8xf32>
    %268 = arith.truncf %267 : vector<2x16x8xf32> to vector<2x16x8xbf16>
    %269 = vector.extract_strided_slice %198 {offsets = [0, 0, 24], sizes = [2, 16, 8], strides = [1, 1, 1]} : vector<2x16x32xf32> to vector<2x16x8xf32>
    %270 = arith.truncf %269 : vector<2x16x8xf32> to vector<2x16x8xbf16>
    "tpu.trace_start"() <{level = 10 : i32, message = "bqd,bkd->bqk"}> : () -> ()
    %cst_133 = arith.constant dense<0.000000e+00> : vector<2x8x16xf32>
    %271 = tpu.matmul %266, %268, %cst_133 {dimension_numbers = #tpu.dot_dimension_numbers<[2], [2], [1], [1], [0, 0, 0, 1, 1, 1], [0], [0]>} : vector<2x8x8xbf16>, vector<2x16x8xbf16>, vector<2x8x16xf32> -> vector<2x8x16xf32>
    "tpu.trace_stop"() : () -> ()
    %cst_134 = arith.constant 0.353553385 : f32
    %272 = vector.broadcast %cst_134 : f32 to vector<2x8x16xf32>
    %273 = arith.mulf %271, %272 : vector<2x8x16xf32>
    %cst_135 = arith.constant dense<0xFF800000> : vector<2x8xf32>
    %274 = vector.multi_reduction <maximumf>, %273, %cst_135 [2] : vector<2x8x16xf32> to vector<2x8xf32>
    %275 = vector.shape_cast %274 : vector<2x8xf32> to vector<2x8x1xf32>
    %276 = vector.broadcast %275 : vector<2x8x1xf32> to vector<2x8x16xf32>
    %277 = arith.subf %273, %276 : vector<2x8x16xf32>
    %278 = math.exp %277 : vector<2x8x16xf32>
    %cst_136 = arith.constant dense<0.000000e+00> : vector<2x8xf32>
    %279 = vector.multi_reduction <add>, %278, %cst_136 [2] : vector<2x8x16xf32> to vector<2x8xf32>
    %280 = vector.shape_cast %279 : vector<2x8xf32> to vector<2x8x1xf32>
    %281 = tpu.reciprocal %280 {approx = true} : vector<2x8x1xf32> -> vector<2x8x1xf32>
    %282 = vector.broadcast %281 : vector<2x8x1xf32> to vector<2x8x16xf32>
    %283 = arith.mulf %278, %282 : vector<2x8x16xf32>
    %284 = arith.truncf %283 : vector<2x8x16xf32> to vector<2x8x16xbf16>
    "tpu.trace_start"() <{level = 10 : i32, message = "bqk,bkd->bqd"}> : () -> ()
    %cst_137 = arith.constant dense<0.000000e+00> : vector<2x8x8xf32>
    %285 = tpu.matmul %284, %270, %cst_137 {dimension_numbers = #tpu.dot_dimension_numbers<[2], [1], [1], [2], [0, 0, 0, 1, 1, 2], [0], [0]>} : vector<2x8x16xbf16>, vector<2x16x8xbf16>, vector<2x8x8xf32> -> vector<2x8x8xf32>
    "tpu.trace_stop"() : () -> ()
    %c0_138 = arith.constant 0 : index
    %c0_139 = arith.constant 0 : index
    %c24_140 = arith.constant 24 : index
    %286 = vector.load %arg32[%c0_138, %c0_139, %c24_140] : memref<2x8x32xf32, #tpu.memory_space<vmem>>, vector<2x8x8xf32>
    tpu.vector_store %arg32[%c0_138, %c0_139, %c24_140], %285 {strides = array<i32>} : memref<2x8x32xf32, #tpu.memory_space<vmem>>, vector<2x8x8xf32>,
    %c0_141 = arith.constant 0 : index
    %c0_142 = arith.constant 0 : index
    %c0_143 = arith.constant 0 : index
    %287 = vector.load %arg32[%c0_141, %c0_142, %c0_143] : memref<2x8x32xf32, #tpu.memory_space<vmem>>, vector<2x8x32xf32>
    %288 = vector.shape_cast %287 : vector<2x8x32xf32> to vector<16x32xf32>
    %289 = arith.truncf %288 : vector<16x32xf32> to vector<16x32xbf16>
    %cst_144 = arith.constant dense<0.000000e+00> : vector<16x32xf32>
    %290 = tpu.matmul %289, %18, %cst_144 {dimension_numbers = #tpu.dot_dimension_numbers<[1], [0], [0], [1], [0, 0, 1, 1], [], []>} : vector<16x32xbf16>, vector<32x32xbf16>, vector<16x32xf32> -> vector<16x32xf32>
    %291 = vector.broadcast %19 : vector<1x32xf32> to vector<16x32xf32>
    %292 = arith.addf %290, %291 : vector<16x32xf32>
    %293 = arith.addf %292, %182 : vector<16x32xf32>
    %cst_145 = arith.constant dense<0.000000e+00> : vector<16xf32>
    %294 = vector.multi_reduction <add>, %293, %cst_145 [1] : vector<16x32xf32> to vector<16xf32>
    %295 = vector.shape_cast %294 : vector<16xf32> to vector<16x1xf32>
    %cst_146 = arith.constant 3.200000e+01 : f32
    %296 = vector.broadcast %cst_146 : f32 to vector<16x1xf32>
    %297 = arith.divf %295, %296 : vector<16x1xf32>
    %298 = vector.broadcast %297 : vector<16x1xf32> to vector<16x32xf32>
    %299 = arith.subf %293, %298 : vector<16x32xf32>
    %300 = arith.mulf %299, %299 : vector<16x32xf32>
    %cst_147 = arith.constant dense<0.000000e+00> : vector<16xf32>
    %301 = vector.multi_reduction <add>, %300, %cst_147 [1] : vector<16x32xf32> to vector<16xf32>
    %302 = vector.shape_cast %301 : vector<16xf32> to vector<16x1xf32>
    %cst_148 = arith.constant 3.200000e+01 : f32
    %303 = vector.broadcast %cst_148 : f32 to vector<16x1xf32>
    %304 = arith.divf %302, %303 : vector<16x1xf32>
    %305 = vector.broadcast %297 : vector<16x1xf32> to vector<16x32xf32>
    %306 = arith.subf %293, %305 : vector<16x32xf32>
    %cst_149 = arith.constant 9.99999996E-13 : f32
    %307 = vector.broadcast %cst_149 : f32 to vector<16x1xf32>
    %308 = arith.addf %304, %307 : vector<16x1xf32>
    %309 = math.rsqrt %308 : vector<16x1xf32>
    %310 = vector.broadcast %309 : vector<16x1xf32> to vector<16x32xf32>
    %311 = arith.mulf %306, %310 : vector<16x32xf32>
    %312 = vector.broadcast %20 : vector<1x32xf32> to vector<16x32xf32>
    %313 = arith.mulf %311, %312 : vector<16x32xf32>
    %314 = vector.broadcast %21 : vector<1x32xf32> to vector<16x32xf32>
    %315 = arith.addf %313, %314 : vector<16x32xf32>
    %316 = arith.truncf %315 : vector<16x32xf32> to vector<16x32xbf16>
    %cst_150 = arith.constant dense<0.000000e+00> : vector<16x64xf32>
    %317 = tpu.matmul %316, %22, %cst_150 {dimension_numbers = #tpu.dot_dimension_numbers<[1], [0], [0], [1], [0, 0, 1, 1], [], []>} : vector<16x32xbf16>, vector<32x64xbf16>, vector<16x64xf32> -> vector<16x64xf32>
    %318 = vector.broadcast %23 : vector<1x64xf32> to vector<16x64xf32>
    %319 = arith.addf %317, %318 : vector<16x64xf32>
    %320 = arith.mulf %319, %319 : vector<16x64xf32>
    %321 = arith.mulf %319, %320 : vector<16x64xf32>
    %cst_151 = arith.constant 4.471500e-02 : f32
    %322 = vector.broadcast %cst_151 : f32 to vector<16x64xf32>
    %323 = arith.mulf %322, %321 : vector<16x64xf32>
    %324 = arith.addf %319, %323 : vector<16x64xf32>
    %cst_152 = arith.constant 0.797884583 : f32
    %325 = vector.broadcast %cst_152 : f32 to vector<16x64xf32>
    %326 = arith.mulf %325, %324 : vector<16x64xf32>
    %327 = math.tanh %326 : vector<16x64xf32>
    %cst_153 = arith.constant 1.000000e+00 : f32
    %328 = vector.broadcast %cst_153 : f32 to vector<16x64xf32>
    %329 = arith.addf %328, %327 : vector<16x64xf32>
    %cst_154 = arith.constant 5.000000e-01 : f32
    %330 = vector.broadcast %cst_154 : f32 to vector<16x64xf32>
    %331 = arith.mulf %330, %329 : vector<16x64xf32>
    %332 = arith.mulf %319, %331 : vector<16x64xf32>
    %333 = arith.truncf %332 : vector<16x64xf32> to vector<16x64xbf16>
    %cst_155 = arith.constant dense<0.000000e+00> : vector<16x32xf32>
    %334 = tpu.matmul %333, %24, %cst_155 {dimension_numbers = #tpu.dot_dimension_numbers<[1], [0], [0], [1], [0, 0, 1, 1], [], []>} : vector<16x64xbf16>, vector<64x32xbf16>, vector<16x32xf32> -> vector<16x32xf32>
    %335 = vector.broadcast %25 : vector<1x32xf32> to vector<16x32xf32>
    %336 = arith.addf %334, %335 : vector<16x32xf32>
    %337 = arith.addf %336, %315 : vector<16x32xf32>
    %cst_156 = arith.constant dense<0.000000e+00> : vector<16xf32>
    %338 = vector.multi_reduction <add>, %337, %cst_156 [1] : vector<16x32xf32> to vector<16xf32>
    %339 = vector.shape_cast %338 : vector<16xf32> to vector<16x1xf32>
    %cst_157 = arith.constant 3.200000e+01 : f32
    %340 = vector.broadcast %cst_157 : f32 to vector<16x1xf32>
    %341 = arith.divf %339, %340 : vector<16x1xf32>
    %342 = vector.broadcast %341 : vector<16x1xf32> to vector<16x32xf32>
    %343 = arith.subf %337, %342 : vector<16x32xf32>
    %344 = arith.mulf %343, %343 : vector<16x32xf32>
    %cst_158 = arith.constant dense<0.000000e+00> : vector<16xf32>
    %345 = vector.multi_reduction <add>, %344, %cst_158 [1] : vector<16x32xf32> to vector<16xf32>
    %346 = vector.shape_cast %345 : vector<16xf32> to vector<16x1xf32>
    %cst_159 = arith.constant 3.200000e+01 : f32
    %347 = vector.broadcast %cst_159 : f32 to vector<16x1xf32>
    %348 = arith.divf %346, %347 : vector<16x1xf32>
    %349 = vector.broadcast %341 : vector<16x1xf32> to vector<16x32xf32>
    %350 = arith.subf %337, %349 : vector<16x32xf32>
    %cst_160 = arith.constant 9.99999996E-13 : f32
    %351 = vector.broadcast %cst_160 : f32 to vector<16x1xf32>
    %352 = arith.addf %348, %351 : vector<16x1xf32>
    %353 = math.rsqrt %352 : vector<16x1xf32>
    %354 = vector.broadcast %353 : vector<16x1xf32> to vector<16x32xf32>
    %355 = arith.mulf %350, %354 : vector<16x32xf32>
    %356 = vector.broadcast %26 : vector<1x32xf32> to vector<16x32xf32>
    %357 = arith.mulf %355, %356 : vector<16x32xf32>
    %358 = vector.broadcast %27 : vector<1x32xf32> to vector<16x32xf32>
    %359 = arith.addf %357, %358 : vector<16x32xf32>
    %360 = vector.shape_cast %359 : vector<16x32xf32> to vector<2x8x32xf32>
    %c0_161 = arith.constant 0 : index
    %c0_162 = arith.constant 0 : index
    %c0_163 = arith.constant 0 : index
    %361 = vector.load %arg31[%c0_161, %c0_162, %c0_163] : memref<2x8x32xf32, #tpu.memory_space<vmem>>, vector<2x8x32xf32>
    tpu.vector_store %arg31[%c0_161, %c0_162, %c0_163], %360 {strides = array<i32>} : memref<2x8x32xf32, #tpu.memory_space<vmem>>, vector<2x8x32xf32>,
    return
  }
  func.func @transform_0(%arg0: i32) -> (i32, i32, i32) {
    %c0_i32 = arith.constant 0 : i32
    %c0_i32_0 = arith.constant 0 : i32
    %c0_i32_1 = arith.constant 0 : i32
    %c0_i32_2 = arith.constant 0 : i32
    return %c0_i32, %c0_i32_0, %c0_i32_1 : i32, i32, i32
  }
  func.func @transform_1(%arg0: i32) -> (i32, i32, i32) {
    %c0_i32 = arith.constant 0 : i32
    %c0_i32_0 = arith.constant 0 : i32
    %c0_i32_1 = arith.constant 0 : i32
    %c0_i32_2 = arith.constant 0 : i32
    return %c0_i32, %c0_i32_0, %c0_i32_1 : i32, i32, i32
  }
  func.func @transform_2(%arg0: i32) -> (i32, i32) {
    %c0_i32 = arith.constant 0 : i32
    %c0_i32_0 = arith.constant 0 : i32
    %c0_i32_1 = arith.constant 0 : i32
    return %c0_i32, %c0_i32_0 : i32, i32
  }
  func.func @transform_3(%arg0: i32) -> (i32, i32) {
    %c0_i32 = arith.constant 0 : i32
    %c0_i32_0 = arith.constant 0 : i32
    %c0_i32_1 = arith.constant 0 : i32
    return %c0_i32, %c0_i32_0 : i32, i32
  }
  func.func @transform_4(%arg0: i32) -> (i32, i32) {
    %c0_i32 = arith.constant 0 : i32
    %c0_i32_0 = arith.constant 0 : i32
    %c0_i32_1 = arith.constant 0 : i32
    return %c0_i32, %c0_i32_0 : i32, i32
  }
  func.func @transform_5(%arg0: i32) -> (i32, i32) {
    %c0_i32 = arith.constant 0 : i32
    %c0_i32_0 = arith.constant 0 : i32
    %c0_i32_1 = arith.constant 0 : i32
    return %c0_i32, %c0_i32_0 : i32, i32
  }
  func.func @transform_6(%arg0: i32) -> (i32, i32) {
    %c0_i32 = arith.constant 0 : i32
    %c0_i32_0 = arith.constant 0 : i32
    %c0_i32_1 = arith.constant 0 : i32
    return %c0_i32, %c0_i32_0 : i32, i32
  }
  func.func @transform_7(%arg0: i32) -> (i32, i32) {
    %c0_i32 = arith.constant 0 : i32
    %c0_i32_0 = arith.constant 0 : i32
    %c0_i32_1 = arith.constant 0 : i32
    return %c0_i32, %c0_i32_0 : i32, i32
  }
  func.func @transform_8(%arg0: i32) -> (i32, i32) {
    %c0_i32 = arith.constant 0 : i32
    %c0_i32_0 = arith.constant 0 : i32
    %c0_i32_1 = arith.constant 0 : i32
    return %c0_i32, %c0_i32_0 : i32, i32
  }
  func.func @transform_9(%arg0: i32) -> (i32, i32) {
    %c0_i32 = arith.constant 0 : i32
    %c0_i32_0 = arith.constant 0 : i32
    %c0_i32_1 = arith.constant 0 : i32
    return %c0_i32, %c0_i32_0 : i32, i32
  }
  func.func @transform_10(%arg0: i32) -> (i32, i32) {
    %c0_i32 = arith.constant 0 : i32
    %c0_i32_0 = arith.constant 0 : i32
    %c0_i32_1 = arith.constant 0 : i32
    return %c0_i32, %c0_i32_0 : i32, i32
  }
  func.func @transform_11(%arg0: i32) -> (i32, i32) {
    %c0_i32 = arith.constant 0 : i32
    %c0_i32_0 = arith.constant 0 : i32
    %c0_i32_1 = arith.constant 0 : i32
    return %c0_i32, %c0_i32_0 : i32, i32
  }
  func.func @transform_12(%arg0: i32) -> (i32, i32) {
    %c0_i32 = arith.constant 0 : i32
    %c0_i32_0 = arith.constant 0 : i32
    %c0_i32_1 = arith.constant 0 : i32
    return %c0_i32, %c0_i32_0 : i32, i32
  }
  func.func @transform_13(%arg0: i32) -> (i32, i32) {
    %c0_i32 = arith.constant 0 : i32
    %c0_i32_0 = arith.constant 0 : i32
    %c0_i32_1 = arith.constant 0 : i32
    return %c0_i32, %c0_i32_0 : i32, i32
  }
  func.func @transform_14(%arg0: i32) -> (i32, i32) {
    %c0_i32 = arith.constant 0 : i32
    %c0_i32_0 = arith.constant 0 : i32
    %c0_i32_1 = arith.constant 0 : i32
    return %c0_i32, %c0_i32_0 : i32, i32
  }
  func.func @transform_15(%arg0: i32) -> (i32, i32) {
    %c0_i32 = arith.constant 0 : i32
    %c0_i32_0 = arith.constant 0 : i32
    %c0_i32_1 = arith.constant 0 : i32
    return %c0_i32, %c0_i32_0 : i32, i32
  }
  func.func @transform_16(%arg0: i32) -> (i32, i32) {
    %c0_i32 = arith.constant 0 : i32
    %c0_i32_0 = arith.constant 0 : i32
    %c0_i32_1 = arith.constant 0 : i32
    return %c0_i32, %c0_i32_0 : i32, i32
  }
  func.func @transform_17(%arg0: i32) -> (i32, i32) {
    %c0_i32 = arith.constant 0 : i32
    %c0_i32_0 = arith.constant 0 : i32
    %c0_i32_1 = arith.constant 0 : i32
    return %c0_i32, %c0_i32_0 : i32, i32
  }
  func.func @transform_18(%arg0: i32) -> (i32, i32) {
    %c0_i32 = arith.constant 0 : i32
    %c0_i32_0 = arith.constant 0 : i32
    %c0_i32_1 = arith.constant 0 : i32
    return %c0_i32, %c0_i32_0 : i32, i32
  }
  func.func @transform_19(%arg0: i32) -> (i32, i32) {
    %c0_i32 = arith.constant 0 : i32
    %c0_i32_0 = arith.constant 0 : i32
    %c0_i32_1 = arith.constant 0 : i32
    return %c0_i32, %c0_i32_0 : i32, i32
  }
  func.func @transform_20(%arg0: i32) -> (i32, i32) {
    %c0_i32 = arith.constant 0 : i32
    %c0_i32_0 = arith.constant 0 : i32
    %c0_i32_1 = arith.constant 0 : i32
    return %c0_i32, %c0_i32_0 : i32, i32
  }
  func.func @transform_21(%arg0: i32) -> (i32, i32) {
    %c0_i32 = arith.constant 0 : i32
    %c0_i32_0 = arith.constant 0 : i32
    %c0_i32_1 = arith.constant 0 : i32
    return %c0_i32, %c0_i32_0 : i32, i32
  }
  func.func @transform_22(%arg0: i32) -> (i32, i32) {
    %c0_i32 = arith.constant 0 : i32
    %c0_i32_0 = arith.constant 0 : i32
    %c0_i32_1 = arith.constant 0 : i32
    return %c0_i32, %c0_i32_0 : i32, i32
  }
  func.func @transform_23(%arg0: i32) -> (i32, i32) {
    %c0_i32 = arith.constant 0 : i32
    %c0_i32_0 = arith.constant 0 : i32
    %c0_i32_1 = arith.constant 0 : i32
    return %c0_i32, %c0_i32_0 : i32, i32
  }
  func.func @transform_24(%arg0: i32) -> (i32, i32) {
    %c0_i32 = arith.constant 0 : i32
    %c0_i32_0 = arith.constant 0 : i32
    %c0_i32_1 = arith.constant 0 : i32
    return %c0_i32, %c0_i32_0 : i32, i32
  }
  func.func @transform_25(%arg0: i32) -> (i32, i32) {
    %c0_i32 = arith.constant 0 : i32
    %c0_i32_0 = arith.constant 0 : i32
    %c0_i32_1 = arith.constant 0 : i32
    return %c0_i32, %c0_i32_0 : i32, i32
  }
  func.func @transform_26(%arg0: i32) -> (i32, i32) {
    %c0_i32 = arith.constant 0 : i32
    %c0_i32_0 = arith.constant 0 : i32
    %c0_i32_1 = arith.constant 0 : i32
    return %c0_i32, %c0_i32_0 : i32, i32
  }
  func.func @transform_27(%arg0: i32) -> (i32, i32) {
    %c0_i32 = arith.constant 0 : i32
    %c0_i32_0 = arith.constant 0 : i32
    %c0_i32_1 = arith.constant 0 : i32
    return %c0_i32, %c0_i32_0 : i32, i32
  }
  func.func @transform_28(%arg0: i32) -> (i32, i32) {
    %c0_i32 = arith.constant 0 : i32
    %c0_i32_0 = arith.constant 0 : i32
    %c0_i32_1 = arith.constant 0 : i32
    return %c0_i32, %c0_i32_0 : i32, i32
  }
  func.func @transform_29(%arg0: i32) -> (i32, i32) {
    %c0_i32 = arith.constant 0 : i32
    %c0_i32_0 = arith.constant 0 : i32
    %c0_i32_1 = arith.constant 0 : i32
    return %c0_i32, %c0_i32_0 : i32, i32
  }
  func.func @transform_30(%arg0: i32) -> (i32, i32, i32) {
    %c0_i32 = arith.constant 0 : i32
    %c0_i32_0 = arith.constant 0 : i32
    %c0_i32_1 = arith.constant 0 : i32
    %c0_i32_2 = arith.constant 0 : i32
    return %c0_i32, %c0_i32_0, %c0_i32_1 : i32, i32, i32
  }
}

</mosaic_0001>

<llo_original>
// kernel: tpu_custom_call.1
$region0: #{tpu_custom_call.1}
  #allocation0 [shape = 'u32[]', space=smem, size = 0x4, offset = 0x4, fixed_abs, tag = 'smem constant byte address 0x4 - core index']
  #allocation1 [shape = 'u32[144,128]{1,0:T(1,128)}', space=vmem, size = 0x12000, scoped, tag = 'internal scratch']
  #allocation2 [shape = 'f32[2,8,32]{2,1,0:T(8,128)}', space=vmem, size = 0x2000, scoped, tag = 'scratch operand']
  %s0 = inlined_call_operand.smem [shape: u32[31], index: -1, kind: input, shape index: {}]
  %s1 = sld [smem:[%s0]]
  %s2 = scalar_lea.smem %s0, 1
  %s3 = sld [smem:[%s2]]
  %s4 = scalar_lea.smem %s0, 2
  %s5 = sld [smem:[%s4]]
  %s6 = scalar_lea.smem %s0, 3
  %s7 = sld [smem:[%s6]]
  %s8 = scalar_lea.smem %s0, 4
  %s9 = sld [smem:[%s8]]
  %s10 = scalar_lea.smem %s0, 5
  %s11 = sld [smem:[%s10]]
  %s12 = scalar_lea.smem %s0, 6
  %s13 = sld [smem:[%s12]]
  %s14 = scalar_lea.smem %s0, 7
  %s15 = sld [smem:[%s14]]
  %s16 = scalar_lea.smem %s0, 8
  %s17 = sld [smem:[%s16]]
  %s18 = scalar_lea.smem %s0, 9
  %s19 = sld [smem:[%s18]]
  %s20 = scalar_lea.smem %s0, 10
  %s21 = sld [smem:[%s20]]
  %s22 = scalar_lea.smem %s0, 11
  %s23 = sld [smem:[%s22]]
  %s24 = scalar_lea.smem %s0, 12
  %s25 = sld [smem:[%s24]]
  %s26 = scalar_lea.smem %s0, 13
  %s27 = sld [smem:[%s26]]
  %s28 = scalar_lea.smem %s0, 14
  %s29 = sld [smem:[%s28]]
  %s30 = scalar_lea.smem %s0, 15
  %s31 = sld [smem:[%s30]]
  %s32 = scalar_lea.smem %s0, 16
  %s33 = sld [smem:[%s32]]
  %s34 = scalar_lea.smem %s0, 17
  %s35 = sld [smem:[%s34]]
  %s36 = scalar_lea.smem %s0, 18
  %s37 = sld [smem:[%s36]]
  %s38 = scalar_lea.smem %s0, 19
  %s39 = sld [smem:[%s38]]
  %s40 = scalar_lea.smem %s0, 20
  %s41 = sld [smem:[%s40]]
  %s42 = scalar_lea.smem %s0, 21
  %s43 = sld [smem:[%s42]]
  %s44 = scalar_lea.smem %s0, 22
  %s45 = sld [smem:[%s44]]
  %s46 = scalar_lea.smem %s0, 23
  %s47 = sld [smem:[%s46]]
  %s48 = scalar_lea.smem %s0, 24
  %s49 = sld [smem:[%s48]]
  %s50 = scalar_lea.smem %s0, 25
  %s51 = sld [smem:[%s50]]
  %s52 = scalar_lea.smem %s0, 26
  %s53 = sld [smem:[%s52]]
  %s54 = scalar_lea.smem %s0, 27
  %s55 = sld [smem:[%s54]]
  %s56 = scalar_lea.smem %s0, 28
  %s57 = sld [smem:[%s56]]
  %s58 = scalar_lea.smem %s0, 29
  %s59 = sld [smem:[%s58]]
  %s60 = scalar_lea.smem %s0, 30
  %s61 = sld [smem:[%s60]]
  %s62 = sld [smem:[#allocation0]]
  $region170: #{tpu_custom_call.1} parent=0
    _
  %s64 = ssub.s32 1, %s62
  %s65 = scalar_select 0, %s64, %s62
  $region1: #{tpu_custom_call.1} parent=0
    #allocation3 [shape = 'u8[512]{0}', space=vmem, size = 0x400, scoped, tag = 'input window, operand 2, single buffered']
    #allocation4 [shape = 's32[1]{0}', space=sflag, size = 0x4, scoped, tag = 'scoped memory for tpu_custom_call.1']
    #allocation5 [shape = 's32[1]{0}', space=sflag, size = 0x4, scoped, tag = 'scoped memory for tpu_custom_call.1']
    #allocation6 [shape = 'u8[512]{0}', space=vmem, size = 0x400, scoped, tag = 'input window, operand 3, single buffered']
    #allocation7 [shape = 's32[1]{0}', space=sflag, size = 0x4, scoped, tag = 'scoped memory for tpu_custom_call.1']
    #allocation8 [shape = 'u8[512]{0}', space=vmem, size = 0x400, scoped, tag = 'input window, operand 5, single buffered']
    #allocation9 [shape = 'u8[512]{0}', space=vmem, size = 0x400, scoped, tag = 'input window, operand 7, single buffered']
    #allocation10 [shape = 's32[1]{0}', space=sflag, size = 0x4, scoped, tag = 'scoped memory for tpu_custom_call.1']
    #allocation11 [shape = 'u8[512]{0}', space=vmem, size = 0x400, scoped, tag = 'input window, operand 9, single buffered']
    #allocation12 [shape = 'u8[512]{0}', space=vmem, size = 0x400, scoped, tag = 'input window, operand 11, single buffered']
    #allocation13 [shape = 's32[1]{0}', space=sflag, size = 0x4, scoped, tag = 'scoped memory for tpu_custom_call.1']
    #allocation14 [shape = 'u8[512]{0}', space=vmem, size = 0x400, scoped, tag = 'input window, operand 12, single buffered']
    #allocation15 [shape = 'u8[512]{0}', space=vmem, size = 0x400, scoped, tag = 'input window, operand 13, single buffered']
    #allocation16 [shape = 's32[1]{0}', space=sflag, size = 0x4, scoped, tag = 'scoped memory for tpu_custom_call.1']
    #allocation17 [shape = 'u8[512]{0}', space=vmem, size = 0x400, scoped, tag = 'input window, operand 15, single buffered']
    #allocation18 [shape = 'u8[512]{0}', space=vmem, size = 0x400, scoped, tag = 'input window, operand 17, single buffered']
    #allocation19 [shape = 's32[1]{0}', space=sflag, size = 0x4, scoped, tag = 'scoped memory for tpu_custom_call.1']
    #allocation20 [shape = 'u8[8192]{0}', space=vmem, size = 0x2000, scoped, tag = 'output window, operand 0, single buffered']
    %66 = vsyncpa [#allocation4], 0
    %67 = vsyncpa [#allocation7], 0
    %68 = vsyncpa [#allocation10], 0
    %69 = vsyncpa [#allocation13], 0
    %70 = vsyncpa [#allocation16], 0
    %71 = vsyncpa [#allocation19], 0
    %72 = vsyncpa [#allocation5], 0
    // Predicated region
    $region2: #{tpu_custom_call.1} parent=1 // pred_check
      _
    $region3: #{tpu_custom_call.1} parent=1 // pred_check_branch
      %74 = sbr.rel (0) target = $region5
    $region4: #{tpu_custom_call.1} parent=1 // pred_region
      _
    $region5: #{tpu_custom_call.1} parent=1 // pred_fallthru
      _
    // Predicated region
    $region6: #{tpu_custom_call.1} parent=1 // pred_check
      _
    $region7: #{tpu_custom_call.1} parent=1 // pred_check_branch
      %76 = sbr.rel (0) target = $region9
    $region8: #{tpu_custom_call.1} parent=1 // pred_region
      _
    $region9: #{tpu_custom_call.1} parent=1 // pred_fallthru
      _
    // Predicated region
    $region10: #{tpu_custom_call.1} parent=1 // pred_check
      _
    $region11: #{tpu_custom_call.1} parent=1 // pred_check_branch
      %78 = sbr.rel (0) target = $region13
    $region12: #{tpu_custom_call.1} parent=1 // pred_region
      %s80 = ssub.s32 16, 16
      %81 = vsyncadd [#allocation4], %s80
      %s83 = sshll.u32 [#allocation3], 4
      %s84 = int_to_ptr.vmem [resolvable:$true] %s83
      %86 = dma.hbm_to_vmem [thread:$0]  %s5, 16, %s84, [#allocation4]
    $region13: #{tpu_custom_call.1} parent=1 // pred_fallthru
      _
    // Predicated region
    $region14: #{tpu_custom_call.1} parent=1 // pred_check
      _
    $region15: #{tpu_custom_call.1} parent=1 // pred_check_branch
      %88 = sbr.rel (0) target = $region17
    $region16: #{tpu_custom_call.1} parent=1 // pred_region
      %s90 = ssub.s32 16, 16
      %91 = vsyncadd [#allocation7], %s90
      %s93 = sshll.u32 [#allocation6], 4
      %s94 = int_to_ptr.vmem [resolvable:$true] %s93
      %96 = dma.hbm_to_vmem [thread:$0]  %s7, 16, %s94, [#allocation7]
    $region17: #{tpu_custom_call.1} parent=1 // pred_fallthru
      _
    // Predicated region
    $region18: #{tpu_custom_call.1} parent=1 // pred_check
      _
    $region19: #{tpu_custom_call.1} parent=1 // pred_check_branch
      %98 = sbr.rel (0) target = $region21
    $region20: #{tpu_custom_call.1} parent=1 // pred_region
      _
    $region21: #{tpu_custom_call.1} parent=1 // pred_fallthru
      _
    // Predicated region
    $region22: #{tpu_custom_call.1} parent=1 // pred_check
      _
    $region23: #{tpu_custom_call.1} parent=1 // pred_check_branch
      %100 = sbr.rel (0) target = $region25
    $region24: #{tpu_custom_call.1} parent=1 // pred_region
      %s102 = ssub.s32 16, 16
      %103 = vsyncadd [#allocation7], %s102
      %s105 = sshll.u32 [#allocation8], 4
      %s106 = int_to_ptr.vmem [resolvable:$true] %s105
      %108 = dma.hbm_to_vmem [thread:$0]  %s11, 16, %s106, [#allocation7]
    $region25: #{tpu_custom_call.1} parent=1 // pred_fallthru
      _
    // Predicated region
    $region26: #{tpu_custom_call.1} parent=1 // pred_check
      _
    $region27: #{tpu_custom_call.1} parent=1 // pred_check_branch
      %110 = sbr.rel (0) target = $region29
    $region28: #{tpu_custom_call.1} parent=1 // pred_region
      _
    $region29: #{tpu_custom_call.1} parent=1 // pred_fallthru
      _
    // Predicated region
    $region30: #{tpu_custom_call.1} parent=1 // pred_check
      _
    $region31: #{tpu_custom_call.1} parent=1 // pred_check_branch
      %112 = sbr.rel (0) target = $region33
    $region32: #{tpu_custom_call.1} parent=1 // pred_region
      %s114 = ssub.s32 16, 16
      %115 = vsyncadd [#allocation10], %s114
      %s117 = sshll.u32 [#allocation9], 4
      %s118 = int_to_ptr.vmem [resolvable:$true] %s117
      %120 = dma.hbm_to_vmem [thread:$0]  %s15, 16, %s118, [#allocation10]
    $region33: #{tpu_custom_call.1} parent=1 // pred_fallthru
      _
    // Predicated region
    $region34: #{tpu_custom_call.1} parent=1 // pred_check
      _
    $region35: #{tpu_custom_call.1} parent=1 // pred_check_branch
      %122 = sbr.rel (0) target = $region37
    $region36: #{tpu_custom_call.1} parent=1 // pred_region
      _
    $region37: #{tpu_custom_call.1} parent=1 // pred_fallthru
      _
    // Predicated region
    $region38: #{tpu_custom_call.1} parent=1 // pred_check
      _
    $region39: #{tpu_custom_call.1} parent=1 // pred_check_branch
      %124 = sbr.rel (0) target = $region41
    $region40: #{tpu_custom_call.1} parent=1 // pred_region
      %s126 = ssub.s32 16, 16
      %127 = vsyncadd [#allocation10], %s126
      %s129 = sshll.u32 [#allocation11], 4
      %s130 = int_to_ptr.vmem [resolvable:$true] %s129
      %132 = dma.hbm_to_vmem [thread:$0]  %s19, 16, %s130, [#allocation10]
    $region41: #{tpu_custom_call.1} parent=1 // pred_fallthru
      _
    // Predicated region
    $region42: #{tpu_custom_call.1} parent=1 // pred_check
      _
    $region43: #{tpu_custom_call.1} parent=1 // pred_check_branch
      %134 = sbr.rel (0) target = $region45
    $region44: #{tpu_custom_call.1} parent=1 // pred_region
      _
    $region45: #{tpu_custom_call.1} parent=1 // pred_fallthru
      _
    // Predicated region
    $region46: #{tpu_custom_call.1} parent=1 // pred_check
      _
    $region47: #{tpu_custom_call.1} parent=1 // pred_check_branch
      %136 = sbr.rel (0) target = $region49
    $region48: #{tpu_custom_call.1} parent=1 // pred_region
      %s138 = ssub.s32 16, 16
      %139 = vsyncadd [#allocation13], %s138
      %s141 = sshll.u32 [#allocation12], 4
      %s142 = int_to_ptr.vmem [resolvable:$true] %s141
      %144 = dma.hbm_to_vmem [thread:$0]  %s23, 16, %s142, [#allocation13]
    $region49: #{tpu_custom_call.1} parent=1 // pred_fallthru
      _
    // Predicated region
    $region50: #{tpu_custom_call.1} parent=1 // pred_check
      _
    $region51: #{tpu_custom_call.1} parent=1 // pred_check_branch
      %146 = sbr.rel (0) target = $region53
    $region52: #{tpu_custom_call.1} parent=1 // pred_region
      %s148 = ssub.s32 16, 16
      %149 = vsyncadd [#allocation13], %s148
      %s151 = sshll.u32 [#allocation14], 4
      %s152 = int_to_ptr.vmem [resolvable:$true] %s151
      %154 = dma.hbm_to_vmem [thread:$0]  %s25, 16, %s152, [#allocation13]
    $region53: #{tpu_custom_call.1} parent=1 // pred_fallthru
      _
    // Predicated region
    $region54: #{tpu_custom_call.1} parent=1 // pred_check
      _
    $region55: #{tpu_custom_call.1} parent=1 // pred_check_branch
      %156 = sbr.rel (0) target = $region57
    $region56: #{tpu_custom_call.1} parent=1 // pred_region
      %s158 = ssub.s32 16, 16
      %159 = vsyncadd [#allocation16], %s158
      %s161 = sshll.u32 [#allocation15], 4
      %s162 = int_to_ptr.vmem [resolvable:$true] %s161
      %164 = dma.hbm_to_vmem [thread:$0]  %s27, 16, %s162, [#allocation16]
    $region57: #{tpu_custom_call.1} parent=1 // pred_fallthru
      _
    // Predicated region
    $region58: #{tpu_custom_call.1} parent=1 // pred_check
      _
    $region59: #{tpu_custom_call.1} parent=1 // pred_check_branch
      %166 = sbr.rel (0) target = $region61
    $region60: #{tpu_custom_call.1} parent=1 // pred_region
      _
    $region61: #{tpu_custom_call.1} parent=1 // pred_fallthru
      _
    // Predicated region
    $region62: #{tpu_custom_call.1} parent=1 // pred_check
      _
    $region63: #{tpu_custom_call.1} parent=1 // pred_check_branch
      %168 = sbr.rel (0) target = $region65
    $region64: #{tpu_custom_call.1} parent=1 // pred_region
      %s170 = ssub.s32 16, 16
      %171 = vsyncadd [#allocation16], %s170
      %s173 = sshll.u32 [#allocation17], 4
      %s174 = int_to_ptr.vmem [resolvable:$true] %s173
      %176 = dma.hbm_to_vmem [thread:$0]  %s31, 16, %s174, [#allocation16]
    $region65: #{tpu_custom_call.1} parent=1 // pred_fallthru
      _
    // Predicated region
    $region66: #{tpu_custom_call.1} parent=1 // pred_check
      _
    $region67: #{tpu_custom_call.1} parent=1 // pred_check_branch
      %178 = sbr.rel (0) target = $region69
    $region68: #{tpu_custom_call.1} parent=1 // pred_region
      _
    $region69: #{tpu_custom_call.1} parent=1 // pred_fallthru
      _
    // Predicated region
    $region70: #{tpu_custom_call.1} parent=1 // pred_check
      _
    $region71: #{tpu_custom_call.1} parent=1 // pred_check_branch
      %180 = sbr.rel (0) target = $region73
    $region72: #{tpu_custom_call.1} parent=1 // pred_region
      %s182 = ssub.s32 16, 16
      %183 = vsyncadd [#allocation19], %s182
      %s185 = sshll.u32 [#allocation18], 4
      %s186 = int_to_ptr.vmem [resolvable:$true] %s185
      %188 = dma.hbm_to_vmem [thread:$0]  %s35, 16, %s186, [#allocation19]
    $region73: #{tpu_custom_call.1} parent=1 // pred_fallthru
      _
    // Predicated region
    $region74: #{tpu_custom_call.1} parent=1 // pred_check
      _
    $region75: #{tpu_custom_call.1} parent=1 // pred_check_branch
      %190 = sbr.rel (0) target = $region77
    $region76: #{tpu_custom_call.1} parent=1 // pred_region
      _
    $region77: #{tpu_custom_call.1} parent=1 // pred_fallthru
      _
    // Predicated region
    $region78: #{tpu_custom_call.1} parent=1 // pred_check
      _
    $region79: #{tpu_custom_call.1} parent=1 // pred_check_branch
      %192 = sbr.rel (0) target = $region81
    $region80: #{tpu_custom_call.1} parent=1 // pred_region
      _
    $region81: #{tpu_custom_call.1} parent=1 // pred_fallthru
      _
    // Predicated region
    $region82: #{tpu_custom_call.1} parent=1 // pred_check
      _
    $region83: #{tpu_custom_call.1} parent=1 // pred_check_branch
      %194 = sbr.rel (0) target = $region85
    $region84: #{tpu_custom_call.1} parent=1 // pred_region
      _
    $region85: #{tpu_custom_call.1} parent=1 // pred_fallthru
      _
    // Predicated region
    $region86: #{tpu_custom_call.1} parent=1 // pred_check
      _
    $region87: #{tpu_custom_call.1} parent=1 // pred_check_branch
      %196 = sbr.rel (0) target = $region89
    $region88: #{tpu_custom_call.1} parent=1 // pred_region
      _
    $region89: #{tpu_custom_call.1} parent=1 // pred_fallthru
      _
    // Predicated region
    $region90: #{tpu_custom_call.1} parent=1 // pred_check
      _
    $region91: #{tpu_custom_call.1} parent=1 // pred_check_branch
      %198 = sbr.rel (0) target = $region93
    $region92: #{tpu_custom_call.1} parent=1 // pred_region
      _
    $region93: #{tpu_custom_call.1} parent=1 // pred_fallthru
      _
    // Predicated region
    $region94: #{tpu_custom_call.1} parent=1 // pred_check
      _
    $region95: #{tpu_custom_call.1} parent=1 // pred_check_branch
      %200 = sbr.rel (0) target = $region97
    $region96: #{tpu_custom_call.1} parent=1 // pred_region
      _
    $region97: #{tpu_custom_call.1} parent=1 // pred_fallthru
      _
    // Predicated region
    $region98: #{tpu_custom_call.1} parent=1 // pred_check
      _
    $region99: #{tpu_custom_call.1} parent=1 // pred_check_branch
      %202 = sbr.rel (0) target = $region101
    $region100: #{tpu_custom_call.1} parent=1 // pred_region
      _
    $region101: #{tpu_custom_call.1} parent=1 // pred_fallthru
      _
    // Predicated region
    $region102: #{tpu_custom_call.1} parent=1 // pred_check
      _
    $region103: #{tpu_custom_call.1} parent=1 // pred_check_branch
      %204 = sbr.rel (0) target = $region105
    $region104: #{tpu_custom_call.1} parent=1 // pred_region
      _
    $region105: #{tpu_custom_call.1} parent=1 // pred_fallthru
      _
    // Predicated region
    $region106: #{tpu_custom_call.1} parent=1 // pred_check
      _
    $region107: #{tpu_custom_call.1} parent=1 // pred_check_branch
      %206 = sbr.rel (0) target = $region109
    $region108: #{tpu_custom_call.1} parent=1 // pred_region
      _
    $region109: #{tpu_custom_call.1} parent=1 // pred_fallthru
      _
    // Predicated region
    $region110: #{tpu_custom_call.1} parent=1 // pred_check
      _
    $region111: #{tpu_custom_call.1} parent=1 // pred_check_branch
      %208 = sbr.rel (0) target = $region113
    $region112: #{tpu_custom_call.1} parent=1 // pred_region
      _
    $region113: #{tpu_custom_call.1} parent=1 // pred_fallthru
      _
    // Predicated region
    $region114: #{tpu_custom_call.1} parent=1 // pred_check
      _
    $region115: #{tpu_custom_call.1} parent=1 // pred_check_branch
      %210 = sbr.rel (0) target = $region117
    $region116: #{tpu_custom_call.1} parent=1 // pred_region
      _
    $region117: #{tpu_custom_call.1} parent=1 // pred_fallthru
      _
    // Predicated region
    $region118: #{tpu_custom_call.1} parent=1 // pred_check
      _
    $region119: #{tpu_custom_call.1} parent=1 // pred_check_branch
      %212 = sbr.rel (0) target = $region121
    $region120: #{tpu_custom_call.1} parent=1 // pred_region
      _
    $region121: #{tpu_custom_call.1} parent=1 // pred_fallthru
      _
    // Predicated region
    $region122: #{tpu_custom_call.1} parent=1 // pred_check
      _
    $region123: #{tpu_custom_call.1} parent=1 // pred_check_branch
      %214 = sbr.rel (0) target = $region125
    $region124: #{tpu_custom_call.1} parent=1 // pred_region
      %215 = dma.done [#allocation4], 16
    $region125: #{tpu_custom_call.1} parent=1 // pred_fallthru
      _
    // Predicated region
    $region126: #{tpu_custom_call.1} parent=1 // pred_check
      _
    $region127: #{tpu_custom_call.1} parent=1 // pred_check_branch
      %217 = sbr.rel (0) target = $region129
    $region128: #{tpu_custom_call.1} parent=1 // pred_region
      %218 = dma.done [#allocation7], 16
    $region129: #{tpu_custom_call.1} parent=1 // pred_fallthru
      _
    // Predicated region
    $region130: #{tpu_custom_call.1} parent=1 // pred_check
      _
    $region131: #{tpu_custom_call.1} parent=1 // pred_check_branch
      %220 = sbr.rel (0) target = $region133
    $region132: #{tpu_custom_call.1} parent=1 // pred_region
      %221 = dma.done [#allocation7], 16
    $region133: #{tpu_custom_call.1} parent=1 // pred_fallthru
      _
    // Predicated region
    $region134: #{tpu_custom_call.1} parent=1 // pred_check
      _
    $region135: #{tpu_custom_call.1} parent=1 // pred_check_branch
      %223 = sbr.rel (0) target = $region137
    $region136: #{tpu_custom_call.1} parent=1 // pred_region
      %224 = dma.done [#allocation10], 16
    $region137: #{tpu_custom_call.1} parent=1 // pred_fallthru
      _
    // Predicated region
    $region138: #{tpu_custom_call.1} parent=1 // pred_check
      _
    $region139: #{tpu_custom_call.1} parent=1 // pred_check_branch
      %226 = sbr.rel (0) target = $region141
    $region140: #{tpu_custom_call.1} parent=1 // pred_region
      %227 = dma.done [#allocation10], 16
    $region141: #{tpu_custom_call.1} parent=1 // pred_fallthru
      _
    // Predicated region
    $region142: #{tpu_custom_call.1} parent=1 // pred_check
      _
    $region143: #{tpu_custom_call.1} parent=1 // pred_check_branch
      %229 = sbr.rel (0) target = $region145
    $region144: #{tpu_custom_call.1} parent=1 // pred_region
      %230 = dma.done [#allocation13], 16
    $region145: #{tpu_custom_call.1} parent=1 // pred_fallthru
      _
    // Predicated region
    $region146: #{tpu_custom_call.1} parent=1 // pred_check
      _
    $region147: #{tpu_custom_call.1} parent=1 // pred_check_branch
      %232 = sbr.rel (0) target = $region149
    $region148: #{tpu_custom_call.1} parent=1 // pred_region
      %233 = dma.done [#allocation13], 16
    $region149: #{tpu_custom_call.1} parent=1 // pred_fallthru
      _
    // Predicated region
    $region150: #{tpu_custom_call.1} parent=1 // pred_check
      _
    $region151: #{tpu_custom_call.1} parent=1 // pred_check_branch
      %235 = sbr.rel (0) target = $region153
    $region152: #{tpu_custom_call.1} parent=1 // pred_region
      %236 = dma.done [#allocation16], 16
    $region153: #{tpu_custom_call.1} parent=1 // pred_fallthru
      _
    // Predicated region
    $region154: #{tpu_custom_call.1} parent=1 // pred_check
      _
    $region155: #{tpu_custom_call.1} parent=1 // pred_check_branch
      %238 = sbr.rel (0) target = $region157
    $region156: #{tpu_custom_call.1} parent=1 // pred_region
      %239 = dma.done [#allocation16], 16
    $region157: #{tpu_custom_call.1} parent=1 // pred_fallthru
      _
    // Predicated region
    $region158: #{tpu_custom_call.1} parent=1 // pred_check
      _
    $region159: #{tpu_custom_call.1} parent=1 // pred_check_branch
      %241 = sbr.rel (0) target = $region161
    $region160: #{tpu_custom_call.1} parent=1 // pred_region
      %242 = dma.done [#allocation19], 16
    $region161: #{tpu_custom_call.1} parent=1 // pred_fallthru
      _
    %v244 = vld [vmem:[#allocation3] sm:$0x1]
    %v245 = vld [vmem:[#allocation6] sm:$0x1]
    %v246 = vld [vmem:[%s9] sm:$0xf]
    %v247 = vld [vmem:[%s9 + $0x4] sm:$0xf]
    %v248 = vld [vmem:[%s9 + $0x8] sm:$0xf]
    %v249 = vld [vmem:[%s9 + $0xc] sm:$0xf]
    %v250 = vld [vmem:[#allocation8] sm:$0x1]
    %v251 = vld [vmem:[%s13] sm:$0xf]
    %v252 = vld [vmem:[%s13 + $0x4] sm:$0xf]
    %v253 = vld [vmem:[%s13 + $0x8] sm:$0xf]
    %v254 = vld [vmem:[%s13 + $0xc] sm:$0xf]
    %v255 = vld [vmem:[#allocation9] sm:$0x1]
    %v256 = vld [vmem:[%s17] sm:$0xf]
    %v257 = vld [vmem:[%s17 + $0x4] sm:$0xf]
    %v258 = vld [vmem:[%s17 + $0x8] sm:$0xf]
    %v259 = vld [vmem:[%s17 + $0xc] sm:$0xf]
    %v260 = vld [vmem:[#allocation11] sm:$0x1]
    %v261 = vld [vmem:[%s21] sm:$0xf]
    %v262 = vld [vmem:[%s21 + $0x4] sm:$0xf]
    %v263 = vld [vmem:[%s21 + $0x8] sm:$0xf]
    %v264 = vld [vmem:[%s21 + $0xc] sm:$0xf]
    %v265 = vld [vmem:[#allocation12] sm:$0x1]
    %v266 = vld [vmem:[#allocation14] sm:$0x1]
    %v267 = vld [vmem:[#allocation15] sm:$0x1]
    %v268 = vld [vmem:[%s29] sm:$0xf]
    %v269 = vld [vmem:[%s29 + $0x4] sm:$0xf]
    %v270 = vld [vmem:[%s29 + $0x8] sm:$0xf]
    %v271 = vld [vmem:[%s29 + $0xc] sm:$0xf]
    %v272 = vld [vmem:[#allocation17] sm:$0x1]
    %v273 = vld [vmem:[%s33] sm:$0xf]
    %v274 = vld [vmem:[%s33 + $0x4] sm:$0xf]
    %v275 = vld [vmem:[%s33 + $0x8] sm:$0xf]
    %v276 = vld [vmem:[%s33 + $0xc] sm:$0xf]
    %v277 = vld [vmem:[%s33 + $0x10] sm:$0xf]
    %v278 = vld [vmem:[%s33 + $0x14] sm:$0xf]
    %v279 = vld [vmem:[#allocation18] sm:$0x1]
    %v280 = vld [vmem:[%s37] sm:$0xf]
    %v281 = vld [vmem:[%s37 + $0x4] sm:$0xf]
    %v282 = vld [vmem:[%s37 + $0x8] sm:$0xf]
    %v283 = vld [vmem:[%s37 + $0xc] sm:$0xf]
    %v284 = vld [vmem:[%s37 + $0x10] sm:$0xf]
    %v285 = vld [vmem:[%s37 + $0x14] sm:$0xf]
    %v286 = vld [vmem:[%s39] sm:$0x1]
    %v287 = vld [vmem:[%s41] sm:$0xf]
    %v288 = vld [vmem:[%s41 + $0x4] sm:$0xf]
    %v289 = vld [vmem:[%s41 + $0x8] sm:$0xf]
    %v290 = vld [vmem:[%s41 + $0xc] sm:$0xf]
    %v291 = vld [vmem:[%s43] sm:$0x1]
    %v292 = vld [vmem:[%s45] sm:$0x1]
    %v293 = vld [vmem:[%s47] sm:$0x1]
    %v294 = vld [vmem:[%s49] sm:$0xf]
    %v295 = vld [vmem:[%s49 + $0x4] sm:$0xf]
    %v296 = vld [vmem:[%s49 + $0x8] sm:$0xf]
    %v297 = vld [vmem:[%s49 + $0xc] sm:$0xf]
    %v298 = vld [vmem:[%s51] sm:$0x1]
    %v299 = vld [vmem:[%s53] sm:$0xf]
    %v300 = vld [vmem:[%s53 + $0x4] sm:$0xf]
    %v301 = vld [vmem:[%s53 + $0x8] sm:$0xf]
    %v302 = vld [vmem:[%s53 + $0xc] sm:$0xf]
    %v303 = vld [vmem:[%s53 + $0x10] sm:$0xf]
    %v304 = vld [vmem:[%s53 + $0x14] sm:$0xf]
    %v305 = vld [vmem:[%s53 + $0x18] sm:$0xf]
    %v306 = vld [vmem:[%s53 + $0x1c] sm:$0xf]
    %v307 = vld [vmem:[%s55] sm:$0x1]
    %v308 = vld [vmem:[%s57] sm:$0x1]
    %v309 = vld [vmem:[%s59] sm:$0x1]
    %v310 = vld [vmem:[%s1] sm:$0xff]
    %v311 = vld [vmem:[%s1 + $0x8] sm:$0xff]
    %vm312 = vcmask 261120
    %v313 = vsel %vm312, %v310, 0.0
    %314 = vadd.xlane.f32.xlu0 %v313
    %v315 = vpop.xlane.xlu0 %314
    %v316 = vsel %vm312, %v311, 0.0
    %317 = vadd.xlane.f32.xlu0 %v316
    %v318 = vpop.xlane.xlu0 %317
    %v319 = vrcp.pop 32.0
    %v320 = vmul.f32 %v315, %v319
    %v321 = vmul.f32 %v318, %v319
    %v322 = vsub.f32 %v310, %v320
    %v323 = vsub.f32 %v311, %v321
    %v324 = vmul.f32 %v322, %v322
    %v325 = vmul.f32 %v323, %v323
    %v326 = vsel %vm312, %v324, 0.0
    %327 = vadd.xlane.f32.xlu0 %v326
    %v328 = vpop.xlane.xlu0 %327
    %v329 = vsel %vm312, %v325, 0.0
    %330 = vadd.xlane.f32.xlu0 %v329
    %v331 = vpop.xlane.xlu0 %330
    %v332 = vmul.f32 %v328, %v319
    %v333 = vmul.f32 %v331, %v319
    %v334 = vadd.f32 %v332, 1e-12
    %v335 = vadd.f32 %v333, 1e-12
    %v336 = vrsqrt.pop %v334
    %v337 = vrsqrt.pop %v335
    %v338 = vmul.f32 %v322, %v336
    %v339 = vmul.f32 %v323, %v337
    %v341 = vlaneseq
    %v342 = vshrl.u32 %v341, 7
    %v343 = vsub.s32 0, %v342
    %v344 = vrot.slane %v244, %v343
    %v346 = vmul.f32 %v338, %v344
    %v347 = vmul.f32 %v339, %v344
    %v349 = vlaneseq
    %v350 = vshrl.u32 %v349, 7
    %v351 = vsub.s32 0, %v350
    %v352 = vrot.slane %v245, %v351
    %v354 = vadd.f32 %v346, %v352
    %v355 = vadd.f32 %v347, %v352
    %v356 = vpack.c.bf16 %v355, %v354
    %v358 = vlaneseq
    %v359 = vshrl.u32 %v358, 7
    %v360 = vsub.s32 0, %v359
    %v361 = vrot.slane %v250, %v360
    %v367 = vunpack.c.l.b16 %v246
    %v368 = vunpack.c.l.b16 %v247
    %v369 = vunpack.c.l.b16 %v248
    %v370 = vunpack.c.l.b16 %v249
    %v371 = vpack.c.b16 %v368, %v367
    %v372 = vpack.c.b16 %v370, %v369
    %v376 = vsel %vm312, %v356, 0
    %378 = vmatprep.subr.bf16.mxu0 0
    %379 = vmatpush1.bf16.msra.mxu0 %v371
    %380 = vmatprep.subr.bf16.mxu0 0
    %381 = vmatpush1.bf16.msra.mxu0 %v372
    %382 = vmatprep.subr.bf16.mxu0 0
    %383 = vmatpush1.bf16.msra.mxu0 0
    %384 = vmatprep.subr.bf16.mxu0 0
    %385 = vmatpush1.bf16.msra.mxu0 0
    %386 = vmatprep.subr.bf16.mxu0 0
    %387 = vmatpush1.bf16.msra.mxu0 0
    %388 = vmatprep.subr.bf16.mxu0 0
    %389 = vmatpush1.bf16.msra.mxu0 0
    %390 = vmatprep.subr.bf16.mxu0 0
    %391 = vmatpush1.bf16.msra.mxu0 0
    %392 = vmatprep.subr.bf16.mxu0 0
    %393 = vmatpush1.bf16.msra.mxu0 0
    %394 = vmatprep.subr.bf16.mxu0 0
    %395 = vmatpush1.bf16.msra.mxu0 0
    %396 = vmatprep.subr.bf16.mxu0 0
    %397 = vmatpush1.bf16.msra.mxu0 0
    %398 = vmatprep.subr.bf16.mxu0 0
    %399 = vmatpush1.bf16.msra.mxu0 0
    %400 = vmatprep.subr.bf16.mxu0 0
    %401 = vmatpush1.bf16.msra.mxu0 0
    %402 = vmatprep.subr.bf16.mxu0 0
    %403 = vmatpush1.bf16.msra.mxu0 0
    %404 = vmatprep.subr.bf16.mxu0 0
    %405 = vmatpush1.bf16.msra.mxu0 0
    %406 = vmatprep.subr.bf16.mxu0 0
    %407 = vmatpush1.bf16.msra.mxu0 0
    %408 = vmatprep.subr.bf16.mxu0 0
    %409 = vmatpush1.bf16.msra.mxu0 0
    %410 = vmatprep.mubr.bf16.mxu0 0
    %411 = vmatmul.mubr.bf16.gmra.mrb[0].mxu0 %v376
    %v412 = vpop.f32.mrb[0].mxu0
    %v413 = vadd.f32 %v361, %v412
    %v414 = vpop.f32.mrb[0].mxu0
    %v415 = vpop.f32.mrb[0].mxu0
    %v416 = vadd.f32 %v361, %v415
    %v417 = vpop.f32.mrb[0].mxu0
    %418 = vdwg.mxu0
    %v420 = vlaneseq
    %v421 = vshrl.u32 %v420, 7
    %v422 = vsub.s32 0, %v421
    %v423 = vrot.slane %v255, %v422
    %v429 = vunpack.c.l.b16 %v251
    %v430 = vunpack.c.l.b16 %v252
    %v431 = vunpack.c.l.b16 %v253
    %v432 = vunpack.c.l.b16 %v254
    %v433 = vpack.c.b16 %v430, %v429
    %v434 = vpack.c.b16 %v432, %v431
    %437 = vmatprep.subr.bf16.mxu0 0
    %438 = vmatpush1.bf16.msra.mxu0 %v433
    %439 = vmatprep.subr.bf16.mxu0 0
    %440 = vmatpush1.bf16.msra.mxu0 %v434
    %441 = vmatprep.subr.bf16.mxu0 0
    %442 = vmatpush1.bf16.msra.mxu0 0
    %443 = vmatprep.subr.bf16.mxu0 0
    %444 = vmatpush1.bf16.msra.mxu0 0
    %445 = vmatprep.subr.bf16.mxu0 0
    %446 = vmatpush1.bf16.msra.mxu0 0
    %447 = vmatprep.subr.bf16.mxu0 0
    %448 = vmatpush1.bf16.msra.mxu0 0
    %449 = vmatprep.subr.bf16.mxu0 0
    %450 = vmatpush1.bf16.msra.mxu0 0
    %451 = vmatprep.subr.bf16.mxu0 0
    %452 = vmatpush1.bf16.msra.mxu0 0
    %453 = vmatprep.subr.bf16.mxu0 0
    %454 = vmatpush1.bf16.msra.mxu0 0
    %455 = vmatprep.subr.bf16.mxu0 0
    %456 = vmatpush1.bf16.msra.mxu0 0
    %457 = vmatprep.subr.bf16.mxu0 0
    %458 = vmatpush1.bf16.msra.mxu0 0
    %459 = vmatprep.subr.bf16.mxu0 0
    %460 = vmatpush1.bf16.msra.mxu0 0
    %461 = vmatprep.subr.bf16.mxu0 0
    %462 = vmatpush1.bf16.msra.mxu0 0
    %463 = vmatprep.subr.bf16.mxu0 0
    %464 = vmatpush1.bf16.msra.mxu0 0
    %465 = vmatprep.subr.bf16.mxu0 0
    %466 = vmatpush1.bf16.msra.mxu0 0
    %467 = vmatprep.subr.bf16.mxu0 0
    %468 = vmatpush1.bf16.msra.mxu0 0
    %469 = vmatprep.mubr.bf16.mxu0 0
    %470 = vmatmul.mubr.bf16.gmra.mrb[0].mxu0 %v376
    %v471 = vpop.f32.mrb[0].mxu0
    %v472 = vadd.f32 %v423, %v471
    %v473 = vpop.f32.mrb[0].mxu0
    %v474 = vpop.f32.mrb[0].mxu0
    %v475 = vadd.f32 %v423, %v474
    %v476 = vpop.f32.mrb[0].mxu0
    %477 = vdwg.mxu0
    %v479 = vlaneseq
    %v480 = vshrl.u32 %v479, 7
    %v481 = vsub.s32 0, %v480
    %v482 = vrot.slane %v260, %v481
    %v488 = vunpack.c.l.b16 %v256
    %v489 = vunpack.c.l.b16 %v257
    %v490 = vunpack.c.l.b16 %v258
    %v491 = vunpack.c.l.b16 %v259
    %v492 = vpack.c.b16 %v489, %v488
    %v493 = vpack.c.b16 %v491, %v490
    %496 = vmatprep.subr.bf16.mxu0 0
    %497 = vmatpush1.bf16.msra.mxu0 %v492
    %498 = vmatprep.subr.bf16.mxu0 0
    %499 = vmatpush1.bf16.msra.mxu0 %v493
    %500 = vmatprep.subr.bf16.mxu0 0
    %501 = vmatpush1.bf16.msra.mxu0 0
    %502 = vmatprep.subr.bf16.mxu0 0
    %503 = vmatpush1.bf16.msra.mxu0 0
    %504 = vmatprep.subr.bf16.mxu0 0
    %505 = vmatpush1.bf16.msra.mxu0 0
    %506 = vmatprep.subr.bf16.mxu0 0
    %507 = vmatpush1.bf16.msra.mxu0 0
    %508 = vmatprep.subr.bf16.mxu0 0
    %509 = vmatpush1.bf16.msra.mxu0 0
    %510 = vmatprep.subr.bf16.mxu0 0
    %511 = vmatpush1.bf16.msra.mxu0 0
    %512 = vmatprep.subr.bf16.mxu0 0
    %513 = vmatpush1.bf16.msra.mxu0 0
    %514 = vmatprep.subr.bf16.mxu0 0
    %515 = vmatpush1.bf16.msra.mxu0 0
    %516 = vmatprep.subr.bf16.mxu0 0
    %517 = vmatpush1.bf16.msra.mxu0 0
    %518 = vmatprep.subr.bf16.mxu0 0
    %519 = vmatpush1.bf16.msra.mxu0 0
    %520 = vmatprep.subr.bf16.mxu0 0
    %521 = vmatpush1.bf16.msra.mxu0 0
    %522 = vmatprep.subr.bf16.mxu0 0
    %523 = vmatpush1.bf16.msra.mxu0 0
    %524 = vmatprep.subr.bf16.mxu0 0
    %525 = vmatpush1.bf16.msra.mxu0 0
    %526 = vmatprep.subr.bf16.mxu0 0
    %527 = vmatpush1.bf16.msra.mxu0 0
    %528 = vmatprep.mubr.bf16.mxu0 0
    %529 = vmatmul.mubr.bf16.gmra.mrb[0].mxu0 %v376
    %v530 = vpop.f32.mrb[0].mxu0
    %v531 = vadd.f32 %v482, %v530
    %v532 = vpop.f32.mrb[0].mxu0
    %v533 = vpop.f32.mrb[0].mxu0
    %v534 = vadd.f32 %v482, %v533
    %v535 = vpop.f32.mrb[0].mxu0
    %536 = vdwg.mxu0
    %v537 = vpack.c.bf16 %v413, %v413
    %v538 = vpack.c.bf16 %v416, %v416
    %v539 = vpack.c.bf16 %v472, %v472
    %v540 = vpack.c.bf16 %v475, %v475
    %v541 = vpack.c.bf16 %v531, %v531
    %v542 = vpack.c.bf16 %v534, %v534
    %vm543 = vcmask 64512
    %v545 = vsel %vm543, %v537, 0
    %v548 = vsel %vm543, %v539, 0
    %550 = vmatprep.subr.bf16.mxu0 0
    %551 = vmatpush1.bf16.xpose.msra.mxu0 %v548
    %552 = vmatprep.subr.bf16.mxu0 0
    %553 = vmatpush1.bf16.xpose.msra.mxu0 0
    %554 = vmatprep.subr.bf16.mxu0 0
    %555 = vmatpush1.bf16.xpose.msra.mxu0 0
    %556 = vmatprep.subr.bf16.mxu0 0
    %557 = vmatpush1.bf16.xpose.msra.mxu0 0
    %558 = vmatprep.subr.bf16.mxu0 0
    %559 = vmatpush1.bf16.xpose.msra.mxu0 0
    %560 = vmatprep.subr.bf16.mxu0 0
    %561 = vmatpush1.bf16.xpose.msra.mxu0 0
    %562 = vmatprep.subr.bf16.mxu0 0
    %563 = vmatpush1.bf16.xpose.msra.mxu0 0
    %564 = vmatprep.subr.bf16.mxu0 0
    %565 = vmatpush1.bf16.xpose.msra.mxu0 0
    %566 = vmatprep.subr.bf16.mxu0 0
    %567 = vmatpush1.bf16.xpose.msra.mxu0 0
    %568 = vmatprep.subr.bf16.mxu0 0
    %569 = vmatpush1.bf16.xpose.msra.mxu0 0
    %570 = vmatprep.subr.bf16.mxu0 0
    %571 = vmatpush1.bf16.xpose.msra.mxu0 0
    %572 = vmatprep.subr.bf16.mxu0 0
    %573 = vmatpush1.bf16.xpose.msra.mxu0 0
    %574 = vmatprep.subr.bf16.mxu0 0
    %575 = vmatpush1.bf16.xpose.msra.mxu0 0
    %576 = vmatprep.subr.bf16.mxu0 0
    %577 = vmatpush1.bf16.xpose.msra.mxu0 0
    %578 = vmatprep.subr.bf16.mxu0 0
    %579 = vmatpush1.bf16.xpose.msra.mxu0 0
    %580 = vmatprep.subr.bf16.mxu0 0
    %581 = vmatpush1.bf16.xpose.msra.mxu0 0
    %582 = vmatprep.mubr.bf16.mxu0 0
    %583 = vmatmul.mubr.bf16.gmra.mrb[0].mxu0 %v545
    %v584 = vpop.f32.mrb[0].mxu0
    %v585 = vadd.f32 0.0, %v584
    %v586 = vpop.f32.mrb[0].mxu0
    %v587 = vpop.f32.mrb[0].mxu0
    %v588 = vpop.f32.mrb[0].mxu0
    %589 = vdwg.mxu0
    %v591 = vsel %vm543, %v538, 0
    %v594 = vsel %vm543, %v540, 0
    %596 = vmatprep.subr.bf16.mxu0 0
    %597 = vmatpush1.bf16.xpose.msra.mxu0 %v594
    %598 = vmatprep.subr.bf16.mxu0 0
    %599 = vmatpush1.bf16.xpose.msra.mxu0 0
    %600 = vmatprep.subr.bf16.mxu0 0
    %601 = vmatpush1.bf16.xpose.msra.mxu0 0
    %602 = vmatprep.subr.bf16.mxu0 0
    %603 = vmatpush1.bf16.xpose.msra.mxu0 0
    %604 = vmatprep.subr.bf16.mxu0 0
    %605 = vmatpush1.bf16.xpose.msra.mxu0 0
    %606 = vmatprep.subr.bf16.mxu0 0
    %607 = vmatpush1.bf16.xpose.msra.mxu0 0
    %608 = vmatprep.subr.bf16.mxu0 0
    %609 = vmatpush1.bf16.xpose.msra.mxu0 0
    %610 = vmatprep.subr.bf16.mxu0 0
    %611 = vmatpush1.bf16.xpose.msra.mxu0 0
    %612 = vmatprep.subr.bf16.mxu0 0
    %613 = vmatpush1.bf16.xpose.msra.mxu0 0
    %614 = vmatprep.subr.bf16.mxu0 0
    %615 = vmatpush1.bf16.xpose.msra.mxu0 0
    %616 = vmatprep.subr.bf16.mxu0 0
    %617 = vmatpush1.bf16.xpose.msra.mxu0 0
    %618 = vmatprep.subr.bf16.mxu0 0
    %619 = vmatpush1.bf16.xpose.msra.mxu0 0
    %620 = vmatprep.subr.bf16.mxu0 0
    %621 = vmatpush1.bf16.xpose.msra.mxu0 0
    %622 = vmatprep.subr.bf16.mxu0 0
    %623 = vmatpush1.bf16.xpose.msra.mxu0 0
    %624 = vmatprep.subr.bf16.mxu0 0
    %625 = vmatpush1.bf16.xpose.msra.mxu0 0
    %626 = vmatprep.subr.bf16.mxu0 0
    %627 = vmatpush1.bf16.xpose.msra.mxu0 0
    %628 = vmatprep.mubr.bf16.mxu0 0
    %629 = vmatmul.mubr.bf16.gmra.mrb[0].mxu0 %v591
    %v630 = vpop.f32.mrb[0].mxu0
    %v631 = vadd.f32 0.0, %v630
    %v632 = vpop.f32.mrb[0].mxu0
    %v633 = vpop.f32.mrb[0].mxu0
    %v634 = vpop.f32.mrb[0].mxu0
    %635 = vdwg.mxu0
    %v636 = vmul.f32 %v585, 0.35355338
    %v637 = vmul.f32 %v631, 0.35355338
    %v638 = vsel %vm543, %v636, -inf
    %639 = vmax.xlane.f32.xlu0 %v638
    %v640 = vpop.xlane.xlu0 %639
    %v641 = vsel %vm543, %v637, -inf
    %642 = vmax.xlane.f32.xlu0 %v641
    %v643 = vpop.xlane.xlu0 %642
    %v644 = vsub.f32 %v636, %v640
    %v645 = vsub.f32 %v637, %v643
    %v646 = vmul.f32 %v644, 1.442695
    %v647 = vpow.pop %v646
    %v648 = vmul.f32 %v645, 1.442695
    %v649 = vpow.pop %v648
    %v650 = vsel %vm543, %v647, 0.0
    %651 = vadd.xlane.f32.xlu0 %v650
    %v652 = vpop.xlane.xlu0 %651
    %v653 = vsel %vm543, %v649, 0.0
    %654 = vadd.xlane.f32.xlu0 %v653
    %v655 = vpop.xlane.xlu0 %654
    %v656 = vrcp.pop %v652
    %v657 = vrcp.pop %v655
    %v658 = vmul.f32 %v647, %v656
    %v659 = vmul.f32 %v649, %v657
    %v660 = vpack.c.bf16 %v658, %v658
    %v661 = vpack.c.bf16 %v659, %v659
    %v663 = vsel %vm543, %v660, 0
    %vm665 = vcmask 1043456
    %v667 = vsel %vm665, %v541, 0
    %669 = vmatprep.subr.bf16.mxu0 0
    %670 = vmatpush1.bf16.msra.mxu0 %v667
    %671 = vmatprep.subr.bf16.mxu0 0
    %672 = vmatpush1.bf16.msra.mxu0 0
    %673 = vmatprep.subr.bf16.mxu0 0
    %674 = vmatpush1.bf16.msra.mxu0 0
    %675 = vmatprep.subr.bf16.mxu0 0
    %676 = vmatpush1.bf16.msra.mxu0 0
    %677 = vmatprep.subr.bf16.mxu0 0
    %678 = vmatpush1.bf16.msra.mxu0 0
    %679 = vmatprep.subr.bf16.mxu0 0
    %680 = vmatpush1.bf16.msra.mxu0 0
    %681 = vmatprep.subr.bf16.mxu0 0
    %682 = vmatpush1.bf16.msra.mxu0 0
    %683 = vmatprep.subr.bf16.mxu0 0
    %684 = vmatpush1.bf16.msra.mxu0 0
    %685 = vmatprep.subr.bf16.mxu0 0
    %686 = vmatpush1.bf16.msra.mxu0 0
    %687 = vmatprep.subr.bf16.mxu0 0
    %688 = vmatpush1.bf16.msra.mxu0 0
    %689 = vmatprep.subr.bf16.mxu0 0
    %690 = vmatpush1.bf16.msra.mxu0 0
    %691 = vmatprep.subr.bf16.mxu0 0
    %692 = vmatpush1.bf16.msra.mxu0 0
    %693 = vmatprep.subr.bf16.mxu0 0
    %694 = vmatpush1.bf16.msra.mxu0 0
    %695 = vmatprep.subr.bf16.mxu0 0
    %696 = vmatpush1.bf16.msra.mxu0 0
    %697 = vmatprep.subr.bf16.mxu0 0
    %698 = vmatpush1.bf16.msra.mxu0 0
    %699 = vmatprep.subr.bf16.mxu0 0
    %700 = vmatpush1.bf16.msra.mxu0 0
    %701 = vmatprep.mubr.bf16.mxu0 0
    %702 = vmatmul.mubr.bf16.gmra.mrb[0].mxu0 %v663
    %v703 = vpop.f32.mrb[0].mxu0
    %v704 = vadd.f32 0.0, %v703
    %v705 = vpop.f32.mrb[0].mxu0
    %v706 = vpop.f32.mrb[0].mxu0
    %v707 = vpop.f32.mrb[0].mxu0
    %708 = vdwg.mxu0
    %v710 = vsel %vm543, %v661, 0
    %v713 = vsel %vm665, %v542, 0
    %715 = vmatprep.subr.bf16.mxu0 0
    %716 = vmatpush1.bf16.msra.mxu0 %v713
    %717 = vmatprep.subr.bf16.mxu0 0
    %718 = vmatpush1.bf16.msra.mxu0 0
    %719 = vmatprep.subr.bf16.mxu0 0
    %720 = vmatpush1.bf16.msra.mxu0 0
    %721 = vmatprep.subr.bf16.mxu0 0
    %722 = vmatpush1.bf16.msra.mxu0 0
    %723 = vmatprep.subr.bf16.mxu0 0
    %724 = vmatpush1.bf16.msra.mxu0 0
    %725 = vmatprep.subr.bf16.mxu0 0
    %726 = vmatpush1.bf16.msra.mxu0 0
    %727 = vmatprep.subr.bf16.mxu0 0
    %728 = vmatpush1.bf16.msra.mxu0 0
    %729 = vmatprep.subr.bf16.mxu0 0
    %730 = vmatpush1.bf16.msra.mxu0 0
    %731 = vmatprep.subr.bf16.mxu0 0
    %732 = vmatpush1.bf16.msra.mxu0 0
    %733 = vmatprep.subr.bf16.mxu0 0
    %734 = vmatpush1.bf16.msra.mxu0 0
    %735 = vmatprep.subr.bf16.mxu0 0
    %736 = vmatpush1.bf16.msra.mxu0 0
    %737 = vmatprep.subr.bf16.mxu0 0
    %738 = vmatpush1.bf16.msra.mxu0 0
    %739 = vmatprep.subr.bf16.mxu0 0
    %740 = vmatpush1.bf16.msra.mxu0 0
    %741 = vmatprep.subr.bf16.mxu0 0
    %742 = vmatpush1.bf16.msra.mxu0 0
    %743 = vmatprep.subr.bf16.mxu0 0
    %744 = vmatpush1.bf16.msra.mxu0 0
    %745 = vmatprep.subr.bf16.mxu0 0
    %746 = vmatpush1.bf16.msra.mxu0 0
    %747 = vmatprep.mubr.bf16.mxu0 0
    %748 = vmatmul.mubr.bf16.gmra.mrb[0].mxu0 %v710
    %v749 = vpop.f32.mrb[0].mxu0
    %v750 = vadd.f32 0.0, %v749
    %v751 = vpop.f32.mrb[0].mxu0
    %v752 = vpop.f32.mrb[0].mxu0
    %v753 = vpop.f32.mrb[0].mxu0
    %754 = vdwg.mxu0
    %755 = vst.msk [vmem:[#allocation2] sm:$0xff] %vm543, %v704
    %756 = vst.msk [vmem:[#allocation2 + $0x8] sm:$0xff] %vm543, %v750
    %758 = vrot.lane.b32.xlu0 %v537, 120
    %v759 = vpop.permute.xlu0 %758
    %761 = vrot.lane.b32.xlu0 %v539, 120
    %v762 = vpop.permute.xlu0 %761
    %v764 = vsel %vm543, %v759, 0
    %v767 = vsel %vm543, %v762, 0
    %769 = vmatprep.subr.bf16.mxu0 0
    %770 = vmatpush1.bf16.xpose.msra.mxu0 %v767
    %771 = vmatprep.subr.bf16.mxu0 0
    %772 = vmatpush1.bf16.xpose.msra.mxu0 0
    %773 = vmatprep.subr.bf16.mxu0 0
    %774 = vmatpush1.bf16.xpose.msra.mxu0 0
    %775 = vmatprep.subr.bf16.mxu0 0
    %776 = vmatpush1.bf16.xpose.msra.mxu0 0
    %777 = vmatprep.subr.bf16.mxu0 0
    %778 = vmatpush1.bf16.xpose.msra.mxu0 0
    %779 = vmatprep.subr.bf16.mxu0 0
    %780 = vmatpush1.bf16.xpose.msra.mxu0 0
    %781 = vmatprep.subr.bf16.mxu0 0
    %782 = vmatpush1.bf16.xpose.msra.mxu0 0
    %783 = vmatprep.subr.bf16.mxu0 0
    %784 = vmatpush1.bf16.xpose.msra.mxu0 0
    %785 = vmatprep.subr.bf16.mxu0 0
    %786 = vmatpush1.bf16.xpose.msra.mxu0 0
    %787 = vmatprep.subr.bf16.mxu0 0
    %788 = vmatpush1.bf16.xpose.msra.mxu0 0
    %789 = vmatprep.subr.bf16.mxu0 0
    %790 = vmatpush1.bf16.xpose.msra.mxu0 0
    %791 = vmatprep.subr.bf16.mxu0 0
    %792 = vmatpush1.bf16.xpose.msra.mxu0 0
    %793 = vmatprep.subr.bf16.mxu0 0
    %794 = vmatpush1.bf16.xpose.msra.mxu0 0
    %795 = vmatprep.subr.bf16.mxu0 0
    %796 = vmatpush1.bf16.xpose.msra.mxu0 0
    %797 = vmatprep.subr.bf16.mxu0 0
    %798 = vmatpush1.bf16.xpose.msra.mxu0 0
    %799 = vmatprep.subr.bf16.mxu0 0
    %800 = vmatpush1.bf16.xpose.msra.mxu0 0
    %801 = vmatprep.mubr.bf16.mxu0 0
    %802 = vmatmul.mubr.bf16.gmra.mrb[0].mxu0 %v764
    %v803 = vpop.f32.mrb[0].mxu0
    %v804 = vadd.f32 0.0, %v803
    %v805 = vpop.f32.mrb[0].mxu0
    %v806 = vpop.f32.mrb[0].mxu0
    %v807 = vpop.f32.mrb[0].mxu0
    %808 = vdwg.mxu0
    %810 = vrot.lane.b32.xlu0 %v538, 120
    %v811 = vpop.permute.xlu0 %810
    %813 = vrot.lane.b32.xlu0 %v540, 120
    %v814 = vpop.permute.xlu0 %813
    %v816 = vsel %vm543, %v811, 0
    %v819 = vsel %vm543, %v814, 0
    %821 = vmatprep.subr.bf16.mxu0 0
    %822 = vmatpush1.bf16.xpose.msra.mxu0 %v819
    %823 = vmatprep.subr.bf16.mxu0 0
    %824 = vmatpush1.bf16.xpose.msra.mxu0 0
    %825 = vmatprep.subr.bf16.mxu0 0
    %826 = vmatpush1.bf16.xpose.msra.mxu0 0
    %827 = vmatprep.subr.bf16.mxu0 0
    %828 = vmatpush1.bf16.xpose.msra.mxu0 0
    %829 = vmatprep.subr.bf16.mxu0 0
    %830 = vmatpush1.bf16.xpose.msra.mxu0 0
    %831 = vmatprep.subr.bf16.mxu0 0
    %832 = vmatpush1.bf16.xpose.msra.mxu0 0
    %833 = vmatprep.subr.bf16.mxu0 0
    %834 = vmatpush1.bf16.xpose.msra.mxu0 0
    %835 = vmatprep.subr.bf16.mxu0 0
    %836 = vmatpush1.bf16.xpose.msra.mxu0 0
    %837 = vmatprep.subr.bf16.mxu0 0
    %838 = vmatpush1.bf16.xpose.msra.mxu0 0
    %839 = vmatprep.subr.bf16.mxu0 0
    %840 = vmatpush1.bf16.xpose.msra.mxu0 0
    %841 = vmatprep.subr.bf16.mxu0 0
    %842 = vmatpush1.bf16.xpose.msra.mxu0 0
    %843 = vmatprep.subr.bf16.mxu0 0
    %844 = vmatpush1.bf16.xpose.msra.mxu0 0
    %845 = vmatprep.subr.bf16.mxu0 0
    %846 = vmatpush1.bf16.xpose.msra.mxu0 0
    %847 = vmatprep.subr.bf16.mxu0 0
    %848 = vmatpush1.bf16.xpose.msra.mxu0 0
    %849 = vmatprep.subr.bf16.mxu0 0
    %850 = vmatpush1.bf16.xpose.msra.mxu0 0
    %851 = vmatprep.subr.bf16.mxu0 0
    %852 = vmatpush1.bf16.xpose.msra.mxu0 0
    %853 = vmatprep.mubr.bf16.mxu0 0
    %854 = vmatmul.mubr.bf16.gmra.mrb[0].mxu0 %v816
    %v855 = vpop.f32.mrb[0].mxu0
    %v856 = vadd.f32 0.0, %v855
    %v857 = vpop.f32.mrb[0].mxu0
    %v858 = vpop.f32.mrb[0].mxu0
    %v859 = vpop.f32.mrb[0].mxu0
    %860 = vdwg.mxu0
    %v861 = vmul.f32 %v804, 0.35355338
    %v862 = vmul.f32 %v856, 0.35355338
    %v863 = vsel %vm543, %v861, -inf
    %864 = vmax.xlane.f32.xlu0 %v863
    %v865 = vpop.xlane.xlu0 %864
    %v866 = vsel %vm543, %v862, -inf
    %867 = vmax.xlane.f32.xlu0 %v866
    %v868 = vpop.xlane.xlu0 %867
    %v869 = vsub.f32 %v861, %v865
    %v870 = vsub.f32 %v862, %v868
    %v871 = vmul.f32 %v869, 1.442695
    %v872 = vpow.pop %v871
    %v873 = vmul.f32 %v870, 1.442695
    %v874 = vpow.pop %v873
    %v875 = vsel %vm543, %v872, 0.0
    %876 = vadd.xlane.f32.xlu0 %v875
    %v877 = vpop.xlane.xlu0 %876
    %v878 = vsel %vm543, %v874, 0.0
    %879 = vadd.xlane.f32.xlu0 %v878
    %v880 = vpop.xlane.xlu0 %879
    %v881 = vrcp.pop %v877
    %v882 = vrcp.pop %v880
    %v883 = vmul.f32 %v872, %v881
    %v884 = vmul.f32 %v874, %v882
    %v885 = vpack.c.bf16 %v883, %v883
    %v886 = vpack.c.bf16 %v884, %v884
    %888 = vrot.lane.b32.xlu0 %v541, 120
    %v889 = vpop.permute.xlu0 %888
    %v891 = vsel %vm543, %v885, 0
    %v894 = vsel %vm665, %v889, 0
    %896 = vmatprep.subr.bf16.mxu0 0
    %897 = vmatpush1.bf16.msra.mxu0 %v894
    %898 = vmatprep.subr.bf16.mxu0 0
    %899 = vmatpush1.bf16.msra.mxu0 0
    %900 = vmatprep.subr.bf16.mxu0 0
    %901 = vmatpush1.bf16.msra.mxu0 0
    %902 = vmatprep.subr.bf16.mxu0 0
    %903 = vmatpush1.bf16.msra.mxu0 0
    %904 = vmatprep.subr.bf16.mxu0 0
    %905 = vmatpush1.bf16.msra.mxu0 0
    %906 = vmatprep.subr.bf16.mxu0 0
    %907 = vmatpush1.bf16.msra.mxu0 0
    %908 = vmatprep.subr.bf16.mxu0 0
    %909 = vmatpush1.bf16.msra.mxu0 0
    %910 = vmatprep.subr.bf16.mxu0 0
    %911 = vmatpush1.bf16.msra.mxu0 0
    %912 = vmatprep.subr.bf16.mxu0 0
    %913 = vmatpush1.bf16.msra.mxu0 0
    %914 = vmatprep.subr.bf16.mxu0 0
    %915 = vmatpush1.bf16.msra.mxu0 0
    %916 = vmatprep.subr.bf16.mxu0 0
    %917 = vmatpush1.bf16.msra.mxu0 0
    %918 = vmatprep.subr.bf16.mxu0 0
    %919 = vmatpush1.bf16.msra.mxu0 0
    %920 = vmatprep.subr.bf16.mxu0 0
    %921 = vmatpush1.bf16.msra.mxu0 0
    %922 = vmatprep.subr.bf16.mxu0 0
    %923 = vmatpush1.bf16.msra.mxu0 0
    %924 = vmatprep.subr.bf16.mxu0 0
    %925 = vmatpush1.bf16.msra.mxu0 0
    %926 = vmatprep.subr.bf16.mxu0 0
    %927 = vmatpush1.bf16.msra.mxu0 0
    %928 = vmatprep.mubr.bf16.mxu0 0
    %929 = vmatmul.mubr.bf16.gmra.mrb[0].mxu0 %v891
    %v930 = vpop.f32.mrb[0].mxu0
    %v931 = vadd.f32 0.0, %v930
    %v932 = vpop.f32.mrb[0].mxu0
    %v933 = vpop.f32.mrb[0].mxu0
    %v934 = vpop.f32.mrb[0].mxu0
    %935 = vdwg.mxu0
    %937 = vrot.lane.b32.xlu0 %v542, 120
    %v938 = vpop.permute.xlu0 %937
    %v940 = vsel %vm543, %v886, 0
    %v943 = vsel %vm665, %v938, 0
    %945 = vmatprep.subr.bf16.mxu0 0
    %946 = vmatpush1.bf16.msra.mxu0 %v943
    %947 = vmatprep.subr.bf16.mxu0 0
    %948 = vmatpush1.bf16.msra.mxu0 0
    %949 = vmatprep.subr.bf16.mxu0 0
    %950 = vmatpush1.bf16.msra.mxu0 0
    %951 = vmatprep.subr.bf16.mxu0 0
    %952 = vmatpush1.bf16.msra.mxu0 0
    %953 = vmatprep.subr.bf16.mxu0 0
    %954 = vmatpush1.bf16.msra.mxu0 0
    %955 = vmatprep.subr.bf16.mxu0 0
    %956 = vmatpush1.bf16.msra.mxu0 0
    %957 = vmatprep.subr.bf16.mxu0 0
    %958 = vmatpush1.bf16.msra.mxu0 0
    %959 = vmatprep.subr.bf16.mxu0 0
    %960 = vmatpush1.bf16.msra.mxu0 0
    %961 = vmatprep.subr.bf16.mxu0 0
    %962 = vmatpush1.bf16.msra.mxu0 0
    %963 = vmatprep.subr.bf16.mxu0 0
    %964 = vmatpush1.bf16.msra.mxu0 0
    %965 = vmatprep.subr.bf16.mxu0 0
    %966 = vmatpush1.bf16.msra.mxu0 0
    %967 = vmatprep.subr.bf16.mxu0 0
    %968 = vmatpush1.bf16.msra.mxu0 0
    %969 = vmatprep.subr.bf16.mxu0 0
    %970 = vmatpush1.bf16.msra.mxu0 0
    %971 = vmatprep.subr.bf16.mxu0 0
    %972 = vmatpush1.bf16.msra.mxu0 0
    %973 = vmatprep.subr.bf16.mxu0 0
    %974 = vmatpush1.bf16.msra.mxu0 0
    %975 = vmatprep.subr.bf16.mxu0 0
    %976 = vmatpush1.bf16.msra.mxu0 0
    %977 = vmatprep.mubr.bf16.mxu0 0
    %978 = vmatmul.mubr.bf16.gmra.mrb[0].mxu0 %v940
    %v979 = vpop.f32.mrb[0].mxu0
    %v980 = vadd.f32 0.0, %v979
    %v981 = vpop.f32.mrb[0].mxu0
    %v982 = vpop.f32.mrb[0].mxu0
    %v983 = vpop.f32.mrb[0].mxu0
    %984 = vdwg.mxu0
    %987 = vrot.lane.b32.xlu0 %v931, 8
    %v988 = vpop.permute.xlu0 %987
    %989 = vrot.lane.b32.xlu0 %v980, 8
    %v990 = vpop.permute.xlu0 %989
    %vm993 = vcmask 130112
    %994 = vst.msk [vmem:[#allocation2] sm:$0xff] %vm993, %v988
    %995 = vst.msk [vmem:[#allocation2 + $0x8] sm:$0xff] %vm993, %v990
    %996 = vrot.lane.b32.xlu0 %v537, 112
    %v997 = vpop.permute.xlu0 %996
    %998 = vrot.lane.b32.xlu0 %v539, 112
    %v999 = vpop.permute.xlu0 %998
    %v1001 = vsel %vm543, %v997, 0
    %v1004 = vsel %vm543, %v999, 0
    %1006 = vmatprep.subr.bf16.mxu0 0
    %1007 = vmatpush1.bf16.xpose.msra.mxu0 %v1004
    %1008 = vmatprep.subr.bf16.mxu0 0
    %1009 = vmatpush1.bf16.xpose.msra.mxu0 0
    %1010 = vmatprep.subr.bf16.mxu0 0
    %1011 = vmatpush1.bf16.xpose.msra.mxu0 0
    %1012 = vmatprep.subr.bf16.mxu0 0
    %1013 = vmatpush1.bf16.xpose.msra.mxu0 0
    %1014 = vmatprep.subr.bf16.mxu0 0
    %1015 = vmatpush1.bf16.xpose.msra.mxu0 0
    %1016 = vmatprep.subr.bf16.mxu0 0
    %1017 = vmatpush1.bf16.xpose.msra.mxu0 0
    %1018 = vmatprep.subr.bf16.mxu0 0
    %1019 = vmatpush1.bf16.xpose.msra.mxu0 0
    %1020 = vmatprep.subr.bf16.mxu0 0
    %1021 = vmatpush1.bf16.xpose.msra.mxu0 0
    %1022 = vmatprep.subr.bf16.mxu0 0
    %1023 = vmatpush1.bf16.xpose.msra.mxu0 0
    %1024 = vmatprep.subr.bf16.mxu0 0
    %1025 = vmatpush1.bf16.xpose.msra.mxu0 0
    %1026 = vmatprep.subr.bf16.mxu0 0
    %1027 = vmatpush1.bf16.xpose.msra.mxu0 0
    %1028 = vmatprep.subr.bf16.mxu0 0
    %1029 = vmatpush1.bf16.xpose.msra.mxu0 0
    %1030 = vmatprep.subr.bf16.mxu0 0
    %1031 = vmatpush1.bf16.xpose.msra.mxu0 0
    %1032 = vmatprep.subr.bf16.mxu0 0
    %1033 = vmatpush1.bf16.xpose.msra.mxu0 0
    %1034 = vmatprep.subr.bf16.mxu0 0
    %1035 = vmatpush1.bf16.xpose.msra.mxu0 0
    %1036 = vmatprep.subr.bf16.mxu0 0
    %1037 = vmatpush1.bf16.xpose.msra.mxu0 0
    %1038 = vmatprep.mubr.bf16.mxu0 0
    %1039 = vmatmul.mubr.bf16.gmra.mrb[0].mxu0 %v1001
    %v1040 = vpop.f32.mrb[0].mxu0
    %v1041 = vadd.f32 0.0, %v1040
    %v1042 = vpop.f32.mrb[0].mxu0
    %v1043 = vpop.f32.mrb[0].mxu0
    %v1044 = vpop.f32.mrb[0].mxu0
    %1045 = vdwg.mxu0
    %1046 = vrot.lane.b32.xlu0 %v538, 112
    %v1047 = vpop.permute.xlu0 %1046
    %1048 = vrot.lane.b32.xlu0 %v540, 112
    %v1049 = vpop.permute.xlu0 %1048
    %v1051 = vsel %vm543, %v1047, 0
    %v1054 = vsel %vm543, %v1049, 0
    %1056 = vmatprep.subr.bf16.mxu0 0
    %1057 = vmatpush1.bf16.xpose.msra.mxu0 %v1054
    %1058 = vmatprep.subr.bf16.mxu0 0
    %1059 = vmatpush1.bf16.xpose.msra.mxu0 0
    %1060 = vmatprep.subr.bf16.mxu0 0
    %1061 = vmatpush1.bf16.xpose.msra.mxu0 0
    %1062 = vmatprep.subr.bf16.mxu0 0
    %1063 = vmatpush1.bf16.xpose.msra.mxu0 0
    %1064 = vmatprep.subr.bf16.mxu0 0
    %1065 = vmatpush1.bf16.xpose.msra.mxu0 0
    %1066 = vmatprep.subr.bf16.mxu0 0
    %1067 = vmatpush1.bf16.xpose.msra.mxu0 0
    %1068 = vmatprep.subr.bf16.mxu0 0
    %1069 = vmatpush1.bf16.xpose.msra.mxu0 0
    %1070 = vmatprep.subr.bf16.mxu0 0
    %1071 = vmatpush1.bf16.xpose.msra.mxu0 0
    %1072 = vmatprep.subr.bf16.mxu0 0
    %1073 = vmatpush1.bf16.xpose.msra.mxu0 0
    %1074 = vmatprep.subr.bf16.mxu0 0
    %1075 = vmatpush1.bf16.xpose.msra.mxu0 0
    %1076 = vmatprep.subr.bf16.mxu0 0
    %1077 = vmatpush1.bf16.xpose.msra.mxu0 0
    %1078 = vmatprep.subr.bf16.mxu0 0
    %1079 = vmatpush1.bf16.xpose.msra.mxu0 0
    %1080 = vmatprep.subr.bf16.mxu0 0
    %1081 = vmatpush1.bf16.xpose.msra.mxu0 0
    %1082 = vmatprep.subr.bf16.mxu0 0
    %1083 = vmatpush1.bf16.xpose.msra.mxu0 0
    %1084 = vmatprep.subr.bf16.mxu0 0
    %1085 = vmatpush1.bf16.xpose.msra.mxu0 0
    %1086 = vmatprep.subr.bf16.mxu0 0
    %1087 = vmatpush1.bf16.xpose.msra.mxu0 0
    %1088 = vmatprep.mubr.bf16.mxu0 0
    %1089 = vmatmul.mubr.bf16.gmra.mrb[0].mxu0 %v1051
    %v1090 = vpop.f32.mrb[0].mxu0
    %v1091 = vadd.f32 0.0, %v1090
    %v1092 = vpop.f32.mrb[0].mxu0
    %v1093 = vpop.f32.mrb[0].mxu0
    %v1094 = vpop.f32.mrb[0].mxu0
    %1095 = vdwg.mxu0
    %v1096 = vmul.f32 %v1041, 0.35355338
    %v1097 = vmul.f32 %v1091, 0.35355338
    %v1098 = vsel %vm543, %v1096, -inf
    %1099 = vmax.xlane.f32.xlu0 %v1098
    %v1100 = vpop.xlane.xlu0 %1099
    %v1101 = vsel %vm543, %v1097, -inf
    %1102 = vmax.xlane.f32.xlu0 %v1101
    %v1103 = vpop.xlane.xlu0 %1102
    %v1104 = vsub.f32 %v1096, %v1100
    %v1105 = vsub.f32 %v1097, %v1103
    %v1106 = vmul.f32 %v1104, 1.442695
    %v1107 = vpow.pop %v1106
    %v1108 = vmul.f32 %v1105, 1.442695
    %v1109 = vpow.pop %v1108
    %v1110 = vsel %vm543, %v1107, 0.0
    %1111 = vadd.xlane.f32.xlu0 %v1110
    %v1112 = vpop.xlane.xlu0 %1111
    %v1113 = vsel %vm543, %v1109, 0.0
    %1114 = vadd.xlane.f32.xlu0 %v1113
    %v1115 = vpop.xlane.xlu0 %1114
    %v1116 = vrcp.pop %v1112
    %v1117 = vrcp.pop %v1115
    %v1118 = vmul.f32 %v1107, %v1116
    %v1119 = vmul.f32 %v1109, %v1117
    %v1120 = vpack.c.bf16 %v1118, %v1118
    %v1121 = vpack.c.bf16 %v1119, %v1119
    %1122 = vrot.lane.b32.xlu0 %v541, 112
    %v1123 = vpop.permute.xlu0 %1122
    %v1125 = vsel %vm543, %v1120, 0
    %v1128 = vsel %vm665, %v1123, 0
    %1130 = vmatprep.subr.bf16.mxu0 0
    %1131 = vmatpush1.bf16.msra.mxu0 %v1128
    %1132 = vmatprep.subr.bf16.mxu0 0
    %1133 = vmatpush1.bf16.msra.mxu0 0
    %1134 = vmatprep.subr.bf16.mxu0 0
    %1135 = vmatpush1.bf16.msra.mxu0 0
    %1136 = vmatprep.subr.bf16.mxu0 0
    %1137 = vmatpush1.bf16.msra.mxu0 0
    %1138 = vmatprep.subr.bf16.mxu0 0
    %1139 = vmatpush1.bf16.msra.mxu0 0
    %1140 = vmatprep.subr.bf16.mxu0 0
    %1141 = vmatpush1.bf16.msra.mxu0 0
    %1142 = vmatprep.subr.bf16.mxu0 0
    %1143 = vmatpush1.bf16.msra.mxu0 0
    %1144 = vmatprep.subr.bf16.mxu0 0
    %1145 = vmatpush1.bf16.msra.mxu0 0
    %1146 = vmatprep.subr.bf16.mxu0 0
    %1147 = vmatpush1.bf16.msra.mxu0 0
    %1148 = vmatprep.subr.bf16.mxu0 0
    %1149 = vmatpush1.bf16.msra.mxu0 0
    %1150 = vmatprep.subr.bf16.mxu0 0
    %1151 = vmatpush1.bf16.msra.mxu0 0
    %1152 = vmatprep.subr.bf16.mxu0 0
    %1153 = vmatpush1.bf16.msra.mxu0 0
    %1154 = vmatprep.subr.bf16.mxu0 0
    %1155 = vmatpush1.bf16.msra.mxu0 0
    %1156 = vmatprep.subr.bf16.mxu0 0
    %1157 = vmatpush1.bf16.msra.mxu0 0
    %1158 = vmatprep.subr.bf16.mxu0 0
    %1159 = vmatpush1.bf16.msra.mxu0 0
    %1160 = vmatprep.subr.bf16.mxu0 0
    %1161 = vmatpush1.bf16.msra.mxu0 0
    %1162 = vmatprep.mubr.bf16.mxu0 0
    %1163 = vmatmul.mubr.bf16.gmra.mrb[0].mxu0 %v1125
    %v1164 = vpop.f32.mrb[0].mxu0
    %v1165 = vadd.f32 0.0, %v1164
    %v1166 = vpop.f32.mrb[0].mxu0
    %v1167 = vpop.f32.mrb[0].mxu0
    %v1168 = vpop.f32.mrb[0].mxu0
    %1169 = vdwg.mxu0
    %1170 = vrot.lane.b32.xlu0 %v542, 112
    %v1171 = vpop.permute.xlu0 %1170
    %v1173 = vsel %vm543, %v1121, 0
    %v1176 = vsel %vm665, %v1171, 0
    %1178 = vmatprep.subr.bf16.mxu0 0
    %1179 = vmatpush1.bf16.msra.mxu0 %v1176
    %1180 = vmatprep.subr.bf16.mxu0 0
    %1181 = vmatpush1.bf16.msra.mxu0 0
    %1182 = vmatprep.subr.bf16.mxu0 0
    %1183 = vmatpush1.bf16.msra.mxu0 0
    %1184 = vmatprep.subr.bf16.mxu0 0
    %1185 = vmatpush1.bf16.msra.mxu0 0
    %1186 = vmatprep.subr.bf16.mxu0 0
    %1187 = vmatpush1.bf16.msra.mxu0 0
    %1188 = vmatprep.subr.bf16.mxu0 0
    %1189 = vmatpush1.bf16.msra.mxu0 0
    %1190 = vmatprep.subr.bf16.mxu0 0
    %1191 = vmatpush1.bf16.msra.mxu0 0
    %1192 = vmatprep.subr.bf16.mxu0 0
    %1193 = vmatpush1.bf16.msra.mxu0 0
    %1194 = vmatprep.subr.bf16.mxu0 0
    %1195 = vmatpush1.bf16.msra.mxu0 0
    %1196 = vmatprep.subr.bf16.mxu0 0
    %1197 = vmatpush1.bf16.msra.mxu0 0
    %1198 = vmatprep.subr.bf16.mxu0 0
    %1199 = vmatpush1.bf16.msra.mxu0 0
    %1200 = vmatprep.subr.bf16.mxu0 0
    %1201 = vmatpush1.bf16.msra.mxu0 0
    %1202 = vmatprep.subr.bf16.mxu0 0
    %1203 = vmatpush1.bf16.msra.mxu0 0
    %1204 = vmatprep.subr.bf16.mxu0 0
    %1205 = vmatpush1.bf16.msra.mxu0 0
    %1206 = vmatprep.subr.bf16.mxu0 0
    %1207 = vmatpush1.bf16.msra.mxu0 0
    %1208 = vmatprep.subr.bf16.mxu0 0
    %1209 = vmatpush1.bf16.msra.mxu0 0
    %1210 = vmatprep.mubr.bf16.mxu0 0
    %1211 = vmatmul.mubr.bf16.gmra.mrb[0].mxu0 %v1173
    %v1212 = vpop.f32.mrb[0].mxu0
    %v1213 = vadd.f32 0.0, %v1212
    %v1214 = vpop.f32.mrb[0].mxu0
    %v1215 = vpop.f32.mrb[0].mxu0
    %v1216 = vpop.f32.mrb[0].mxu0
    %1217 = vdwg.mxu0
    %1220 = vrot.lane.b32.xlu0 %v1165, 16
    %v1221 = vpop.permute.xlu0 %1220
    %1222 = vrot.lane.b32.xlu0 %v1213, 16
    %v1223 = vpop.permute.xlu0 %1222
    %vm1226 = vcmask 195712
    %1227 = vst.msk [vmem:[#allocation2] sm:$0xff] %vm1226, %v1221
    %1228 = vst.msk [vmem:[#allocation2 + $0x8] sm:$0xff] %vm1226, %v1223
    %1229 = vrot.lane.b32.xlu0 %v537, 104
    %v1230 = vpop.permute.xlu0 %1229
    %1231 = vrot.lane.b32.xlu0 %v539, 104
    %v1232 = vpop.permute.xlu0 %1231
    %v1234 = vsel %vm543, %v1230, 0
    %v1237 = vsel %vm543, %v1232, 0
    %1239 = vmatprep.subr.bf16.mxu0 0
    %1240 = vmatpush1.bf16.xpose.msra.mxu0 %v1237
    %1241 = vmatprep.subr.bf16.mxu0 0
    %1242 = vmatpush1.bf16.xpose.msra.mxu0 0
    %1243 = vmatprep.subr.bf16.mxu0 0
    %1244 = vmatpush1.bf16.xpose.msra.mxu0 0
    %1245 = vmatprep.subr.bf16.mxu0 0
    %1246 = vmatpush1.bf16.xpose.msra.mxu0 0
    %1247 = vmatprep.subr.bf16.mxu0 0
    %1248 = vmatpush1.bf16.xpose.msra.mxu0 0
    %1249 = vmatprep.subr.bf16.mxu0 0
    %1250 = vmatpush1.bf16.xpose.msra.mxu0 0
    %1251 = vmatprep.subr.bf16.mxu0 0
    %1252 = vmatpush1.bf16.xpose.msra.mxu0 0
    %1253 = vmatprep.subr.bf16.mxu0 0
    %1254 = vmatpush1.bf16.xpose.msra.mxu0 0
    %1255 = vmatprep.subr.bf16.mxu0 0
    %1256 = vmatpush1.bf16.xpose.msra.mxu0 0
    %1257 = vmatprep.subr.bf16.mxu0 0
    %1258 = vmatpush1.bf16.xpose.msra.mxu0 0
    %1259 = vmatprep.subr.bf16.mxu0 0
    %1260 = vmatpush1.bf16.xpose.msra.mxu0 0
    %1261 = vmatprep.subr.bf16.mxu0 0
    %1262 = vmatpush1.bf16.xpose.msra.mxu0 0
    %1263 = vmatprep.subr.bf16.mxu0 0
    %1264 = vmatpush1.bf16.xpose.msra.mxu0 0
    %1265 = vmatprep.subr.bf16.mxu0 0
    %1266 = vmatpush1.bf16.xpose.msra.mxu0 0
    %1267 = vmatprep.subr.bf16.mxu0 0
    %1268 = vmatpush1.bf16.xpose.msra.mxu0 0
    %1269 = vmatprep.subr.bf16.mxu0 0
    %1270 = vmatpush1.bf16.xpose.msra.mxu0 0
    %1271 = vmatprep.mubr.bf16.mxu0 0
    %1272 = vmatmul.mubr.bf16.gmra.mrb[0].mxu0 %v1234
    %v1273 = vpop.f32.mrb[0].mxu0
    %v1274 = vadd.f32 0.0, %v1273
    %v1275 = vpop.f32.mrb[0].mxu0
    %v1276 = vpop.f32.mrb[0].mxu0
    %v1277 = vpop.f32.mrb[0].mxu0
    %1278 = vdwg.mxu0
    %1279 = vrot.lane.b32.xlu0 %v538, 104
    %v1280 = vpop.permute.xlu0 %1279
    %1281 = vrot.lane.b32.xlu0 %v540, 104
    %v1282 = vpop.permute.xlu0 %1281
    %v1284 = vsel %vm543, %v1280, 0
    %v1287 = vsel %vm543, %v1282, 0
    %1289 = vmatprep.subr.bf16.mxu0 0
    %1290 = vmatpush1.bf16.xpose.msra.mxu0 %v1287
    %1291 = vmatprep.subr.bf16.mxu0 0
    %1292 = vmatpush1.bf16.xpose.msra.mxu0 0
    %1293 = vmatprep.subr.bf16.mxu0 0
    %1294 = vmatpush1.bf16.xpose.msra.mxu0 0
    %1295 = vmatprep.subr.bf16.mxu0 0
    %1296 = vmatpush1.bf16.xpose.msra.mxu0 0
    %1297 = vmatprep.subr.bf16.mxu0 0
    %1298 = vmatpush1.bf16.xpose.msra.mxu0 0
    %1299 = vmatprep.subr.bf16.mxu0 0
    %1300 = vmatpush1.bf16.xpose.msra.mxu0 0
    %1301 = vmatprep.subr.bf16.mxu0 0
    %1302 = vmatpush1.bf16.xpose.msra.mxu0 0
    %1303 = vmatprep.subr.bf16.mxu0 0
    %1304 = vmatpush1.bf16.xpose.msra.mxu0 0
    %1305 = vmatprep.subr.bf16.mxu0 0
    %1306 = vmatpush1.bf16.xpose.msra.mxu0 0
    %1307 = vmatprep.subr.bf16.mxu0 0
    %1308 = vmatpush1.bf16.xpose.msra.mxu0 0
    %1309 = vmatprep.subr.bf16.mxu0 0
    %1310 = vmatpush1.bf16.xpose.msra.mxu0 0
    %1311 = vmatprep.subr.bf16.mxu0 0
    %1312 = vmatpush1.bf16.xpose.msra.mxu0 0
    %1313 = vmatprep.subr.bf16.mxu0 0
    %1314 = vmatpush1.bf16.xpose.msra.mxu0 0
    %1315 = vmatprep.subr.bf16.mxu0 0
    %1316 = vmatpush1.bf16.xpose.msra.mxu0 0
    %1317 = vmatprep.subr.bf16.mxu0 0
    %1318 = vmatpush1.bf16.xpose.msra.mxu0 0
    %1319 = vmatprep.subr.bf16.mxu0 0
    %1320 = vmatpush1.bf16.xpose.msra.mxu0 0
    %1321 = vmatprep.mubr.bf16.mxu0 0
    %1322 = vmatmul.mubr.bf16.gmra.mrb[0].mxu0 %v1284
    %v1323 = vpop.f32.mrb[0].mxu0
    %v1324 = vadd.f32 0.0, %v1323
    %v1325 = vpop.f32.mrb[0].mxu0
    %v1326 = vpop.f32.mrb[0].mxu0
    %v1327 = vpop.f32.mrb[0].mxu0
    %1328 = vdwg.mxu0
    %v1329 = vmul.f32 %v1274, 0.35355338
    %v1330 = vmul.f32 %v1324, 0.35355338
    %v1331 = vsel %vm543, %v1329, -inf
    %1332 = vmax.xlane.f32.xlu0 %v1331
    %v1333 = vpop.xlane.xlu0 %1332
    %v1334 = vsel %vm543, %v1330, -inf
    %1335 = vmax.xlane.f32.xlu0 %v1334
    %v1336 = vpop.xlane.xlu0 %1335
    %v1337 = vsub.f32 %v1329, %v1333
    %v1338 = vsub.f32 %v1330, %v1336
    %v1339 = vmul.f32 %v1337, 1.442695
    %v1340 = vpow.pop %v1339
    %v1341 = vmul.f32 %v1338, 1.442695
    %v1342 = vpow.pop %v1341
    %v1343 = vsel %vm543, %v1340, 0.0
    %1344 = vadd.xlane.f32.xlu0 %v1343
    %v1345 = vpop.xlane.xlu0 %1344
    %v1346 = vsel %vm543, %v1342, 0.0
    %1347 = vadd.xlane.f32.xlu0 %v1346
    %v1348 = vpop.xlane.xlu0 %1347
    %v1349 = vrcp.pop %v1345
    %v1350 = vrcp.pop %v1348
    %v1351 = vmul.f32 %v1340, %v1349
    %v1352 = vmul.f32 %v1342, %v1350
    %v1353 = vpack.c.bf16 %v1351, %v1351
    %v1354 = vpack.c.bf16 %v1352, %v1352
    %1355 = vrot.lane.b32.xlu0 %v541, 104
    %v1356 = vpop.permute.xlu0 %1355
    %v1358 = vsel %vm543, %v1353, 0
    %v1361 = vsel %vm665, %v1356, 0
    %1363 = vmatprep.subr.bf16.mxu0 0
    %1364 = vmatpush1.bf16.msra.mxu0 %v1361
    %1365 = vmatprep.subr.bf16.mxu0 0
    %1366 = vmatpush1.bf16.msra.mxu0 0
    %1367 = vmatprep.subr.bf16.mxu0 0
    %1368 = vmatpush1.bf16.msra.mxu0 0
    %1369 = vmatprep.subr.bf16.mxu0 0
    %1370 = vmatpush1.bf16.msra.mxu0 0
    %1371 = vmatprep.subr.bf16.mxu0 0
    %1372 = vmatpush1.bf16.msra.mxu0 0
    %1373 = vmatprep.subr.bf16.mxu0 0
    %1374 = vmatpush1.bf16.msra.mxu0 0
    %1375 = vmatprep.subr.bf16.mxu0 0
    %1376 = vmatpush1.bf16.msra.mxu0 0
    %1377 = vmatprep.subr.bf16.mxu0 0
    %1378 = vmatpush1.bf16.msra.mxu0 0
    %1379 = vmatprep.subr.bf16.mxu0 0
    %1380 = vmatpush1.bf16.msra.mxu0 0
    %1381 = vmatprep.subr.bf16.mxu0 0
    %1382 = vmatpush1.bf16.msra.mxu0 0
    %1383 = vmatprep.subr.bf16.mxu0 0
    %1384 = vmatpush1.bf16.msra.mxu0 0
    %1385 = vmatprep.subr.bf16.mxu0 0
    %1386 = vmatpush1.bf16.msra.mxu0 0
    %1387 = vmatprep.subr.bf16.mxu0 0
    %1388 = vmatpush1.bf16.msra.mxu0 0
    %1389 = vmatprep.subr.bf16.mxu0 0
    %1390 = vmatpush1.bf16.msra.mxu0 0
    %1391 = vmatprep.subr.bf16.mxu0 0
    %1392 = vmatpush1.bf16.msra.mxu0 0
    %1393 = vmatprep.subr.bf16.mxu0 0
    %1394 = vmatpush1.bf16.msra.mxu0 0
    %1395 = vmatprep.mubr.bf16.mxu0 0
    %1396 = vmatmul.mubr.bf16.gmra.mrb[0].mxu0 %v1358
    %v1397 = vpop.f32.mrb[0].mxu0
    %v1398 = vadd.f32 0.0, %v1397
    %v1399 = vpop.f32.mrb[0].mxu0
    %v1400 = vpop.f32.mrb[0].mxu0
    %v1401 = vpop.f32.mrb[0].mxu0
    %1402 = vdwg.mxu0
    %1403 = vrot.lane.b32.xlu0 %v542, 104
    %v1404 = vpop.permute.xlu0 %1403
    %v1406 = vsel %vm543, %v1354, 0
    %v1409 = vsel %vm665, %v1404, 0
    %1411 = vmatprep.subr.bf16.mxu0 0
    %1412 = vmatpush1.bf16.msra.mxu0 %v1409
    %1413 = vmatprep.subr.bf16.mxu0 0
    %1414 = vmatpush1.bf16.msra.mxu0 0
    %1415 = vmatprep.subr.bf16.mxu0 0
    %1416 = vmatpush1.bf16.msra.mxu0 0
    %1417 = vmatprep.subr.bf16.mxu0 0
    %1418 = vmatpush1.bf16.msra.mxu0 0
    %1419 = vmatprep.subr.bf16.mxu0 0
    %1420 = vmatpush1.bf16.msra.mxu0 0
    %1421 = vmatprep.subr.bf16.mxu0 0
    %1422 = vmatpush1.bf16.msra.mxu0 0
    %1423 = vmatprep.subr.bf16.mxu0 0
    %1424 = vmatpush1.bf16.msra.mxu0 0
    %1425 = vmatprep.subr.bf16.mxu0 0
    %1426 = vmatpush1.bf16.msra.mxu0 0
    %1427 = vmatprep.subr.bf16.mxu0 0
    %1428 = vmatpush1.bf16.msra.mxu0 0
    %1429 = vmatprep.subr.bf16.mxu0 0
    %1430 = vmatpush1.bf16.msra.mxu0 0
    %1431 = vmatprep.subr.bf16.mxu0 0
    %1432 = vmatpush1.bf16.msra.mxu0 0
    %1433 = vmatprep.subr.bf16.mxu0 0
    %1434 = vmatpush1.bf16.msra.mxu0 0
    %1435 = vmatprep.subr.bf16.mxu0 0
    %1436 = vmatpush1.bf16.msra.mxu0 0
    %1437 = vmatprep.subr.bf16.mxu0 0
    %1438 = vmatpush1.bf16.msra.mxu0 0
    %1439 = vmatprep.subr.bf16.mxu0 0
    %1440 = vmatpush1.bf16.msra.mxu0 0
    %1441 = vmatprep.subr.bf16.mxu0 0
    %1442 = vmatpush1.bf16.msra.mxu0 0
    %1443 = vmatprep.mubr.bf16.mxu0 0
    %1444 = vmatmul.mubr.bf16.gmra.mrb[0].mxu0 %v1406
    %v1445 = vpop.f32.mrb[0].mxu0
    %v1446 = vadd.f32 0.0, %v1445
    %v1447 = vpop.f32.mrb[0].mxu0
    %v1448 = vpop.f32.mrb[0].mxu0
    %v1449 = vpop.f32.mrb[0].mxu0
    %1450 = vdwg.mxu0
    %1453 = vrot.lane.b32.xlu0 %v1398, 24
    %v1454 = vpop.permute.xlu0 %1453
    %1455 = vrot.lane.b32.xlu0 %v1446, 24
    %v1456 = vpop.permute.xlu0 %1455
    %vm1459 = vcmask 261312
    %1460 = vst.msk [vmem:[#allocation2] sm:$0xff] %vm1459, %v1454
    %1461 = vst.msk [vmem:[#allocation2 + $0x8] sm:$0xff] %vm1459, %v1456
    %v1462 = vld [vmem:[#allocation2] sm:$0xff]
    %v1463 = vld [vmem:[#allocation2 + $0x8] sm:$0xff]
    %v1464 = vpack.c.bf16 %v1463, %v1462
    %v1466 = vlaneseq
    %v1467 = vshrl.u32 %v1466, 7
    %v1468 = vsub.s32 0, %v1467
    %v1469 = vrot.slane %v265, %v1468
    %v1475 = vunpack.c.l.b16 %v261
    %v1476 = vunpack.c.l.b16 %v262
    %v1477 = vunpack.c.l.b16 %v263
    %v1478 = vunpack.c.l.b16 %v264
    %v1479 = vpack.c.b16 %v1476, %v1475
    %v1480 = vpack.c.b16 %v1478, %v1477
    %v1484 = vsel %vm312, %v1464, 0
    %1486 = vmatprep.subr.bf16.mxu0 0
    %1487 = vmatpush1.bf16.msra.mxu0 %v1479
    %1488 = vmatprep.subr.bf16.mxu0 0
    %1489 = vmatpush1.bf16.msra.mxu0 %v1480
    %1490 = vmatprep.subr.bf16.mxu0 0
    %1491 = vmatpush1.bf16.msra.mxu0 0
    %1492 = vmatprep.subr.bf16.mxu0 0
    %1493 = vmatpush1.bf16.msra.mxu0 0
    %1494 = vmatprep.subr.bf16.mxu0 0
    %1495 = vmatpush1.bf16.msra.mxu0 0
    %1496 = vmatprep.subr.bf16.mxu0 0
    %1497 = vmatpush1.bf16.msra.mxu0 0
    %1498 = vmatprep.subr.bf16.mxu0 0
    %1499 = vmatpush1.bf16.msra.mxu0 0
    %1500 = vmatprep.subr.bf16.mxu0 0
    %1501 = vmatpush1.bf16.msra.mxu0 0
    %1502 = vmatprep.subr.bf16.mxu0 0
    %1503 = vmatpush1.bf16.msra.mxu0 0
    %1504 = vmatprep.subr.bf16.mxu0 0
    %1505 = vmatpush1.bf16.msra.mxu0 0
    %1506 = vmatprep.subr.bf16.mxu0 0
    %1507 = vmatpush1.bf16.msra.mxu0 0
    %1508 = vmatprep.subr.bf16.mxu0 0
    %1509 = vmatpush1.bf16.msra.mxu0 0
    %1510 = vmatprep.subr.bf16.mxu0 0
    %1511 = vmatpush1.bf16.msra.mxu0 0
    %1512 = vmatprep.subr.bf16.mxu0 0
    %1513 = vmatpush1.bf16.msra.mxu0 0
    %1514 = vmatprep.subr.bf16.mxu0 0
    %1515 = vmatpush1.bf16.msra.mxu0 0
    %1516 = vmatprep.subr.bf16.mxu0 0
    %1517 = vmatpush1.bf16.msra.mxu0 0
    %1518 = vmatprep.mubr.bf16.mxu0 0
    %1519 = vmatmul.mubr.bf16.gmra.mrb[0].mxu0 %v1484
    %v1520 = vpop.f32.mrb[0].mxu0
    %v1521 = vadd.f32 %v1469, %v1520
    %v1522 = vpop.f32.mrb[0].mxu0
    %v1523 = vpop.f32.mrb[0].mxu0
    %v1524 = vadd.f32 %v1469, %v1523
    %v1525 = vpop.f32.mrb[0].mxu0
    %1526 = vdwg.mxu0
    %v1527 = vadd.f32 %v1521, %v354
    %v1528 = vadd.f32 %v1524, %v355
    %v1529 = vsel %vm312, %v1527, 0.0
    %1530 = vadd.xlane.f32.xlu0 %v1529
    %v1531 = vpop.xlane.xlu0 %1530
    %v1532 = vsel %vm312, %v1528, 0.0
    %1533 = vadd.xlane.f32.xlu0 %v1532
    %v1534 = vpop.xlane.xlu0 %1533
    %v1535 = vmul.f32 %v1531, %v319
    %v1536 = vmul.f32 %v1534, %v319
    %v1537 = vsub.f32 %v1527, %v1535
    %v1538 = vsub.f32 %v1528, %v1536
    %v1539 = vmul.f32 %v1537, %v1537
    %v1540 = vmul.f32 %v1538, %v1538
    %v1541 = vsel %vm312, %v1539, 0.0
    %1542 = vadd.xlane.f32.xlu0 %v1541
    %v1543 = vpop.xlane.xlu0 %1542
    %v1544 = vsel %vm312, %v1540, 0.0
    %1545 = vadd.xlane.f32.xlu0 %v1544
    %v1546 = vpop.xlane.xlu0 %1545
    %v1547 = vmul.f32 %v1543, %v319
    %v1548 = vmul.f32 %v1546, %v319
    %v1549 = vadd.f32 %v1547, 1e-12
    %v1550 = vadd.f32 %v1548, 1e-12
    %v1551 = vrsqrt.pop %v1549
    %v1552 = vrsqrt.pop %v1550
    %v1553 = vmul.f32 %v1537, %v1551
    %v1554 = vmul.f32 %v1538, %v1552
    %v1556 = vlaneseq
    %v1557 = vshrl.u32 %v1556, 7
    %v1558 = vsub.s32 0, %v1557
    %v1559 = vrot.slane %v266, %v1558
    %v1561 = vmul.f32 %v1553, %v1559
    %v1562 = vmul.f32 %v1554, %v1559
    %v1564 = vlaneseq
    %v1565 = vshrl.u32 %v1564, 7
    %v1566 = vsub.s32 0, %v1565
    %v1567 = vrot.slane %v267, %v1566
    %v1569 = vadd.f32 %v1561, %v1567
    %v1570 = vadd.f32 %v1562, %v1567
    %v1571 = vld [vmem:[%s3] sm:$0xff]
    %v1572 = vld [vmem:[%s3 + $0x8] sm:$0xff]
    %v1573 = vld [vmem:[%s3 + $0x10] sm:$0xff]
    %v1574 = vld [vmem:[%s3 + $0x18] sm:$0xff]
    %v1575 = vpack.c.bf16 %v1570, %v1569
    %v1576 = vpack.c.bf16 %v1572, %v1571
    %v1577 = vpack.c.bf16 %v1574, %v1573
    %v1579 = vlaneseq
    %v1580 = vshrl.u32 %v1579, 7
    %v1581 = vsub.s32 0, %v1580
    %v1582 = vrot.slane %v272, %v1581
    %v1588 = vunpack.c.l.b16 %v268
    %v1589 = vunpack.c.l.b16 %v269
    %v1590 = vunpack.c.l.b16 %v270
    %v1591 = vunpack.c.l.b16 %v271
    %v1592 = vpack.c.b16 %v1589, %v1588
    %v1593 = vpack.c.b16 %v1591, %v1590
    %v1597 = vsel %vm312, %v1575, 0
    %1599 = vmatprep.subr.bf16.mxu0 0
    %1600 = vmatpush1.bf16.msra.mxu0 %v1592
    %1601 = vmatprep.subr.bf16.mxu0 0
    %1602 = vmatpush1.bf16.msra.mxu0 %v1593
    %1603 = vmatprep.subr.bf16.mxu0 0
    %1604 = vmatpush1.bf16.msra.mxu0 0
    %1605 = vmatprep.subr.bf16.mxu0 0
    %1606 = vmatpush1.bf16.msra.mxu0 0
    %1607 = vmatprep.subr.bf16.mxu0 0
    %1608 = vmatpush1.bf16.msra.mxu0 0
    %1609 = vmatprep.subr.bf16.mxu0 0
    %1610 = vmatpush1.bf16.msra.mxu0 0
    %1611 = vmatprep.subr.bf16.mxu0 0
    %1612 = vmatpush1.bf16.msra.mxu0 0
    %1613 = vmatprep.subr.bf16.mxu0 0
    %1614 = vmatpush1.bf16.msra.mxu0 0
    %1615 = vmatprep.subr.bf16.mxu0 0
    %1616 = vmatpush1.bf16.msra.mxu0 0
    %1617 = vmatprep.subr.bf16.mxu0 0
    %1618 = vmatpush1.bf16.msra.mxu0 0
    %1619 = vmatprep.subr.bf16.mxu0 0
    %1620 = vmatpush1.bf16.msra.mxu0 0
    %1621 = vmatprep.subr.bf16.mxu0 0
    %1622 = vmatpush1.bf16.msra.mxu0 0
    %1623 = vmatprep.subr.bf16.mxu0 0
    %1624 = vmatpush1.bf16.msra.mxu0 0
    %1625 = vmatprep.subr.bf16.mxu0 0
    %1626 = vmatpush1.bf16.msra.mxu0 0
    %1627 = vmatprep.subr.bf16.mxu0 0
    %1628 = vmatpush1.bf16.msra.mxu0 0
    %1629 = vmatprep.subr.bf16.mxu0 0
    %1630 = vmatpush1.bf16.msra.mxu0 0
    %1631 = vmatprep.mubr.bf16.mxu0 0
    %1632 = vmatmul.mubr.bf16.gmra.mrb[0].mxu0 %v1597
    %v1633 = vpop.f32.mrb[0].mxu0
    %v1634 = vadd.f32 %v1582, %v1633
    %v1635 = vpop.f32.mrb[0].mxu0
    %v1636 = vpop.f32.mrb[0].mxu0
    %v1637 = vadd.f32 %v1582, %v1636
    %v1638 = vpop.f32.mrb[0].mxu0
    %1639 = vdwg.mxu0
    %v1641 = vlaneseq
    %v1642 = vshrl.u32 %v1641, 7
    %v1643 = vsub.s32 0, %v1642
    %v1644 = vrot.slane %v279, %v1643
    %v1652 = vunpack.c.l.b16 %v273
    %v1653 = vunpack.c.l.b16 %v274
    %v1654 = vunpack.c.l.b16 %v275
    %v1655 = vunpack.c.l.b16 %v276
    %v1656 = vunpack.c.l.b16 %v277
    %v1657 = vunpack.c.l.b16 %v278
    %v1658 = vpack.c.b16 %v1653, %v1652
    %v1659 = vpack.c.b16 %v1655, %v1654
    %v1660 = vpack.c.b16 %v1657, %v1656
    %vm1664 = vcmask 392192
    %v1666 = vsel %vm1664, %v1576, 0
    %v1669 = vsel %vm1664, %v1577, 0
    %1671 = vmatprep.subr.bf16.mxu0 0
    %1672 = vmatpush1.bf16.msra.mxu0 %v1658
    %1673 = vmatprep.subr.bf16.mxu0 0
    %1674 = vmatpush1.bf16.msra.mxu0 %v1659
    %1675 = vmatprep.subr.bf16.mxu0 0
    %1676 = vmatpush1.bf16.msra.mxu0 %v1660
    %1677 = vmatprep.subr.bf16.mxu0 0
    %1678 = vmatpush1.bf16.msra.mxu0 0
    %1679 = vmatprep.subr.bf16.mxu0 0
    %1680 = vmatpush1.bf16.msra.mxu0 0
    %1681 = vmatprep.subr.bf16.mxu0 0
    %1682 = vmatpush1.bf16.msra.mxu0 0
    %1683 = vmatprep.subr.bf16.mxu0 0
    %1684 = vmatpush1.bf16.msra.mxu0 0
    %1685 = vmatprep.subr.bf16.mxu0 0
    %1686 = vmatpush1.bf16.msra.mxu0 0
    %1687 = vmatprep.subr.bf16.mxu0 0
    %1688 = vmatpush1.bf16.msra.mxu0 0
    %1689 = vmatprep.subr.bf16.mxu0 0
    %1690 = vmatpush1.bf16.msra.mxu0 0
    %1691 = vmatprep.subr.bf16.mxu0 0
    %1692 = vmatpush1.bf16.msra.mxu0 0
    %1693 = vmatprep.subr.bf16.mxu0 0
    %1694 = vmatpush1.bf16.msra.mxu0 0
    %1695 = vmatprep.subr.bf16.mxu0 0
    %1696 = vmatpush1.bf16.msra.mxu0 0
    %1697 = vmatprep.subr.bf16.mxu0 0
    %1698 = vmatpush1.bf16.msra.mxu0 0
    %1699 = vmatprep.subr.bf16.mxu0 0
    %1700 = vmatpush1.bf16.msra.mxu0 0
    %1701 = vmatprep.subr.bf16.mxu0 0
    %1702 = vmatpush1.bf16.msra.mxu0 0
    %1703 = vmatprep.mubr.bf16.mxu0 0
    %1704 = vmatmul.mubr.bf16.gmra.mrb[0].mxu0 %v1666
    %v1705 = vpop.f32.mrb[0].mxu0
    %v1706 = vadd.f32 %v1644, %v1705
    %v1707 = vpop.f32.mrb[0].mxu0
    %v1708 = vpop.f32.mrb[0].mxu0
    %v1709 = vadd.f32 %v1644, %v1708
    %v1710 = vpop.f32.mrb[0].mxu0
    %1711 = vmatprep.mubr.bf16.mxu0 0
    %1712 = vmatmul.mubr.bf16.gmra.mrb[0].mxu0 %v1669
    %v1713 = vpop.f32.mrb[0].mxu0
    %v1714 = vadd.f32 %v1644, %v1713
    %v1715 = vpop.f32.mrb[0].mxu0
    %v1716 = vpop.f32.mrb[0].mxu0
    %v1717 = vadd.f32 %v1644, %v1716
    %v1718 = vpop.f32.mrb[0].mxu0
    %1719 = vdwg.mxu0
    %v1721 = vlaneseq
    %v1722 = vshrl.u32 %v1721, 7
    %v1723 = vsub.s32 0, %v1722
    %v1724 = vrot.slane %v286, %v1723
    %v1732 = vunpack.c.l.b16 %v280
    %v1733 = vunpack.c.l.b16 %v281
    %v1734 = vunpack.c.l.b16 %v282
    %v1735 = vunpack.c.l.b16 %v283
    %v1736 = vunpack.c.l.b16 %v284
    %v1737 = vunpack.c.l.b16 %v285
    %v1738 = vpack.c.b16 %v1733, %v1732
    %v1739 = vpack.c.b16 %v1735, %v1734
    %v1740 = vpack.c.b16 %v1737, %v1736
    %1744 = vmatprep.subr.bf16.mxu0 0
    %1745 = vmatpush1.bf16.msra.mxu0 %v1738
    %1746 = vmatprep.subr.bf16.mxu0 0
    %1747 = vmatpush1.bf16.msra.mxu0 %v1739
    %1748 = vmatprep.subr.bf16.mxu0 0
    %1749 = vmatpush1.bf16.msra.mxu0 %v1740
    %1750 = vmatprep.subr.bf16.mxu0 0
    %1751 = vmatpush1.bf16.msra.mxu0 0
    %1752 = vmatprep.subr.bf16.mxu0 0
    %1753 = vmatpush1.bf16.msra.mxu0 0
    %1754 = vmatprep.subr.bf16.mxu0 0
    %1755 = vmatpush1.bf16.msra.mxu0 0
    %1756 = vmatprep.subr.bf16.mxu0 0
    %1757 = vmatpush1.bf16.msra.mxu0 0
    %1758 = vmatprep.subr.bf16.mxu0 0
    %1759 = vmatpush1.bf16.msra.mxu0 0
    %1760 = vmatprep.subr.bf16.mxu0 0
    %1761 = vmatpush1.bf16.msra.mxu0 0
    %1762 = vmatprep.subr.bf16.mxu0 0
    %1763 = vmatpush1.bf16.msra.mxu0 0
    %1764 = vmatprep.subr.bf16.mxu0 0
    %1765 = vmatpush1.bf16.msra.mxu0 0
    %1766 = vmatprep.subr.bf16.mxu0 0
    %1767 = vmatpush1.bf16.msra.mxu0 0
    %1768 = vmatprep.subr.bf16.mxu0 0
    %1769 = vmatpush1.bf16.msra.mxu0 0
    %1770 = vmatprep.subr.bf16.mxu0 0
    %1771 = vmatpush1.bf16.msra.mxu0 0
    %1772 = vmatprep.subr.bf16.mxu0 0
    %1773 = vmatpush1.bf16.msra.mxu0 0
    %1774 = vmatprep.subr.bf16.mxu0 0
    %1775 = vmatpush1.bf16.msra.mxu0 0
    %1776 = vmatprep.mubr.bf16.mxu0 0
    %1777 = vmatmul.mubr.bf16.gmra.mrb[0].mxu0 %v1666
    %v1778 = vpop.f32.mrb[0].mxu0
    %v1779 = vadd.f32 %v1724, %v1778
    %v1780 = vpop.f32.mrb[0].mxu0
    %v1781 = vpop.f32.mrb[0].mxu0
    %v1782 = vadd.f32 %v1724, %v1781
    %v1783 = vpop.f32.mrb[0].mxu0
    %1784 = vmatprep.mubr.bf16.mxu0 0
    %1785 = vmatmul.mubr.bf16.gmra.mrb[0].mxu0 %v1669
    %v1786 = vpop.f32.mrb[0].mxu0
    %v1787 = vadd.f32 %v1724, %v1786
    %v1788 = vpop.f32.mrb[0].mxu0
    %v1789 = vpop.f32.mrb[0].mxu0
    %v1790 = vadd.f32 %v1724, %v1789
    %v1791 = vpop.f32.mrb[0].mxu0
    %1792 = vdwg.mxu0
    %v1793 = vpack.c.bf16 %v1634, %v1634
    %v1794 = vpack.c.bf16 %v1637, %v1637
    %v1795 = vpack.c.bf16 %v1709, %v1706
    %v1796 = vpack.c.bf16 %v1717, %v1714
    %v1797 = vpack.c.bf16 %v1782, %v1779
    %v1798 = vpack.c.bf16 %v1790, %v1787
    %v1800 = vsel %vm543, %v1793, 0
    %v1803 = vsel %vm543, %v1795, 0
    %1805 = vmatprep.subr.bf16.mxu0 0
    %1806 = vmatpush1.bf16.xpose.msra.mxu0 %v1803
    %1807 = vmatprep.subr.bf16.mxu0 0
    %1808 = vmatpush1.bf16.xpose.msra.mxu0 0
    %1809 = vmatprep.subr.bf16.mxu0 0
    %1810 = vmatpush1.bf16.xpose.msra.mxu0 0
    %1811 = vmatprep.subr.bf16.mxu0 0
    %1812 = vmatpush1.bf16.xpose.msra.mxu0 0
    %1813 = vmatprep.subr.bf16.mxu0 0
    %1814 = vmatpush1.bf16.xpose.msra.mxu0 0
    %1815 = vmatprep.subr.bf16.mxu0 0
    %1816 = vmatpush1.bf16.xpose.msra.mxu0 0
    %1817 = vmatprep.subr.bf16.mxu0 0
    %1818 = vmatpush1.bf16.xpose.msra.mxu0 0
    %1819 = vmatprep.subr.bf16.mxu0 0
    %1820 = vmatpush1.bf16.xpose.msra.mxu0 0
    %1821 = vmatprep.subr.bf16.mxu0 0
    %1822 = vmatpush1.bf16.xpose.msra.mxu0 0
    %1823 = vmatprep.subr.bf16.mxu0 0
    %1824 = vmatpush1.bf16.xpose.msra.mxu0 0
    %1825 = vmatprep.subr.bf16.mxu0 0
    %1826 = vmatpush1.bf16.xpose.msra.mxu0 0
    %1827 = vmatprep.subr.bf16.mxu0 0
    %1828 = vmatpush1.bf16.xpose.msra.mxu0 0
    %1829 = vmatprep.subr.bf16.mxu0 0
    %1830 = vmatpush1.bf16.xpose.msra.mxu0 0
    %1831 = vmatprep.subr.bf16.mxu0 0
    %1832 = vmatpush1.bf16.xpose.msra.mxu0 0
    %1833 = vmatprep.subr.bf16.mxu0 0
    %1834 = vmatpush1.bf16.xpose.msra.mxu0 0
    %1835 = vmatprep.subr.bf16.mxu0 0
    %1836 = vmatpush1.bf16.xpose.msra.mxu0 0
    %1837 = vmatprep.mubr.bf16.mxu0 0
    %1838 = vmatmul.mubr.bf16.gmra.mrb[0].mxu0 %v1800
    %v1839 = vpop.f32.mrb[0].mxu0
    %v1840 = vadd.f32 0.0, %v1839
    %v1841 = vpop.f32.mrb[0].mxu0
    %v1842 = vpop.f32.mrb[0].mxu0
    %v1843 = vpop.f32.mrb[0].mxu0
    %1844 = vdwg.mxu0
    %v1846 = vsel %vm543, %v1794, 0
    %v1849 = vsel %vm543, %v1796, 0
    %1851 = vmatprep.subr.bf16.mxu0 0
    %1852 = vmatpush1.bf16.xpose.msra.mxu0 %v1849
    %1853 = vmatprep.subr.bf16.mxu0 0
    %1854 = vmatpush1.bf16.xpose.msra.mxu0 0
    %1855 = vmatprep.subr.bf16.mxu0 0
    %1856 = vmatpush1.bf16.xpose.msra.mxu0 0
    %1857 = vmatprep.subr.bf16.mxu0 0
    %1858 = vmatpush1.bf16.xpose.msra.mxu0 0
    %1859 = vmatprep.subr.bf16.mxu0 0
    %1860 = vmatpush1.bf16.xpose.msra.mxu0 0
    %1861 = vmatprep.subr.bf16.mxu0 0
    %1862 = vmatpush1.bf16.xpose.msra.mxu0 0
    %1863 = vmatprep.subr.bf16.mxu0 0
    %1864 = vmatpush1.bf16.xpose.msra.mxu0 0
    %1865 = vmatprep.subr.bf16.mxu0 0
    %1866 = vmatpush1.bf16.xpose.msra.mxu0 0
    %1867 = vmatprep.subr.bf16.mxu0 0
    %1868 = vmatpush1.bf16.xpose.msra.mxu0 0
    %1869 = vmatprep.subr.bf16.mxu0 0
    %1870 = vmatpush1.bf16.xpose.msra.mxu0 0
    %1871 = vmatprep.subr.bf16.mxu0 0
    %1872 = vmatpush1.bf16.xpose.msra.mxu0 0
    %1873 = vmatprep.subr.bf16.mxu0 0
    %1874 = vmatpush1.bf16.xpose.msra.mxu0 0
    %1875 = vmatprep.subr.bf16.mxu0 0
    %1876 = vmatpush1.bf16.xpose.msra.mxu0 0
    %1877 = vmatprep.subr.bf16.mxu0 0
    %1878 = vmatpush1.bf16.xpose.msra.mxu0 0
    %1879 = vmatprep.subr.bf16.mxu0 0
    %1880 = vmatpush1.bf16.xpose.msra.mxu0 0
    %1881 = vmatprep.subr.bf16.mxu0 0
    %1882 = vmatpush1.bf16.xpose.msra.mxu0 0
    %1883 = vmatprep.mubr.bf16.mxu0 0
    %1884 = vmatmul.mubr.bf16.gmra.mrb[0].mxu0 %v1846
    %v1885 = vpop.f32.mrb[0].mxu0
    %v1886 = vadd.f32 0.0, %v1885
    %v1887 = vpop.f32.mrb[0].mxu0
    %v1888 = vpop.f32.mrb[0].mxu0
    %v1889 = vpop.f32.mrb[0].mxu0
    %1890 = vdwg.mxu0
    %v1891 = vmul.f32 %v1840, 0.35355338
    %v1892 = vmul.f32 %v1886, 0.35355338
    %vm1893 = vcmask 130048
    %v1894 = vsel %vm1893, %v1891, -inf
    %1895 = vmax.xlane.f32.xlu0 %v1894
    %v1896 = vpop.xlane.xlu0 %1895
    %v1897 = vsel %vm1893, %v1892, -inf
    %1898 = vmax.xlane.f32.xlu0 %v1897
    %v1899 = vpop.xlane.xlu0 %1898
    %v1900 = vsub.f32 %v1891, %v1896
    %v1901 = vsub.f32 %v1892, %v1899
    %v1902 = vmul.f32 %v1900, 1.442695
    %v1903 = vpow.pop %v1902
    %v1904 = vmul.f32 %v1901, 1.442695
    %v1905 = vpow.pop %v1904
    %v1906 = vsel %vm1893, %v1903, 0.0
    %1907 = vadd.xlane.f32.xlu0 %v1906
    %v1908 = vpop.xlane.xlu0 %1907
    %v1909 = vsel %vm1893, %v1905, 0.0
    %1910 = vadd.xlane.f32.xlu0 %v1909
    %v1911 = vpop.xlane.xlu0 %1910
    %v1912 = vrcp.pop %v1908
    %v1913 = vrcp.pop %v1911
    %v1914 = vmul.f32 %v1903, %v1912
    %v1915 = vmul.f32 %v1905, %v1913
    %v1916 = vpack.c.bf16 %v1914, %v1914
    %v1917 = vpack.c.bf16 %v1915, %v1915
    %v1919 = vsel %vm1893, %v1916, 0
    %1921 = vmatprep.subr.bf16.mxu0 0
    %1922 = vmatpush1.bf16.msra.mxu0 %v1797
    %1923 = vmatprep.subr.bf16.mxu0 0
    %1924 = vmatpush1.bf16.msra.mxu0 0
    %1925 = vmatprep.subr.bf16.mxu0 0
    %1926 = vmatpush1.bf16.msra.mxu0 0
    %1927 = vmatprep.subr.bf16.mxu0 0
    %1928 = vmatpush1.bf16.msra.mxu0 0
    %1929 = vmatprep.subr.bf16.mxu0 0
    %1930 = vmatpush1.bf16.msra.mxu0 0
    %1931 = vmatprep.subr.bf16.mxu0 0
    %1932 = vmatpush1.bf16.msra.mxu0 0
    %1933 = vmatprep.subr.bf16.mxu0 0
    %1934 = vmatpush1.bf16.msra.mxu0 0
    %1935 = vmatprep.subr.bf16.mxu0 0
    %1936 = vmatpush1.bf16.msra.mxu0 0
    %1937 = vmatprep.subr.bf16.mxu0 0
    %1938 = vmatpush1.bf16.msra.mxu0 0
    %1939 = vmatprep.subr.bf16.mxu0 0
    %1940 = vmatpush1.bf16.msra.mxu0 0
    %1941 = vmatprep.subr.bf16.mxu0 0
    %1942 = vmatpush1.bf16.msra.mxu0 0
    %1943 = vmatprep.subr.bf16.mxu0 0
    %1944 = vmatpush1.bf16.msra.mxu0 0
    %1945 = vmatprep.subr.bf16.mxu0 0
    %1946 = vmatpush1.bf16.msra.mxu0 0
    %1947 = vmatprep.subr.bf16.mxu0 0
    %1948 = vmatpush1.bf16.msra.mxu0 0
    %1949 = vmatprep.subr.bf16.mxu0 0
    %1950 = vmatpush1.bf16.msra.mxu0 0
    %1951 = vmatprep.subr.bf16.mxu0 0
    %1952 = vmatpush1.bf16.msra.mxu0 0
    %1953 = vmatprep.mubr.bf16.mxu0 0
    %1954 = vmatmul.mubr.bf16.gmra.mrb[0].mxu0 %v1919
    %v1955 = vpop.f32.mrb[0].mxu0
    %v1956 = vadd.f32 0.0, %v1955
    %v1957 = vpop.f32.mrb[0].mxu0
    %v1958 = vpop.f32.mrb[0].mxu0
    %v1959 = vpop.f32.mrb[0].mxu0
    %1960 = vdwg.mxu0
    %v1962 = vsel %vm1893, %v1917, 0
    %1964 = vmatprep.subr.bf16.mxu0 0
    %1965 = vmatpush1.bf16.msra.mxu0 %v1798
    %1966 = vmatprep.subr.bf16.mxu0 0
    %1967 = vmatpush1.bf16.msra.mxu0 0
    %1968 = vmatprep.subr.bf16.mxu0 0
    %1969 = vmatpush1.bf16.msra.mxu0 0
    %1970 = vmatprep.subr.bf16.mxu0 0
    %1971 = vmatpush1.bf16.msra.mxu0 0
    %1972 = vmatprep.subr.bf16.mxu0 0
    %1973 = vmatpush1.bf16.msra.mxu0 0
    %1974 = vmatprep.subr.bf16.mxu0 0
    %1975 = vmatpush1.bf16.msra.mxu0 0
    %1976 = vmatprep.subr.bf16.mxu0 0
    %1977 = vmatpush1.bf16.msra.mxu0 0
    %1978 = vmatprep.subr.bf16.mxu0 0
    %1979 = vmatpush1.bf16.msra.mxu0 0
    %1980 = vmatprep.subr.bf16.mxu0 0
    %1981 = vmatpush1.bf16.msra.mxu0 0
    %1982 = vmatprep.subr.bf16.mxu0 0
    %1983 = vmatpush1.bf16.msra.mxu0 0
    %1984 = vmatprep.subr.bf16.mxu0 0
    %1985 = vmatpush1.bf16.msra.mxu0 0
    %1986 = vmatprep.subr.bf16.mxu0 0
    %1987 = vmatpush1.bf16.msra.mxu0 0
    %1988 = vmatprep.subr.bf16.mxu0 0
    %1989 = vmatpush1.bf16.msra.mxu0 0
    %1990 = vmatprep.subr.bf16.mxu0 0
    %1991 = vmatpush1.bf16.msra.mxu0 0
    %1992 = vmatprep.subr.bf16.mxu0 0
    %1993 = vmatpush1.bf16.msra.mxu0 0
    %1994 = vmatprep.subr.bf16.mxu0 0
    %1995 = vmatpush1.bf16.msra.mxu0 0
    %1996 = vmatprep.mubr.bf16.mxu0 0
    %1997 = vmatmul.mubr.bf16.gmra.mrb[0].mxu0 %v1962
    %v1998 = vpop.f32.mrb[0].mxu0
    %v1999 = vadd.f32 0.0, %v1998
    %v2000 = vpop.f32.mrb[0].mxu0
    %v2001 = vpop.f32.mrb[0].mxu0
    %v2002 = vpop.f32.mrb[0].mxu0
    %2003 = vdwg.mxu0
    %2004 = vst.msk [vmem:[#allocation2] sm:$0xff] %vm543, %v1956
    %2005 = vst.msk [vmem:[#allocation2 + $0x8] sm:$0xff] %vm543, %v1999
    %2007 = vrot.lane.b32.xlu0 %v1793, 120
    %v2008 = vpop.permute.xlu0 %2007
    %2010 = vrot.lane.b32.xlu0 %v1795, 120
    %v2011 = vpop.permute.xlu0 %2010
    %v2013 = vsel %vm543, %v2008, 0
    %v2016 = vsel %vm543, %v2011, 0
    %2018 = vmatprep.subr.bf16.mxu0 0
    %2019 = vmatpush1.bf16.xpose.msra.mxu0 %v2016
    %2020 = vmatprep.subr.bf16.mxu0 0
    %2021 = vmatpush1.bf16.xpose.msra.mxu0 0
    %2022 = vmatprep.subr.bf16.mxu0 0
    %2023 = vmatpush1.bf16.xpose.msra.mxu0 0
    %2024 = vmatprep.subr.bf16.mxu0 0
    %2025 = vmatpush1.bf16.xpose.msra.mxu0 0
    %2026 = vmatprep.subr.bf16.mxu0 0
    %2027 = vmatpush1.bf16.xpose.msra.mxu0 0
    %2028 = vmatprep.subr.bf16.mxu0 0
    %2029 = vmatpush1.bf16.xpose.msra.mxu0 0
    %2030 = vmatprep.subr.bf16.mxu0 0
    %2031 = vmatpush1.bf16.xpose.msra.mxu0 0
    %2032 = vmatprep.subr.bf16.mxu0 0
    %2033 = vmatpush1.bf16.xpose.msra.mxu0 0
    %2034 = vmatprep.subr.bf16.mxu0 0
    %2035 = vmatpush1.bf16.xpose.msra.mxu0 0
    %2036 = vmatprep.subr.bf16.mxu0 0
    %2037 = vmatpush1.bf16.xpose.msra.mxu0 0
    %2038 = vmatprep.subr.bf16.mxu0 0
    %2039 = vmatpush1.bf16.xpose.msra.mxu0 0
    %2040 = vmatprep.subr.bf16.mxu0 0
    %2041 = vmatpush1.bf16.xpose.msra.mxu0 0
    %2042 = vmatprep.subr.bf16.mxu0 0
    %2043 = vmatpush1.bf16.xpose.msra.mxu0 0
    %2044 = vmatprep.subr.bf16.mxu0 0
    %2045 = vmatpush1.bf16.xpose.msra.mxu0 0
    %2046 = vmatprep.subr.bf16.mxu0 0
    %2047 = vmatpush1.bf16.xpose.msra.mxu0 0
    %2048 = vmatprep.subr.bf16.mxu0 0
    %2049 = vmatpush1.bf16.xpose.msra.mxu0 0
    %2050 = vmatprep.mubr.bf16.mxu0 0
    %2051 = vmatmul.mubr.bf16.gmra.mrb[0].mxu0 %v2013
    %v2052 = vpop.f32.mrb[0].mxu0
    %v2053 = vadd.f32 0.0, %v2052
    %v2054 = vpop.f32.mrb[0].mxu0
    %v2055 = vpop.f32.mrb[0].mxu0
    %v2056 = vpop.f32.mrb[0].mxu0
    %2057 = vdwg.mxu0
    %2059 = vrot.lane.b32.xlu0 %v1794, 120
    %v2060 = vpop.permute.xlu0 %2059
    %2062 = vrot.lane.b32.xlu0 %v1796, 120
    %v2063 = vpop.permute.xlu0 %2062
    %v2065 = vsel %vm543, %v2060, 0
    %v2068 = vsel %vm543, %v2063, 0
    %2070 = vmatprep.subr.bf16.mxu0 0
    %2071 = vmatpush1.bf16.xpose.msra.mxu0 %v2068
    %2072 = vmatprep.subr.bf16.mxu0 0
    %2073 = vmatpush1.bf16.xpose.msra.mxu0 0
    %2074 = vmatprep.subr.bf16.mxu0 0
    %2075 = vmatpush1.bf16.xpose.msra.mxu0 0
    %2076 = vmatprep.subr.bf16.mxu0 0
    %2077 = vmatpush1.bf16.xpose.msra.mxu0 0
    %2078 = vmatprep.subr.bf16.mxu0 0
    %2079 = vmatpush1.bf16.xpose.msra.mxu0 0
    %2080 = vmatprep.subr.bf16.mxu0 0
    %2081 = vmatpush1.bf16.xpose.msra.mxu0 0
    %2082 = vmatprep.subr.bf16.mxu0 0
    %2083 = vmatpush1.bf16.xpose.msra.mxu0 0
    %2084 = vmatprep.subr.bf16.mxu0 0
    %2085 = vmatpush1.bf16.xpose.msra.mxu0 0
    %2086 = vmatprep.subr.bf16.mxu0 0
    %2087 = vmatpush1.bf16.xpose.msra.mxu0 0
    %2088 = vmatprep.subr.bf16.mxu0 0
    %2089 = vmatpush1.bf16.xpose.msra.mxu0 0
    %2090 = vmatprep.subr.bf16.mxu0 0
    %2091 = vmatpush1.bf16.xpose.msra.mxu0 0
    %2092 = vmatprep.subr.bf16.mxu0 0
    %2093 = vmatpush1.bf16.xpose.msra.mxu0 0
    %2094 = vmatprep.subr.bf16.mxu0 0
    %2095 = vmatpush1.bf16.xpose.msra.mxu0 0
    %2096 = vmatprep.subr.bf16.mxu0 0
    %2097 = vmatpush1.bf16.xpose.msra.mxu0 0
    %2098 = vmatprep.subr.bf16.mxu0 0
    %2099 = vmatpush1.bf16.xpose.msra.mxu0 0
    %2100 = vmatprep.subr.bf16.mxu0 0
    %2101 = vmatpush1.bf16.xpose.msra.mxu0 0
    %2102 = vmatprep.mubr.bf16.mxu0 0
    %2103 = vmatmul.mubr.bf16.gmra.mrb[0].mxu0 %v2065
    %v2104 = vpop.f32.mrb[0].mxu0
    %v2105 = vadd.f32 0.0, %v2104
    %v2106 = vpop.f32.mrb[0].mxu0
    %v2107 = vpop.f32.mrb[0].mxu0
    %v2108 = vpop.f32.mrb[0].mxu0
    %2109 = vdwg.mxu0
    %v2110 = vmul.f32 %v2053, 0.35355338
    %v2111 = vmul.f32 %v2105, 0.35355338
    %v2112 = vsel %vm1893, %v2110, -inf
    %2113 = vmax.xlane.f32.xlu0 %v2112
    %v2114 = vpop.xlane.xlu0 %2113
    %v2115 = vsel %vm1893, %v2111, -inf
    %2116 = vmax.xlane.f32.xlu0 %v2115
    %v2117 = vpop.xlane.xlu0 %2116
    %v2118 = vsub.f32 %v2110, %v2114
    %v2119 = vsub.f32 %v2111, %v2117
    %v2120 = vmul.f32 %v2118, 1.442695
    %v2121 = vpow.pop %v2120
    %v2122 = vmul.f32 %v2119, 1.442695
    %v2123 = vpow.pop %v2122
    %v2124 = vsel %vm1893, %v2121, 0.0
    %2125 = vadd.xlane.f32.xlu0 %v2124
    %v2126 = vpop.xlane.xlu0 %2125
    %v2127 = vsel %vm1893, %v2123, 0.0
    %2128 = vadd.xlane.f32.xlu0 %v2127
    %v2129 = vpop.xlane.xlu0 %2128
    %v2130 = vrcp.pop %v2126
    %v2131 = vrcp.pop %v2129
    %v2132 = vmul.f32 %v2121, %v2130
    %v2133 = vmul.f32 %v2123, %v2131
    %v2134 = vpack.c.bf16 %v2132, %v2132
    %v2135 = vpack.c.bf16 %v2133, %v2133
    %2137 = vrot.lane.b32.xlu0 %v1797, 120
    %v2138 = vpop.permute.xlu0 %2137
    %v2141 = vsel %vm1893, %v2134, 0
    %2143 = vmatprep.subr.bf16.mxu0 0
    %2144 = vmatpush1.bf16.msra.mxu0 %v2138
    %2145 = vmatprep.subr.bf16.mxu0 0
    %2146 = vmatpush1.bf16.msra.mxu0 0
    %2147 = vmatprep.subr.bf16.mxu0 0
    %2148 = vmatpush1.bf16.msra.mxu0 0
    %2149 = vmatprep.subr.bf16.mxu0 0
    %2150 = vmatpush1.bf16.msra.mxu0 0
    %2151 = vmatprep.subr.bf16.mxu0 0
    %2152 = vmatpush1.bf16.msra.mxu0 0
    %2153 = vmatprep.subr.bf16.mxu0 0
    %2154 = vmatpush1.bf16.msra.mxu0 0
    %2155 = vmatprep.subr.bf16.mxu0 0
    %2156 = vmatpush1.bf16.msra.mxu0 0
    %2157 = vmatprep.subr.bf16.mxu0 0
    %2158 = vmatpush1.bf16.msra.mxu0 0
    %2159 = vmatprep.subr.bf16.mxu0 0
    %2160 = vmatpush1.bf16.msra.mxu0 0
    %2161 = vmatprep.subr.bf16.mxu0 0
    %2162 = vmatpush1.bf16.msra.mxu0 0
    %2163 = vmatprep.subr.bf16.mxu0 0
    %2164 = vmatpush1.bf16.msra.mxu0 0
    %2165 = vmatprep.subr.bf16.mxu0 0
    %2166 = vmatpush1.bf16.msra.mxu0 0
    %2167 = vmatprep.subr.bf16.mxu0 0
    %2168 = vmatpush1.bf16.msra.mxu0 0
    %2169 = vmatprep.subr.bf16.mxu0 0
    %2170 = vmatpush1.bf16.msra.mxu0 0
    %2171 = vmatprep.subr.bf16.mxu0 0
    %2172 = vmatpush1.bf16.msra.mxu0 0
    %2173 = vmatprep.subr.bf16.mxu0 0
    %2174 = vmatpush1.bf16.msra.mxu0 0
    %2175 = vmatprep.mubr.bf16.mxu0 0
    %2176 = vmatmul.mubr.bf16.gmra.mrb[0].mxu0 %v2141
    %v2177 = vpop.f32.mrb[0].mxu0
    %v2178 = vadd.f32 0.0, %v2177
    %v2179 = vpop.f32.mrb[0].mxu0
    %v2180 = vpop.f32.mrb[0].mxu0
    %v2181 = vpop.f32.mrb[0].mxu0
    %2182 = vdwg.mxu0
    %2184 = vrot.lane.b32.xlu0 %v1798, 120
    %v2185 = vpop.permute.xlu0 %2184
    %v2188 = vsel %vm1893, %v2135, 0
    %2190 = vmatprep.subr.bf16.mxu0 0
    %2191 = vmatpush1.bf16.msra.mxu0 %v2185
    %2192 = vmatprep.subr.bf16.mxu0 0
    %2193 = vmatpush1.bf16.msra.mxu0 0
    %2194 = vmatprep.subr.bf16.mxu0 0
    %2195 = vmatpush1.bf16.msra.mxu0 0
    %2196 = vmatprep.subr.bf16.mxu0 0
    %2197 = vmatpush1.bf16.msra.mxu0 0
    %2198 = vmatprep.subr.bf16.mxu0 0
    %2199 = vmatpush1.bf16.msra.mxu0 0
    %2200 = vmatprep.subr.bf16.mxu0 0
    %2201 = vmatpush1.bf16.msra.mxu0 0
    %2202 = vmatprep.subr.bf16.mxu0 0
    %2203 = vmatpush1.bf16.msra.mxu0 0
    %2204 = vmatprep.subr.bf16.mxu0 0
    %2205 = vmatpush1.bf16.msra.mxu0 0
    %2206 = vmatprep.subr.bf16.mxu0 0
    %2207 = vmatpush1.bf16.msra.mxu0 0
    %2208 = vmatprep.subr.bf16.mxu0 0
    %2209 = vmatpush1.bf16.msra.mxu0 0
    %2210 = vmatprep.subr.bf16.mxu0 0
    %2211 = vmatpush1.bf16.msra.mxu0 0
    %2212 = vmatprep.subr.bf16.mxu0 0
    %2213 = vmatpush1.bf16.msra.mxu0 0
    %2214 = vmatprep.subr.bf16.mxu0 0
    %2215 = vmatpush1.bf16.msra.mxu0 0
    %2216 = vmatprep.subr.bf16.mxu0 0
    %2217 = vmatpush1.bf16.msra.mxu0 0
    %2218 = vmatprep.subr.bf16.mxu0 0
    %2219 = vmatpush1.bf16.msra.mxu0 0
    %2220 = vmatprep.subr.bf16.mxu0 0
    %2221 = vmatpush1.bf16.msra.mxu0 0
    %2222 = vmatprep.mubr.bf16.mxu0 0
    %2223 = vmatmul.mubr.bf16.gmra.mrb[0].mxu0 %v2188
    %v2224 = vpop.f32.mrb[0].mxu0
    %v2225 = vadd.f32 0.0, %v2224
    %v2226 = vpop.f32.mrb[0].mxu0
    %v2227 = vpop.f32.mrb[0].mxu0
    %v2228 = vpop.f32.mrb[0].mxu0
    %2229 = vdwg.mxu0
    %2232 = vrot.lane.b32.xlu0 %v2178, 8
    %v2233 = vpop.permute.xlu0 %2232
    %2234 = vrot.lane.b32.xlu0 %v2225, 8
    %v2235 = vpop.permute.xlu0 %2234
    %2238 = vst.msk [vmem:[#allocation2] sm:$0xff] %vm993, %v2233
    %2239 = vst.msk [vmem:[#allocation2 + $0x8] sm:$0xff] %vm993, %v2235
    %2240 = vrot.lane.b32.xlu0 %v1793, 112
    %v2241 = vpop.permute.xlu0 %2240
    %2242 = vrot.lane.b32.xlu0 %v1795, 112
    %v2243 = vpop.permute.xlu0 %2242
    %v2245 = vsel %vm543, %v2241, 0
    %v2248 = vsel %vm543, %v2243, 0
    %2250 = vmatprep.subr.bf16.mxu0 0
    %2251 = vmatpush1.bf16.xpose.msra.mxu0 %v2248
    %2252 = vmatprep.subr.bf16.mxu0 0
    %2253 = vmatpush1.bf16.xpose.msra.mxu0 0
    %2254 = vmatprep.subr.bf16.mxu0 0
    %2255 = vmatpush1.bf16.xpose.msra.mxu0 0
    %2256 = vmatprep.subr.bf16.mxu0 0
    %2257 = vmatpush1.bf16.xpose.msra.mxu0 0
    %2258 = vmatprep.subr.bf16.mxu0 0
    %2259 = vmatpush1.bf16.xpose.msra.mxu0 0
    %2260 = vmatprep.subr.bf16.mxu0 0
    %2261 = vmatpush1.bf16.xpose.msra.mxu0 0
    %2262 = vmatprep.subr.bf16.mxu0 0
    %2263 = vmatpush1.bf16.xpose.msra.mxu0 0
    %2264 = vmatprep.subr.bf16.mxu0 0
    %2265 = vmatpush1.bf16.xpose.msra.mxu0 0
    %2266 = vmatprep.subr.bf16.mxu0 0
    %2267 = vmatpush1.bf16.xpose.msra.mxu0 0
    %2268 = vmatprep.subr.bf16.mxu0 0
    %2269 = vmatpush1.bf16.xpose.msra.mxu0 0
    %2270 = vmatprep.subr.bf16.mxu0 0
    %2271 = vmatpush1.bf16.xpose.msra.mxu0 0
    %2272 = vmatprep.subr.bf16.mxu0 0
    %2273 = vmatpush1.bf16.xpose.msra.mxu0 0
    %2274 = vmatprep.subr.bf16.mxu0 0
    %2275 = vmatpush1.bf16.xpose.msra.mxu0 0
    %2276 = vmatprep.subr.bf16.mxu0 0
    %2277 = vmatpush1.bf16.xpose.msra.mxu0 0
    %2278 = vmatprep.subr.bf16.mxu0 0
    %2279 = vmatpush1.bf16.xpose.msra.mxu0 0
    %2280 = vmatprep.subr.bf16.mxu0 0
    %2281 = vmatpush1.bf16.xpose.msra.mxu0 0
    %2282 = vmatprep.mubr.bf16.mxu0 0
    %2283 = vmatmul.mubr.bf16.gmra.mrb[0].mxu0 %v2245
    %v2284 = vpop.f32.mrb[0].mxu0
    %v2285 = vadd.f32 0.0, %v2284
    %v2286 = vpop.f32.mrb[0].mxu0
    %v2287 = vpop.f32.mrb[0].mxu0
    %v2288 = vpop.f32.mrb[0].mxu0
    %2289 = vdwg.mxu0
    %2290 = vrot.lane.b32.xlu0 %v1794, 112
    %v2291 = vpop.permute.xlu0 %2290
    %2292 = vrot.lane.b32.xlu0 %v1796, 112
    %v2293 = vpop.permute.xlu0 %2292
    %v2295 = vsel %vm543, %v2291, 0
    %v2298 = vsel %vm543, %v2293, 0
    %2300 = vmatprep.subr.bf16.mxu0 0
    %2301 = vmatpush1.bf16.xpose.msra.mxu0 %v2298
    %2302 = vmatprep.subr.bf16.mxu0 0
    %2303 = vmatpush1.bf16.xpose.msra.mxu0 0
    %2304 = vmatprep.subr.bf16.mxu0 0
    %2305 = vmatpush1.bf16.xpose.msra.mxu0 0
    %2306 = vmatprep.subr.bf16.mxu0 0
    %2307 = vmatpush1.bf16.xpose.msra.mxu0 0
    %2308 = vmatprep.subr.bf16.mxu0 0
    %2309 = vmatpush1.bf16.xpose.msra.mxu0 0
    %2310 = vmatprep.subr.bf16.mxu0 0
    %2311 = vmatpush1.bf16.xpose.msra.mxu0 0
    %2312 = vmatprep.subr.bf16.mxu0 0
    %2313 = vmatpush1.bf16.xpose.msra.mxu0 0
    %2314 = vmatprep.subr.bf16.mxu0 0
    %2315 = vmatpush1.bf16.xpose.msra.mxu0 0
    %2316 = vmatprep.subr.bf16.mxu0 0
    %2317 = vmatpush1.bf16.xpose.msra.mxu0 0
    %2318 = vmatprep.subr.bf16.mxu0 0
    %2319 = vmatpush1.bf16.xpose.msra.mxu0 0
    %2320 = vmatprep.subr.bf16.mxu0 0
    %2321 = vmatpush1.bf16.xpose.msra.mxu0 0
    %2322 = vmatprep.subr.bf16.mxu0 0
    %2323 = vmatpush1.bf16.xpose.msra.mxu0 0
    %2324 = vmatprep.subr.bf16.mxu0 0
    %2325 = vmatpush1.bf16.xpose.msra.mxu0 0
    %2326 = vmatprep.subr.bf16.mxu0 0
    %2327 = vmatpush1.bf16.xpose.msra.mxu0 0
    %2328 = vmatprep.subr.bf16.mxu0 0
    %2329 = vmatpush1.bf16.xpose.msra.mxu0 0
    %2330 = vmatprep.subr.bf16.mxu0 0
    %2331 = vmatpush1.bf16.xpose.msra.mxu0 0
    %2332 = vmatprep.mubr.bf16.mxu0 0
    %2333 = vmatmul.mubr.bf16.gmra.mrb[0].mxu0 %v2295
    %v2334 = vpop.f32.mrb[0].mxu0
    %v2335 = vadd.f32 0.0, %v2334
    %v2336 = vpop.f32.mrb[0].mxu0
    %v2337 = vpop.f32.mrb[0].mxu0
    %v2338 = vpop.f32.mrb[0].mxu0
    %2339 = vdwg.mxu0
    %v2340 = vmul.f32 %v2285, 0.35355338
    %v2341 = vmul.f32 %v2335, 0.35355338
    %v2342 = vsel %vm1893, %v2340, -inf
    %2343 = vmax.xlane.f32.xlu0 %v2342
    %v2344 = vpop.xlane.xlu0 %2343
    %v2345 = vsel %vm1893, %v2341, -inf
    %2346 = vmax.xlane.f32.xlu0 %v2345
    %v2347 = vpop.xlane.xlu0 %2346
    %v2348 = vsub.f32 %v2340, %v2344
    %v2349 = vsub.f32 %v2341, %v2347
    %v2350 = vmul.f32 %v2348, 1.442695
    %v2351 = vpow.pop %v2350
    %v2352 = vmul.f32 %v2349, 1.442695
    %v2353 = vpow.pop %v2352
    %v2354 = vsel %vm1893, %v2351, 0.0
    %2355 = vadd.xlane.f32.xlu0 %v2354
    %v2356 = vpop.xlane.xlu0 %2355
    %v2357 = vsel %vm1893, %v2353, 0.0
    %2358 = vadd.xlane.f32.xlu0 %v2357
    %v2359 = vpop.xlane.xlu0 %2358
    %v2360 = vrcp.pop %v2356
    %v2361 = vrcp.pop %v2359
    %v2362 = vmul.f32 %v2351, %v2360
    %v2363 = vmul.f32 %v2353, %v2361
    %v2364 = vpack.c.bf16 %v2362, %v2362
    %v2365 = vpack.c.bf16 %v2363, %v2363
    %2366 = vrot.lane.b32.xlu0 %v1797, 112
    %v2367 = vpop.permute.xlu0 %2366
    %v2370 = vsel %vm1893, %v2364, 0
    %2372 = vmatprep.subr.bf16.mxu0 0
    %2373 = vmatpush1.bf16.msra.mxu0 %v2367
    %2374 = vmatprep.subr.bf16.mxu0 0
    %2375 = vmatpush1.bf16.msra.mxu0 0
    %2376 = vmatprep.subr.bf16.mxu0 0
    %2377 = vmatpush1.bf16.msra.mxu0 0
    %2378 = vmatprep.subr.bf16.mxu0 0
    %2379 = vmatpush1.bf16.msra.mxu0 0
    %2380 = vmatprep.subr.bf16.mxu0 0
    %2381 = vmatpush1.bf16.msra.mxu0 0
    %2382 = vmatprep.subr.bf16.mxu0 0
    %2383 = vmatpush1.bf16.msra.mxu0 0
    %2384 = vmatprep.subr.bf16.mxu0 0
    %2385 = vmatpush1.bf16.msra.mxu0 0
    %2386 = vmatprep.subr.bf16.mxu0 0
    %2387 = vmatpush1.bf16.msra.mxu0 0
    %2388 = vmatprep.subr.bf16.mxu0 0
    %2389 = vmatpush1.bf16.msra.mxu0 0
    %2390 = vmatprep.subr.bf16.mxu0 0
    %2391 = vmatpush1.bf16.msra.mxu0 0
    %2392 = vmatprep.subr.bf16.mxu0 0
    %2393 = vmatpush1.bf16.msra.mxu0 0
    %2394 = vmatprep.subr.bf16.mxu0 0
    %2395 = vmatpush1.bf16.msra.mxu0 0
    %2396 = vmatprep.subr.bf16.mxu0 0
    %2397 = vmatpush1.bf16.msra.mxu0 0
    %2398 = vmatprep.subr.bf16.mxu0 0
    %2399 = vmatpush1.bf16.msra.mxu0 0
    %2400 = vmatprep.subr.bf16.mxu0 0
    %2401 = vmatpush1.bf16.msra.mxu0 0
    %2402 = vmatprep.subr.bf16.mxu0 0
    %2403 = vmatpush1.bf16.msra.mxu0 0
    %2404 = vmatprep.mubr.bf16.mxu0 0
    %2405 = vmatmul.mubr.bf16.gmra.mrb[0].mxu0 %v2370
    %v2406 = vpop.f32.mrb[0].mxu0
    %v2407 = vadd.f32 0.0, %v2406
    %v2408 = vpop.f32.mrb[0].mxu0
    %v2409 = vpop.f32.mrb[0].mxu0
    %v2410 = vpop.f32.mrb[0].mxu0
    %2411 = vdwg.mxu0
    %2412 = vrot.lane.b32.xlu0 %v1798, 112
    %v2413 = vpop.permute.xlu0 %2412
    %v2416 = vsel %vm1893, %v2365, 0
    %2418 = vmatprep.subr.bf16.mxu0 0
    %2419 = vmatpush1.bf16.msra.mxu0 %v2413
    %2420 = vmatprep.subr.bf16.mxu0 0
    %2421 = vmatpush1.bf16.msra.mxu0 0
    %2422 = vmatprep.subr.bf16.mxu0 0
    %2423 = vmatpush1.bf16.msra.mxu0 0
    %2424 = vmatprep.subr.bf16.mxu0 0
    %2425 = vmatpush1.bf16.msra.mxu0 0
    %2426 = vmatprep.subr.bf16.mxu0 0
    %2427 = vmatpush1.bf16.msra.mxu0 0
    %2428 = vmatprep.subr.bf16.mxu0 0
    %2429 = vmatpush1.bf16.msra.mxu0 0
    %2430 = vmatprep.subr.bf16.mxu0 0
    %2431 = vmatpush1.bf16.msra.mxu0 0
    %2432 = vmatprep.subr.bf16.mxu0 0
    %2433 = vmatpush1.bf16.msra.mxu0 0
    %2434 = vmatprep.subr.bf16.mxu0 0
    %2435 = vmatpush1.bf16.msra.mxu0 0
    %2436 = vmatprep.subr.bf16.mxu0 0
    %2437 = vmatpush1.bf16.msra.mxu0 0
    %2438 = vmatprep.subr.bf16.mxu0 0
    %2439 = vmatpush1.bf16.msra.mxu0 0
    %2440 = vmatprep.subr.bf16.mxu0 0
    %2441 = vmatpush1.bf16.msra.mxu0 0
    %2442 = vmatprep.subr.bf16.mxu0 0
    %2443 = vmatpush1.bf16.msra.mxu0 0
    %2444 = vmatprep.subr.bf16.mxu0 0
    %2445 = vmatpush1.bf16.msra.mxu0 0
    %2446 = vmatprep.subr.bf16.mxu0 0
    %2447 = vmatpush1.bf16.msra.mxu0 0
    %2448 = vmatprep.subr.bf16.mxu0 0
    %2449 = vmatpush1.bf16.msra.mxu0 0
    %2450 = vmatprep.mubr.bf16.mxu0 0
    %2451 = vmatmul.mubr.bf16.gmra.mrb[0].mxu0 %v2416
    %v2452 = vpop.f32.mrb[0].mxu0
    %v2453 = vadd.f32 0.0, %v2452
    %v2454 = vpop.f32.mrb[0].mxu0
    %v2455 = vpop.f32.mrb[0].mxu0
    %v2456 = vpop.f32.mrb[0].mxu0
    %2457 = vdwg.mxu0
    %2460 = vrot.lane.b32.xlu0 %v2407, 16
    %v2461 = vpop.permute.xlu0 %2460
    %2462 = vrot.lane.b32.xlu0 %v2453, 16
    %v2463 = vpop.permute.xlu0 %2462
    %2466 = vst.msk [vmem:[#allocation2] sm:$0xff] %vm1226, %v2461
    %2467 = vst.msk [vmem:[#allocation2 + $0x8] sm:$0xff] %vm1226, %v2463
    %2468 = vrot.lane.b32.xlu0 %v1793, 104
    %v2469 = vpop.permute.xlu0 %2468
    %2470 = vrot.lane.b32.xlu0 %v1795, 104
    %v2471 = vpop.permute.xlu0 %2470
    %v2473 = vsel %vm543, %v2469, 0
    %v2476 = vsel %vm543, %v2471, 0
    %2478 = vmatprep.subr.bf16.mxu0 0
    %2479 = vmatpush1.bf16.xpose.msra.mxu0 %v2476
    %2480 = vmatprep.subr.bf16.mxu0 0
    %2481 = vmatpush1.bf16.xpose.msra.mxu0 0
    %2482 = vmatprep.subr.bf16.mxu0 0
    %2483 = vmatpush1.bf16.xpose.msra.mxu0 0
    %2484 = vmatprep.subr.bf16.mxu0 0
    %2485 = vmatpush1.bf16.xpose.msra.mxu0 0
    %2486 = vmatprep.subr.bf16.mxu0 0
    %2487 = vmatpush1.bf16.xpose.msra.mxu0 0
    %2488 = vmatprep.subr.bf16.mxu0 0
    %2489 = vmatpush1.bf16.xpose.msra.mxu0 0
    %2490 = vmatprep.subr.bf16.mxu0 0
    %2491 = vmatpush1.bf16.xpose.msra.mxu0 0
    %2492 = vmatprep.subr.bf16.mxu0 0
    %2493 = vmatpush1.bf16.xpose.msra.mxu0 0
    %2494 = vmatprep.subr.bf16.mxu0 0
    %2495 = vmatpush1.bf16.xpose.msra.mxu0 0
    %2496 = vmatprep.subr.bf16.mxu0 0
    %2497 = vmatpush1.bf16.xpose.msra.mxu0 0
    %2498 = vmatprep.subr.bf16.mxu0 0
    %2499 = vmatpush1.bf16.xpose.msra.mxu0 0
    %2500 = vmatprep.subr.bf16.mxu0 0
    %2501 = vmatpush1.bf16.xpose.msra.mxu0 0
    %2502 = vmatprep.subr.bf16.mxu0 0
    %2503 = vmatpush1.bf16.xpose.msra.mxu0 0
    %2504 = vmatprep.subr.bf16.mxu0 0
    %2505 = vmatpush1.bf16.xpose.msra.mxu0 0
    %2506 = vmatprep.subr.bf16.mxu0 0
    %2507 = vmatpush1.bf16.xpose.msra.mxu0 0
    %2508 = vmatprep.subr.bf16.mxu0 0
    %2509 = vmatpush1.bf16.xpose.msra.mxu0 0
    %2510 = vmatprep.mubr.bf16.mxu0 0
    %2511 = vmatmul.mubr.bf16.gmra.mrb[0].mxu0 %v2473
    %v2512 = vpop.f32.mrb[0].mxu0
    %v2513 = vadd.f32 0.0, %v2512
    %v2514 = vpop.f32.mrb[0].mxu0
    %v2515 = vpop.f32.mrb[0].mxu0
    %v2516 = vpop.f32.mrb[0].mxu0
    %2517 = vdwg.mxu0
    %2518 = vrot.lane.b32.xlu0 %v1794, 104
    %v2519 = vpop.permute.xlu0 %2518
    %2520 = vrot.lane.b32.xlu0 %v1796, 104
    %v2521 = vpop.permute.xlu0 %2520
    %v2523 = vsel %vm543, %v2519, 0
    %v2526 = vsel %vm543, %v2521, 0
    %2528 = vmatprep.subr.bf16.mxu0 0
    %2529 = vmatpush1.bf16.xpose.msra.mxu0 %v2526
    %2530 = vmatprep.subr.bf16.mxu0 0
    %2531 = vmatpush1.bf16.xpose.msra.mxu0 0
    %2532 = vmatprep.subr.bf16.mxu0 0
    %2533 = vmatpush1.bf16.xpose.msra.mxu0 0
    %2534 = vmatprep.subr.bf16.mxu0 0
    %2535 = vmatpush1.bf16.xpose.msra.mxu0 0
    %2536 = vmatprep.subr.bf16.mxu0 0
    %2537 = vmatpush1.bf16.xpose.msra.mxu0 0
    %2538 = vmatprep.subr.bf16.mxu0 0
    %2539 = vmatpush1.bf16.xpose.msra.mxu0 0
    %2540 = vmatprep.subr.bf16.mxu0 0
    %2541 = vmatpush1.bf16.xpose.msra.mxu0 0
    %2542 = vmatprep.subr.bf16.mxu0 0
    %2543 = vmatpush1.bf16.xpose.msra.mxu0 0
    %2544 = vmatprep.subr.bf16.mxu0 0
    %2545 = vmatpush1.bf16.xpose.msra.mxu0 0
    %2546 = vmatprep.subr.bf16.mxu0 0
    %2547 = vmatpush1.bf16.xpose.msra.mxu0 0
    %2548 = vmatprep.subr.bf16.mxu0 0
    %2549 = vmatpush1.bf16.xpose.msra.mxu0 0
    %2550 = vmatprep.subr.bf16.mxu0 0
    %2551 = vmatpush1.bf16.xpose.msra.mxu0 0
    %2552 = vmatprep.subr.bf16.mxu0 0
    %2553 = vmatpush1.bf16.xpose.msra.mxu0 0
    %2554 = vmatprep.subr.bf16.mxu0 0
    %2555 = vmatpush1.bf16.xpose.msra.mxu0 0
    %2556 = vmatprep.subr.bf16.mxu0 0
    %2557 = vmatpush1.bf16.xpose.msra.mxu0 0
    %2558 = vmatprep.subr.bf16.mxu0 0
    %2559 = vmatpush1.bf16.xpose.msra.mxu0 0
    %2560 = vmatprep.mubr.bf16.mxu0 0
    %2561 = vmatmul.mubr.bf16.gmra.mrb[0].mxu0 %v2523
    %v2562 = vpop.f32.mrb[0].mxu0
    %v2563 = vadd.f32 0.0, %v2562
    %v2564 = vpop.f32.mrb[0].mxu0
    %v2565 = vpop.f32.mrb[0].mxu0
    %v2566 = vpop.f32.mrb[0].mxu0
    %2567 = vdwg.mxu0
    %v2568 = vmul.f32 %v2513, 0.35355338
    %v2569 = vmul.f32 %v2563, 0.35355338
    %v2570 = vsel %vm1893, %v2568, -inf
    %2571 = vmax.xlane.f32.xlu0 %v2570
    %v2572 = vpop.xlane.xlu0 %2571
    %v2573 = vsel %vm1893, %v2569, -inf
    %2574 = vmax.xlane.f32.xlu0 %v2573
    %v2575 = vpop.xlane.xlu0 %2574
    %v2576 = vsub.f32 %v2568, %v2572
    %v2577 = vsub.f32 %v2569, %v2575
    %v2578 = vmul.f32 %v2576, 1.442695
    %v2579 = vpow.pop %v2578
    %v2580 = vmul.f32 %v2577, 1.442695
    %v2581 = vpow.pop %v2580
    %v2582 = vsel %vm1893, %v2579, 0.0
    %2583 = vadd.xlane.f32.xlu0 %v2582
    %v2584 = vpop.xlane.xlu0 %2583
    %v2585 = vsel %vm1893, %v2581, 0.0
    %2586 = vadd.xlane.f32.xlu0 %v2585
    %v2587 = vpop.xlane.xlu0 %2586
    %v2588 = vrcp.pop %v2584
    %v2589 = vrcp.pop %v2587
    %v2590 = vmul.f32 %v2579, %v2588
    %v2591 = vmul.f32 %v2581, %v2589
    %v2592 = vpack.c.bf16 %v2590, %v2590
    %v2593 = vpack.c.bf16 %v2591, %v2591
    %2594 = vrot.lane.b32.xlu0 %v1797, 104
    %v2595 = vpop.permute.xlu0 %2594
    %v2598 = vsel %vm1893, %v2592, 0
    %2600 = vmatprep.subr.bf16.mxu0 0
    %2601 = vmatpush1.bf16.msra.mxu0 %v2595
    %2602 = vmatprep.subr.bf16.mxu0 0
    %2603 = vmatpush1.bf16.msra.mxu0 0
    %2604 = vmatprep.subr.bf16.mxu0 0
    %2605 = vmatpush1.bf16.msra.mxu0 0
    %2606 = vmatprep.subr.bf16.mxu0 0
    %2607 = vmatpush1.bf16.msra.mxu0 0
    %2608 = vmatprep.subr.bf16.mxu0 0
    %2609 = vmatpush1.bf16.msra.mxu0 0
    %2610 = vmatprep.subr.bf16.mxu0 0
    %2611 = vmatpush1.bf16.msra.mxu0 0
    %2612 = vmatprep.subr.bf16.mxu0 0
    %2613 = vmatpush1.bf16.msra.mxu0 0
    %2614 = vmatprep.subr.bf16.mxu0 0
    %2615 = vmatpush1.bf16.msra.mxu0 0
    %2616 = vmatprep.subr.bf16.mxu0 0
    %2617 = vmatpush1.bf16.msra.mxu0 0
    %2618 = vmatprep.subr.bf16.mxu0 0
    %2619 = vmatpush1.bf16.msra.mxu0 0
    %2620 = vmatprep.subr.bf16.mxu0 0
    %2621 = vmatpush1.bf16.msra.mxu0 0
    %2622 = vmatprep.subr.bf16.mxu0 0
    %2623 = vmatpush1.bf16.msra.mxu0 0
    %2624 = vmatprep.subr.bf16.mxu0 0
    %2625 = vmatpush1.bf16.msra.mxu0 0
    %2626 = vmatprep.subr.bf16.mxu0 0
    %2627 = vmatpush1.bf16.msra.mxu0 0
    %2628 = vmatprep.subr.bf16.mxu0 0
    %2629 = vmatpush1.bf16.msra.mxu0 0
    %2630 = vmatprep.subr.bf16.mxu0 0
    %2631 = vmatpush1.bf16.msra.mxu0 0
    %2632 = vmatprep.mubr.bf16.mxu0 0
    %2633 = vmatmul.mubr.bf16.gmra.mrb[0].mxu0 %v2598
    %v2634 = vpop.f32.mrb[0].mxu0
    %v2635 = vadd.f32 0.0, %v2634
    %v2636 = vpop.f32.mrb[0].mxu0
    %v2637 = vpop.f32.mrb[0].mxu0
    %v2638 = vpop.f32.mrb[0].mxu0
    %2639 = vdwg.mxu0
    %2640 = vrot.lane.b32.xlu0 %v1798, 104
    %v2641 = vpop.permute.xlu0 %2640
    %v2644 = vsel %vm1893, %v2593, 0
    %2646 = vmatprep.subr.bf16.mxu0 0
    %2647 = vmatpush1.bf16.msra.mxu0 %v2641
    %2648 = vmatprep.subr.bf16.mxu0 0
    %2649 = vmatpush1.bf16.msra.mxu0 0
    %2650 = vmatprep.subr.bf16.mxu0 0
    %2651 = vmatpush1.bf16.msra.mxu0 0
    %2652 = vmatprep.subr.bf16.mxu0 0
    %2653 = vmatpush1.bf16.msra.mxu0 0
    %2654 = vmatprep.subr.bf16.mxu0 0
    %2655 = vmatpush1.bf16.msra.mxu0 0
    %2656 = vmatprep.subr.bf16.mxu0 0
    %2657 = vmatpush1.bf16.msra.mxu0 0
    %2658 = vmatprep.subr.bf16.mxu0 0
    %2659 = vmatpush1.bf16.msra.mxu0 0
    %2660 = vmatprep.subr.bf16.mxu0 0
    %2661 = vmatpush1.bf16.msra.mxu0 0
    %2662 = vmatprep.subr.bf16.mxu0 0
    %2663 = vmatpush1.bf16.msra.mxu0 0
    %2664 = vmatprep.subr.bf16.mxu0 0
    %2665 = vmatpush1.bf16.msra.mxu0 0
    %2666 = vmatprep.subr.bf16.mxu0 0
    %2667 = vmatpush1.bf16.msra.mxu0 0
    %2668 = vmatprep.subr.bf16.mxu0 0
    %2669 = vmatpush1.bf16.msra.mxu0 0
    %2670 = vmatprep.subr.bf16.mxu0 0
    %2671 = vmatpush1.bf16.msra.mxu0 0
    %2672 = vmatprep.subr.bf16.mxu0 0
    %2673 = vmatpush1.bf16.msra.mxu0 0
    %2674 = vmatprep.subr.bf16.mxu0 0
    %2675 = vmatpush1.bf16.msra.mxu0 0
    %2676 = vmatprep.subr.bf16.mxu0 0
    %2677 = vmatpush1.bf16.msra.mxu0 0
    %2678 = vmatprep.mubr.bf16.mxu0 0
    %2679 = vmatmul.mubr.bf16.gmra.mrb[0].mxu0 %v2644
    %v2680 = vpop.f32.mrb[0].mxu0
    %v2681 = vadd.f32 0.0, %v2680
    %v2682 = vpop.f32.mrb[0].mxu0
    %v2683 = vpop.f32.mrb[0].mxu0
    %v2684 = vpop.f32.mrb[0].mxu0
    %2685 = vdwg.mxu0
    %2688 = vrot.lane.b32.xlu0 %v2635, 24
    %v2689 = vpop.permute.xlu0 %2688
    %2690 = vrot.lane.b32.xlu0 %v2681, 24
    %v2691 = vpop.permute.xlu0 %2690
    %2694 = vst.msk [vmem:[#allocation2] sm:$0xff] %vm1459, %v2689
    %2695 = vst.msk [vmem:[#allocation2 + $0x8] sm:$0xff] %vm1459, %v2691
    %v2696 = vld [vmem:[#allocation2] sm:$0xff]
    %v2697 = vld [vmem:[#allocation2 + $0x8] sm:$0xff]
    %v2698 = vpack.c.bf16 %v2697, %v2696
    %v2700 = vlaneseq
    %v2701 = vshrl.u32 %v2700, 7
    %v2702 = vsub.s32 0, %v2701
    %v2703 = vrot.slane %v291, %v2702
    %v2709 = vunpack.c.l.b16 %v287
    %v2710 = vunpack.c.l.b16 %v288
    %v2711 = vunpack.c.l.b16 %v289
    %v2712 = vunpack.c.l.b16 %v290
    %v2713 = vpack.c.b16 %v2710, %v2709
    %v2714 = vpack.c.b16 %v2712, %v2711
    %v2718 = vsel %vm312, %v2698, 0
    %2720 = vmatprep.subr.bf16.mxu0 0
    %2721 = vmatpush1.bf16.msra.mxu0 %v2713
    %2722 = vmatprep.subr.bf16.mxu0 0
    %2723 = vmatpush1.bf16.msra.mxu0 %v2714
    %2724 = vmatprep.subr.bf16.mxu0 0
    %2725 = vmatpush1.bf16.msra.mxu0 0
    %2726 = vmatprep.subr.bf16.mxu0 0
    %2727 = vmatpush1.bf16.msra.mxu0 0
    %2728 = vmatprep.subr.bf16.mxu0 0
    %2729 = vmatpush1.bf16.msra.mxu0 0
    %2730 = vmatprep.subr.bf16.mxu0 0
    %2731 = vmatpush1.bf16.msra.mxu0 0
    %2732 = vmatprep.subr.bf16.mxu0 0
    %2733 = vmatpush1.bf16.msra.mxu0 0
    %2734 = vmatprep.subr.bf16.mxu0 0
    %2735 = vmatpush1.bf16.msra.mxu0 0
    %2736 = vmatprep.subr.bf16.mxu0 0
    %2737 = vmatpush1.bf16.msra.mxu0 0
    %2738 = vmatprep.subr.bf16.mxu0 0
    %2739 = vmatpush1.bf16.msra.mxu0 0
    %2740 = vmatprep.subr.bf16.mxu0 0
    %2741 = vmatpush1.bf16.msra.mxu0 0
    %2742 = vmatprep.subr.bf16.mxu0 0
    %2743 = vmatpush1.bf16.msra.mxu0 0
    %2744 = vmatprep.subr.bf16.mxu0 0
    %2745 = vmatpush1.bf16.msra.mxu0 0
    %2746 = vmatprep.subr.bf16.mxu0 0
    %2747 = vmatpush1.bf16.msra.mxu0 0
    %2748 = vmatprep.subr.bf16.mxu0 0
    %2749 = vmatpush1.bf16.msra.mxu0 0
    %2750 = vmatprep.subr.bf16.mxu0 0
    %2751 = vmatpush1.bf16.msra.mxu0 0
    %2752 = vmatprep.mubr.bf16.mxu0 0
    %2753 = vmatmul.mubr.bf16.gmra.mrb[0].mxu0 %v2718
    %v2754 = vpop.f32.mrb[0].mxu0
    %v2755 = vadd.f32 %v2703, %v2754
    %v2756 = vpop.f32.mrb[0].mxu0
    %v2757 = vpop.f32.mrb[0].mxu0
    %v2758 = vadd.f32 %v2703, %v2757
    %v2759 = vpop.f32.mrb[0].mxu0
    %2760 = vdwg.mxu0
    %v2761 = vadd.f32 %v2755, %v1569
    %v2762 = vadd.f32 %v2758, %v1570
    %v2763 = vsel %vm312, %v2761, 0.0
    %2764 = vadd.xlane.f32.xlu0 %v2763
    %v2765 = vpop.xlane.xlu0 %2764
    %v2766 = vsel %vm312, %v2762, 0.0
    %2767 = vadd.xlane.f32.xlu0 %v2766
    %v2768 = vpop.xlane.xlu0 %2767
    %v2769 = vmul.f32 %v2765, %v319
    %v2770 = vmul.f32 %v2768, %v319
    %v2771 = vsub.f32 %v2761, %v2769
    %v2772 = vsub.f32 %v2762, %v2770
    %v2773 = vmul.f32 %v2771, %v2771
    %v2774 = vmul.f32 %v2772, %v2772
    %v2775 = vsel %vm312, %v2773, 0.0
    %2776 = vadd.xlane.f32.xlu0 %v2775
    %v2777 = vpop.xlane.xlu0 %2776
    %v2778 = vsel %vm312, %v2774, 0.0
    %2779 = vadd.xlane.f32.xlu0 %v2778
    %v2780 = vpop.xlane.xlu0 %2779
    %v2781 = vmul.f32 %v2777, %v319
    %v2782 = vmul.f32 %v2780, %v319
    %v2783 = vadd.f32 %v2781, 1e-12
    %v2784 = vadd.f32 %v2782, 1e-12
    %v2785 = vrsqrt.pop %v2783
    %v2786 = vrsqrt.pop %v2784
    %v2787 = vmul.f32 %v2771, %v2785
    %v2788 = vmul.f32 %v2772, %v2786
    %v2790 = vlaneseq
    %v2791 = vshrl.u32 %v2790, 7
    %v2792 = vsub.s32 0, %v2791
    %v2793 = vrot.slane %v292, %v2792
    %v2795 = vmul.f32 %v2787, %v2793
    %v2796 = vmul.f32 %v2788, %v2793
    %v2798 = vlaneseq
    %v2799 = vshrl.u32 %v2798, 7
    %v2800 = vsub.s32 0, %v2799
    %v2801 = vrot.slane %v293, %v2800
    %v2803 = vadd.f32 %v2795, %v2801
    %v2804 = vadd.f32 %v2796, %v2801
    %v2805 = vpack.c.bf16 %v2804, %v2803
    %v2807 = vlaneseq
    %v2808 = vshrl.u32 %v2807, 7
    %v2809 = vsub.s32 0, %v2808
    %v2810 = vrot.slane %v298, %v2809
    %v2816 = vunpack.c.l.b16 %v294
    %v2817 = vunpack.c.l.b16 %v295
    %v2818 = vunpack.c.l.b16 %v296
    %v2819 = vunpack.c.l.b16 %v297
    %v2820 = vpack.c.b16 %v2817, %v2816
    %v2821 = vpack.c.b16 %v2819, %v2818
    %v2825 = vsel %vm312, %v2805, 0
    %2827 = vmatprep.subr.bf16.mxu0 0
    %2828 = vmatpush1.bf16.msra.mxu0 %v2820
    %2829 = vmatprep.subr.bf16.mxu0 0
    %2830 = vmatpush1.bf16.msra.mxu0 %v2821
    %2831 = vmatprep.subr.bf16.mxu0 0
    %2832 = vmatpush1.bf16.msra.mxu0 0
    %2833 = vmatprep.subr.bf16.mxu0 0
    %2834 = vmatpush1.bf16.msra.mxu0 0
    %2835 = vmatprep.subr.bf16.mxu0 0
    %2836 = vmatpush1.bf16.msra.mxu0 0
    %2837 = vmatprep.subr.bf16.mxu0 0
    %2838 = vmatpush1.bf16.msra.mxu0 0
    %2839 = vmatprep.subr.bf16.mxu0 0
    %2840 = vmatpush1.bf16.msra.mxu0 0
    %2841 = vmatprep.subr.bf16.mxu0 0
    %2842 = vmatpush1.bf16.msra.mxu0 0
    %2843 = vmatprep.subr.bf16.mxu0 0
    %2844 = vmatpush1.bf16.msra.mxu0 0
    %2845 = vmatprep.subr.bf16.mxu0 0
    %2846 = vmatpush1.bf16.msra.mxu0 0
    %2847 = vmatprep.subr.bf16.mxu0 0
    %2848 = vmatpush1.bf16.msra.mxu0 0
    %2849 = vmatprep.subr.bf16.mxu0 0
    %2850 = vmatpush1.bf16.msra.mxu0 0
    %2851 = vmatprep.subr.bf16.mxu0 0
    %2852 = vmatpush1.bf16.msra.mxu0 0
    %2853 = vmatprep.subr.bf16.mxu0 0
    %2854 = vmatpush1.bf16.msra.mxu0 0
    %2855 = vmatprep.subr.bf16.mxu0 0
    %2856 = vmatpush1.bf16.msra.mxu0 0
    %2857 = vmatprep.subr.bf16.mxu0 0
    %2858 = vmatpush1.bf16.msra.mxu0 0
    %2859 = vmatprep.mubr.bf16.mxu0 0
    %2860 = vmatmul.mubr.bf16.gmra.mrb[0].mxu0 %v2825
    %v2861 = vpop.f32.mrb[0].mxu0
    %v2862 = vadd.f32 %v2810, %v2861
    %v2863 = vpop.f32.mrb[0].mxu0
    %v2864 = vpop.f32.mrb[0].mxu0
    %v2865 = vadd.f32 %v2810, %v2864
    %v2866 = vpop.f32.mrb[0].mxu0
    %2867 = vdwg.mxu0
    %v2868 = vmul.f32 %v2862, %v2862
    %v2869 = vmul.f32 %v2865, %v2865
    %v2870 = vmul.f32 %v2862, %v2868
    %v2871 = vmul.f32 %v2865, %v2869
    %v2872 = vmul.f32 %v2870, 0.044715
    %v2873 = vmul.f32 %v2871, 0.044715
    %v2874 = vadd.f32 %v2862, %v2872
    %v2875 = vadd.f32 %v2865, %v2873
    %v2876 = vmul.f32 %v2874, 0.7978846
    %v2877 = vmul.f32 %v2875, 0.7978846
    %v2878 = vtanh.pop %v2876
    %v2879 = vtanh.pop %v2877
    %v2880 = vadd.f32 %v2878, 1.0
    %v2881 = vadd.f32 %v2879, 1.0
    %v2882 = vmul.f32 %v2880, 0.5
    %v2883 = vmul.f32 %v2881, 0.5
    %v2884 = vmul.f32 %v2862, %v2882
    %v2885 = vmul.f32 %v2865, %v2883
    %v2886 = vpack.c.bf16 %v2885, %v2884
    %v2888 = vlaneseq
    %v2889 = vshrl.u32 %v2888, 7
    %v2890 = vsub.s32 0, %v2889
    %v2891 = vrot.slane %v307, %v2890
    %v2901 = vunpack.c.l.b16 %v299
    %v2902 = vunpack.c.l.b16 %v300
    %v2903 = vunpack.c.l.b16 %v301
    %v2904 = vunpack.c.l.b16 %v302
    %v2905 = vunpack.c.l.b16 %v303
    %v2906 = vunpack.c.l.b16 %v304
    %v2907 = vunpack.c.l.b16 %v305
    %v2908 = vunpack.c.l.b16 %v306
    %v2909 = vpack.c.b16 %v2902, %v2901
    %v2910 = vpack.c.b16 %v2904, %v2903
    %v2911 = vpack.c.b16 %v2906, %v2905
    %v2912 = vpack.c.b16 %v2908, %v2907
    %vm2917 = vcmask 523264
    %v2919 = vsel %vm2917, %v2886, 0
    %2921 = vmatprep.subr.bf16.mxu0 0
    %2922 = vmatpush1.bf16.msra.mxu0 %v2909
    %2923 = vmatprep.subr.bf16.mxu0 0
    %2924 = vmatpush1.bf16.msra.mxu0 %v2910
    %2925 = vmatprep.subr.bf16.mxu0 0
    %2926 = vmatpush1.bf16.msra.mxu0 %v2911
    %2927 = vmatprep.subr.bf16.mxu0 0
    %2928 = vmatpush1.bf16.msra.mxu0 %v2912
    %2929 = vmatprep.subr.bf16.mxu0 0
    %2930 = vmatpush1.bf16.msra.mxu0 0
    %2931 = vmatprep.subr.bf16.mxu0 0
    %2932 = vmatpush1.bf16.msra.mxu0 0
    %2933 = vmatprep.subr.bf16.mxu0 0
    %2934 = vmatpush1.bf16.msra.mxu0 0
    %2935 = vmatprep.subr.bf16.mxu0 0
    %2936 = vmatpush1.bf16.msra.mxu0 0
    %2937 = vmatprep.subr.bf16.mxu0 0
    %2938 = vmatpush1.bf16.msra.mxu0 0
    %2939 = vmatprep.subr.bf16.mxu0 0
    %2940 = vmatpush1.bf16.msra.mxu0 0
    %2941 = vmatprep.subr.bf16.mxu0 0
    %2942 = vmatpush1.bf16.msra.mxu0 0
    %2943 = vmatprep.subr.bf16.mxu0 0
    %2944 = vmatpush1.bf16.msra.mxu0 0
    %2945 = vmatprep.subr.bf16.mxu0 0
    %2946 = vmatpush1.bf16.msra.mxu0 0
    %2947 = vmatprep.subr.bf16.mxu0 0
    %2948 = vmatpush1.bf16.msra.mxu0 0
    %2949 = vmatprep.subr.bf16.mxu0 0
    %2950 = vmatpush1.bf16.msra.mxu0 0
    %2951 = vmatprep.subr.bf16.mxu0 0
    %2952 = vmatpush1.bf16.msra.mxu0 0
    %2953 = vmatprep.mubr.bf16.mxu0 0
    %2954 = vmatmul.mubr.bf16.gmra.mrb[0].mxu0 %v2919
    %v2955 = vpop.f32.mrb[0].mxu0
    %v2956 = vadd.f32 %v2891, %v2955
    %v2957 = vpop.f32.mrb[0].mxu0
    %v2958 = vpop.f32.mrb[0].mxu0
    %v2959 = vadd.f32 %v2891, %v2958
    %v2960 = vpop.f32.mrb[0].mxu0
    %2961 = vdwg.mxu0
    %v2962 = vadd.f32 %v2956, %v2803
    %v2963 = vadd.f32 %v2959, %v2804
    %v2964 = vsel %vm312, %v2962, 0.0
    %2965 = vadd.xlane.f32.xlu0 %v2964
    %v2966 = vpop.xlane.xlu0 %2965
    %v2967 = vsel %vm312, %v2963, 0.0
    %2968 = vadd.xlane.f32.xlu0 %v2967
    %v2969 = vpop.xlane.xlu0 %2968
    %v2970 = vmul.f32 %v2966, %v319
    %v2971 = vmul.f32 %v2969, %v319
    %v2972 = vsub.f32 %v2962, %v2970
    %v2973 = vsub.f32 %v2963, %v2971
    %v2974 = vmul.f32 %v2972, %v2972
    %v2975 = vmul.f32 %v2973, %v2973
    %v2976 = vsel %vm312, %v2974, 0.0
    %2977 = vadd.xlane.f32.xlu0 %v2976
    %v2978 = vpop.xlane.xlu0 %2977
    %v2979 = vsel %vm312, %v2975, 0.0
    %2980 = vadd.xlane.f32.xlu0 %v2979
    %v2981 = vpop.xlane.xlu0 %2980
    %v2982 = vmul.f32 %v2978, %v319
    %v2983 = vmul.f32 %v2981, %v319
    %v2984 = vadd.f32 %v2982, 1e-12
    %v2985 = vadd.f32 %v2983, 1e-12
    %v2986 = vrsqrt.pop %v2984
    %v2987 = vrsqrt.pop %v2985
    %v2988 = vmul.f32 %v2972, %v2986
    %v2989 = vmul.f32 %v2973, %v2987
    %v2991 = vlaneseq
    %v2992 = vshrl.u32 %v2991, 7
    %v2993 = vsub.s32 0, %v2992
    %v2994 = vrot.slane %v308, %v2993
    %v2996 = vmul.f32 %v2988, %v2994
    %v2997 = vmul.f32 %v2989, %v2994
    %v2999 = vlaneseq
    %v3000 = vshrl.u32 %v2999, 7
    %v3001 = vsub.s32 0, %v3000
    %v3002 = vrot.slane %v309, %v3001
    %v3004 = vadd.f32 %v2996, %v3002
    %v3005 = vadd.f32 %v2997, %v3002
    %3006 = vst.msk [vmem:[#allocation20] sm:$0xff] %vm312, %v3004
    %3007 = vst.msk [vmem:[#allocation20 + $0x8] sm:$0xff] %vm312, %v3005
    // Predicated region
    $region162: #{tpu_custom_call.1} parent=1 // pred_check
      _
    $region163: #{tpu_custom_call.1} parent=1 // pred_check_branch
      %3009 = sbr.rel (0) target = $region165
    $region164: #{tpu_custom_call.1} parent=1 // pred_region
      %s3011 = ssub.s32 256, 256
      %3012 = vsyncadd [#allocation5], %s3011
      %s3013 = sshll.u32 [#allocation20], 4
      %s3014 = int_to_ptr.vmem [resolvable:$true] %s3013
      %3019 = dma.vmem_to_hbm [thread:$0]  %s3014, 256, %s61, [#allocation5], 128, 128, 8
    $region165: #{tpu_custom_call.1} parent=1 // pred_fallthru
      _
    // Predicated region
    $region166: #{tpu_custom_call.1} parent=1 // pred_check
      _
    $region167: #{tpu_custom_call.1} parent=1 // pred_check_branch
      %3021 = sbr.rel (0) target = $region169
    $region168: #{tpu_custom_call.1} parent=1 // pred_region
      %3022 = dma.done [#allocation5], 256
    $region169: #{tpu_custom_call.1} parent=1 // pred_fallthru
      _
    %3023 = vsyncpa [#allocation4], 1
    %3024 = vsyncpa [#allocation7], 1
    %3025 = vsyncpa [#allocation10], 1
    %3026 = vsyncpa [#allocation13], 1
    %3027 = vsyncpa [#allocation16], 1
    %3028 = vsyncpa [#allocation19], 1
    %3029 = vsyncpa [#allocation5], 1

</llo_original>
